<compile_context>
chip_gen: v5e
topology: v5e:2x2
jax: 0.10.0
libtpu: 0.0.40
codegen_flags: <defaults>
</compile_context>

<pallas_src>
import functools

import jax
import jax.numpy as jnp
from jax.experimental import pallas as pl
from jax.experimental.pallas import tpu as pltpu  # noqa: F401  (parity import)


def _round_up(x, m):
    return ((x + m - 1) // m) * m


# ----------------------------------------------------------------------------
# Fused Pallas kernel: encoder + stacked LSTM decoder + vocab projection
# ----------------------------------------------------------------------------

def _caption_fused_kernel(patch_ref, cw_ref, cb_ref, ew_ref, eb_ref, emb_ref,
                          *rest, num_layers, seq_len, hp, batch, bp, hw):
    """Single grid point; every operand lives whole-array in VMEM.

    rest = (w_ih0, w_hh0, b0,            # layer 0 (input GEMM hoisted)
            W_1, b_1, ..., W_{L-1}, b_{L-1},   # layers >= 1 (fused [x,h] weights)
            lin_w, lin_b, out_ref)
      w_ih0 : (Ep, 4*Hp)        bf16   gate-block padded
      w_hh0 : (Hp, 4*Hp)        bf16
      b0    : (1, 4*Hp)         f32    b_ih + b_hh
      W_l   : (2*Hp, 4*Hp)      bf16   fused [W_ih.T ; W_hh.T]
      b_l   : (1, 4*Hp)         f32
      lin_w : (Hp, Vp)          bf16
      lin_b : (1, Vp)           f32
      out   : (seq_len*Bp, Vp)  f32    dense, sublane/lane aligned
    """
    w_ih0_ref, w_hh0_ref, b0_ref = rest[0], rest[1], rest[2]
    lstm_refs = rest[3:3 + 2 * (num_layers - 1)]
    lin_w_ref, lin_b_ref, out_ref = rest[3 + 2 * (num_layers - 1):]

    # ---------------- Encoder: conv(3x3, SAME) + ReLU + avg-pool + Linear ----
    conv = jnp.dot(patch_ref[...], cw_ref[...],
                   preferred_element_type=jnp.float32)            # (B*HW, Ccp)
    conv = jnp.maximum(conv + cb_ref[...], 0.0)
    cc_p = conv.shape[-1]
    # Global average pool as a sublane reduction (XLU) — no O(B^2*HW) matmul.
    pooled = jnp.sum(conv.reshape(batch, hw, cc_p), axis=1) * (1.0 / hw)
    if bp > batch:                                               # pad rows -> Bp
        pooled = jnp.pad(pooled, ((0, bp - batch), (0, 0)))
    feats = (jnp.dot(pooled.astype(jnp.bfloat16), ew_ref[...],
                     preferred_element_type=jnp.float32)
             + eb_ref[...])                                       # (Bp, Ep) f32

    # ---------------- Hoisted layer-0 input GEMM -----------------------------
    # x_t for t=0 is the image features; t>=1 are teacher-forced embeddings.
    x_all = jnp.concatenate([feats.astype(jnp.bfloat16), emb_ref[...]], axis=0)
    xg0 = jnp.dot(x_all, w_ih0_ref[...],
                  preferred_element_type=jnp.float32)             # (S*Bp, 4Hp)

    # Loop-invariant weight loads hoisted out of the time loop.
    w_hh0 = w_hh0_ref[...]
    b0 = b0_ref[...]
    ws = [lstm_refs[2 * l][...] for l in range(num_layers - 1)]
    bs = [lstm_refs[2 * l + 1][...] for l in range(num_layers - 1)]
    lin_w = lin_w_ref[...]
    lin_b = lin_b_ref[...]

    # (h, c) carried in vregs across the fully unrolled loop (zero-init, as in
    # nn.LSTM defaults).  INVARIANT: padded Hp lanes stay exactly 0 only because
    # c starts at 0 and the padded g-gate columns/bias are 0 (tanh(0)=0).  Do
    # NOT thread a nonzero (h0, c0) through here without revisiting this.
    h = [jnp.zeros((bp, hp), jnp.float32) for _ in range(num_layers)]
    c = [jnp.zeros((bp, hp), jnp.float32) for _ in range(num_layers)]

    def lstm_cell(gates, c_prev):
        # Hp is a multiple of 128 -> 128-aligned lane slices (no XLU traffic).
        i = jax.nn.sigmoid(gates[:, 0 * hp:1 * hp])
        f = jax.nn.sigmoid(gates[:, 1 * hp:2 * hp])
        g = jnp.tanh(gates[:, 2 * hp:3 * hp])
        o = jax.nn.sigmoid(gates[:, 3 * hp:4 * hp])
        c_new = f * c_prev + i * g
        h_new = o * jnp.tanh(c_new)
        return h_new, c_new

    hs_top = []
    # TODO(synk): at H>=512 / B>=32 switch to VMEM-scratch (h,c) + lax.fori_loop
    #             to bound live ranges (the fully static unroll would spill).
    for t in range(seq_len):                         # short fixed T -> unroll
        # Layer 0: only the h @ W_hh (K=Hp) dot remains on the serial path.
        gates0 = (xg0[t * bp:(t + 1) * bp]            # 8-sublane aligned slice
                  + jnp.dot(h[0].astype(jnp.bfloat16), w_hh0,
                            preferred_element_type=jnp.float32)
                  + b0)
        h[0], c[0] = lstm_cell(gates0, c[0])
        x = h[0]
        for l in range(1, num_layers):
            xh = jnp.concatenate([x, h[l]], axis=-1).astype(jnp.bfloat16)
            gates = (jnp.dot(xh, ws[l - 1], preferred_element_type=jnp.float32)
                     + bs[l - 1])
            h[l], c[l] = lstm_cell(gates, c[l])
            x = h[l]
        hs_top.append(x.astype(jnp.bfloat16))

    # ---------------- Hoisted vocab projection + single dense store ----------
    hs_all = jnp.concatenate(hs_top, axis=0)          # (S*Bp, Hp) bf16
    out_ref[...] = (jnp.dot(hs_all, lin_w, preferred_element_type=jnp.float32)
                    + lin_b).astype(out_ref.dtype)


# ----------------------------------------------------------------------------
# Parameter construction (matches the torch module's structure)
# ----------------------------------------------------------------------------

def init_params(key, *, in_channels, conv_channels, embedding_size,
                hidden_size, vocab_size, num_layers):
    keys = jax.random.split(key, 8 + 4 * num_layers)
    s = 0.02
    params = {
        # Encoder: Conv2d(in, conv_channels, 3, padding=1) + ReLU
        #          + global avg pool + Linear(conv_channels, embedding_size)
        "conv_w": s * jax.random.normal(keys[0], (conv_channels, in_channels, 3, 3), jnp.float32),
        "conv_b": s * jax.random.normal(keys[1], (conv_channels,), jnp.float32),
        "enc_w": s * jax.random.normal(keys[2], (embedding_size, conv_channels), jnp.float32),
        "enc_b": s * jax.random.normal(keys[3], (embedding_size,), jnp.float32),
        # Decoder: Embedding(vocab, E) + LSTM(E, H, num_layers) + Linear(H, V)
        "embedding": s * jax.random.normal(keys[4], (vocab_size, embedding_size), jnp.float32),
        "lin_w": s * jax.random.normal(keys[5], (vocab_size, hidden_size), jnp.float32),
        "lin_b": s * jax.random.normal(keys[6], (vocab_size,), jnp.float32),
        "lstm": [],
    }
    for layer in range(num_layers):
        din = embedding_size if layer == 0 else hidden_size
        k = keys[8 + 4 * layer: 8 + 4 * (layer + 1)]
        params["lstm"].append({
            "w_ih": s * jax.random.normal(k[0], (4 * hidden_size, din), jnp.float32),
            "w_hh": s * jax.random.normal(k[1], (4 * hidden_size, hidden_size), jnp.float32),
            "b_ih": s * jax.random.normal(k[2], (4 * hidden_size,), jnp.float32),
            "b_hh": s * jax.random.normal(k[3], (4 * hidden_size,), jnp.float32),
        })
    return params


# ----------------------------------------------------------------------------
# Wrapper: layout plumbing (im2col, padding, bf16 casts) + fused pallas_call
# ----------------------------------------------------------------------------

def _pad_gate_cols(w_t, rows_p, hp):
    """(rows, 4H) -> gate-block padded (rows_p, 4*hp)."""
    rows, four_h = w_t.shape
    H = four_h // 4
    w_t = w_t.reshape(rows, 4, H)                       # gate blocks i,f,g,o
    w_t = jnp.pad(w_t, ((0, rows_p - rows), (0, 0), (0, hp - H)))
    return w_t.reshape(rows_p, 4 * hp)


def _pad_gate_bias(b, hp):
    H = b.shape[0] // 4
    b = b.reshape(4, H)
    return jnp.pad(b, ((0, 0), (0, hp - H))).reshape(1, 4 * hp).astype(jnp.float32)


def _prep_fused_lstm_weights(w_ih, w_hh, b_ih, b_hh, din_p, hp):
    """Fuse + pad one layer's weights to (din_p + Hp, 4*Hp) / (1, 4*Hp)."""
    wih_p = _pad_gate_cols(w_ih.T, din_p, hp)           # (din_p, 4Hp)
    whh_p = _pad_gate_cols(w_hh.T, hp, hp)              # (Hp,   4Hp)
    w = jnp.concatenate([wih_p, whh_p], axis=0).astype(jnp.bfloat16)
    b = _pad_gate_bias(b_ih + b_hh, hp)
    return w, b


def caption_generator_forward(params, images, captions):
    """images: (B, Cin, H, W) NCHW; captions: (T, B) int32 -> (T+1, B, V) f32."""
    B, Cin, Himg, Wimg = images.shape
    T = captions.shape[0]
    E = params["enc_b"].shape[0]
    H = params["lstm"][0]["w_hh"].shape[1]
    V = params["lin_b"].shape[0]
    Cc = params["conv_b"].shape[0]
    num_layers = len(params["lstm"])

    Ep = _round_up(E, 128)
    Hp = _round_up(H, 128)
    Vp = _round_up(V, 128)
    Bp = _round_up(B, 8)
    Kc = 9 * Cin
    Kcp = _round_up(Kc, 128)
    Ccp = _round_up(Cc, 128)
    HW = Himg * Wimg
    seq_len = T + 1

    # im2col patches (B*HW, Kcp) bf16, lane-padded (SAME padding, 3x3 conv).
    # TODO(synk): for large images replace im2col with 9 shifted accumulates
    #             inside a gridded kernel to avoid the 9x patch expansion.
    x = jnp.transpose(images, (0, 2, 3, 1))                 # NHWC
    xp = jnp.pad(x, ((0, 0), (1, 1), (1, 1), (0, 0)))
    patches = jnp.stack(
        [xp[:, ki:ki + Himg, kj:kj + Wimg, :] for ki in range(3) for kj in range(3)],
        axis=3).reshape(B * HW, Kc)
    patches = jnp.pad(patches, ((0, 0), (0, Kcp - Kc))).astype(jnp.bfloat16)

    # Conv weight (Cout, Cin, 3, 3) -> (ki, kj, Cin, Cout) -> (Kcp, Ccp), lane-dense.
    conv_w = jnp.transpose(params["conv_w"], (2, 3, 1, 0)).reshape(Kc, Cc)
    conv_w = jnp.pad(conv_w, ((0, Kcp - Kc), (0, Ccp - Cc))).astype(jnp.bfloat16)
    conv_b = jnp.pad(params["conv_b"], (0, Ccp - Cc)).reshape(1, Ccp).astype(jnp.float32)

    # Encoder Linear, padded to (Ccp, Ep).
    enc_w = jnp.pad(params["enc_w"].T, ((0, Ccp - Cc), (0, Ep - E))).astype(jnp.bfloat16)
    enc_b = jnp.pad(params["enc_b"], (0, Ep - E)).reshape(1, Ep).astype(jnp.float32)

    # Embedded captions, bf16, batch-padded to Bp, flattened: (T*Bp, Ep).
    emb_tbl = jnp.pad(params["embedding"], ((0, 0), (0, Ep - E)))
    emb_seq = jnp.take(emb_tbl, captions, axis=0)            # (T, B, Ep)
    emb_seq = jnp.pad(emb_seq, ((0, 0), (0, Bp - B), (0, 0)))
    emb_seq = emb_seq.reshape(T * Bp, Ep).astype(jnp.bfloat16)

    # Layer-0 split weights (input GEMM hoisted in-kernel).
    lp0 = params["lstm"][0]
    w_ih0 = _pad_gate_cols(lp0["w_ih"].T, Ep, Hp).astype(jnp.bfloat16)   # (Ep, 4Hp)
    w_hh0 = _pad_gate_cols(lp0["w_hh"].T, Hp, Hp).astype(jnp.bfloat16)   # (Hp, 4Hp)
    b0 = _pad_gate_bias(lp0["b_ih"] + lp0["b_hh"], Hp)                   # (1, 4Hp)

    # Layers >= 1: merged [x,h] weights (K = 2*Hp = one K-pass on v6e/v7x MXU).
    lstm_args = []
    for layer in range(1, num_layers):
        lp = params["lstm"][layer]
        w, b = _prep_fused_lstm_weights(lp["w_ih"], lp["w_hh"],
                                        lp["b_ih"], lp["b_hh"], Hp, Hp)
        lstm_args += [w, b]

    # Vocab projection, lane-padded to Vp.
    lin_w = jnp.pad(params["lin_w"].T, ((0, Hp - H), (0, Vp - V))).astype(jnp.bfloat16)
    lin_b = jnp.pad(params["lin_b"], (0, Vp - V)).reshape(1, Vp).astype(jnp.float32)

    kernel = functools.partial(_caption_fused_kernel,
                               num_layers=num_layers, seq_len=seq_len,
                               hp=Hp, batch=B, bp=Bp, hw=HW)

    out = pl.pallas_call(
        kernel,
        out_shape=jax.ShapeDtypeStruct((seq_len * Bp, Vp), jnp.float32),
    )(patches, conv_w, conv_b, enc_w, enc_b, emb_seq,
      w_ih0, w_hh0, b0, *lstm_args, lin_w, lin_b)

    # Strip batch / vocab padding; (T+1, B, V).
    return out.reshape(seq_len, Bp, Vp)[:, :B, :V]


# ----------------------------------------------------------------------------
# Demo
# ----------------------------------------------------------------------------

if __name__ == "__main__":
    B, Cin, Himg, Wimg = 2, 3, 16, 16
    embedding_size, hidden_size = 32, 32
    vocab_size, num_layers = 40, 2
    T = 8                                    # caption length (tokens)
    conv_channels = 8

    key = jax.random.PRNGKey(0)
    kp, ki, kc = jax.random.split(key, 3)

    params = init_params(kp,
                         in_channels=Cin, conv_channels=conv_channels,
                         embedding_size=embedding_size, hidden_size=hidden_size,
                         vocab_size=vocab_size, num_layers=num_layers)

    images = jax.random.normal(ki, (B, Cin, Himg, Wimg), jnp.float32)     # NCHW
    captions = jax.random.randint(kc, (T, B), 0, vocab_size, jnp.int32)   # seq-major

    logits = jax.jit(caption_generator_forward)(params, images, captions)
    logits = jax.block_until_ready(logits)

    assert logits.shape == (T + 1, B, vocab_size)
    assert logits.dtype == jnp.float32
    assert bool(jnp.all(jnp.isfinite(logits)))
    print("KERNEL_OK")
</pallas_src>

<mosaic_0001>
module attributes {stable_mosaic.version = 11 : i64} {
  func.func @_caption_fused_kernel(%arg0: memref<512x128xbf16, #tpu.memory_space<vmem>>, %arg1: memref<128x128xbf16, #tpu.memory_space<vmem>>, %arg2: memref<1x128xf32, #tpu.memory_space<vmem>>, %arg3: memref<128x128xbf16, #tpu.memory_space<vmem>>, %arg4: memref<1x128xf32, #tpu.memory_space<vmem>>, %arg5: memref<64x128xbf16, #tpu.memory_space<vmem>>, %arg6: memref<128x512xbf16, #tpu.memory_space<vmem>>, %arg7: memref<128x512xbf16, #tpu.memory_space<vmem>>, %arg8: memref<1x512xf32, #tpu.memory_space<vmem>>, %arg9: memref<256x512xbf16, #tpu.memory_space<vmem>>, %arg10: memref<1x512xf32, #tpu.memory_space<vmem>>, %arg11: memref<128x128xbf16, #tpu.memory_space<vmem>>, %arg12: memref<1x128xf32, #tpu.memory_space<vmem>>, %arg13: memref<72x128xf32, #tpu.memory_space<vmem>>) attributes {dimension_semantics = [], scalar_prefetch = 0 : i64, scratch_operands = 0 : i64, tpu.core_type = #tpu.core_type<tc>} {
    %c0 = arith.constant 0 : index
    %c0_0 = arith.constant 0 : index
    %0 = vector.load %arg0[%c0, %c0_0] : memref<512x128xbf16, #tpu.memory_space<vmem>>, vector<512x128xbf16>
    %c0_1 = arith.constant 0 : index
    %c0_2 = arith.constant 0 : index
    %1 = vector.load %arg1[%c0_1, %c0_2] : memref<128x128xbf16, #tpu.memory_space<vmem>>, vector<128x128xbf16>
    %cst = arith.constant dense<0.000000e+00> : vector<512x128xf32>
    %2 = tpu.matmul %0, %1, %cst {dimension_numbers = #tpu.dot_dimension_numbers<[1], [0], [0], [1], [0, 0, 1, 1], [], []>} : vector<512x128xbf16>, vector<128x128xbf16>, vector<512x128xf32> -> vector<512x128xf32>
    %c0_3 = arith.constant 0 : index
    %c0_4 = arith.constant 0 : index
    %3 = vector.load %arg2[%c0_3, %c0_4] : memref<1x128xf32, #tpu.memory_space<vmem>>, vector<1x128xf32>
    %4 = vector.broadcast %3 : vector<1x128xf32> to vector<512x128xf32>
    %5 = arith.addf %2, %4 : vector<512x128xf32>
    %cst_5 = arith.constant 0.000000e+00 : f32
    %6 = vector.broadcast %cst_5 : f32 to vector<512x128xf32>
    %7 = arith.maximumf %5, %6 : vector<512x128xf32>
    %8 = vector.shape_cast %7 : vector<512x128xf32> to vector<2x256x128xf32>
    %cst_6 = arith.constant dense<0.000000e+00> : vector<2x128xf32>
    %9 = vector.multi_reduction <add>, %8, %cst_6 [1] : vector<2x256x128xf32> to vector<2x128xf32>
    %cst_7 = arith.constant 3.906250e-03 : f32
    %10 = vector.broadcast %cst_7 : f32 to vector<2x128xf32>
    %11 = arith.mulf %9, %10 : vector<2x128xf32>
    %c0_i32 = arith.constant 0 : i32
    %12 = arith.sitofp %c0_i32 : i32 to f32
    %13 = vector.broadcast %12 : f32 to vector<6x128xf32>
    %14 = tpu.concatenate %11, %13 in 0 : vector<2x128xf32>, vector<6x128xf32> -> vector<8x128xf32>
    %15 = arith.truncf %14 : vector<8x128xf32> to vector<8x128xbf16>
    %c0_8 = arith.constant 0 : index
    %c0_9 = arith.constant 0 : index
    %16 = vector.load %arg3[%c0_8, %c0_9] : memref<128x128xbf16, #tpu.memory_space<vmem>>, vector<128x128xbf16>
    %cst_10 = arith.constant dense<0.000000e+00> : vector<8x128xf32>
    %17 = tpu.matmul %15, %16, %cst_10 {dimension_numbers = #tpu.dot_dimension_numbers<[1], [0], [0], [1], [0, 0, 1, 1], [], []>} : vector<8x128xbf16>, vector<128x128xbf16>, vector<8x128xf32> -> vector<8x128xf32>
    %c0_11 = arith.constant 0 : index
    %c0_12 = arith.constant 0 : index
    %18 = vector.load %arg4[%c0_11, %c0_12] : memref<1x128xf32, #tpu.memory_space<vmem>>, vector<1x128xf32>
    %19 = vector.broadcast %18 : vector<1x128xf32> to vector<8x128xf32>
    %20 = arith.addf %17, %19 : vector<8x128xf32>
    %21 = arith.truncf %20 : vector<8x128xf32> to vector<8x128xbf16>
    %c0_13 = arith.constant 0 : index
    %c0_14 = arith.constant 0 : index
    %22 = vector.load %arg5[%c0_13, %c0_14] : memref<64x128xbf16, #tpu.memory_space<vmem>>, vector<64x128xbf16>
    %23 = tpu.concatenate %21, %22 in 0 : vector<8x128xbf16>, vector<64x128xbf16> -> vector<72x128xbf16>
    %c0_15 = arith.constant 0 : index
    %c0_16 = arith.constant 0 : index
    %24 = vector.load %arg6[%c0_15, %c0_16] : memref<128x512xbf16, #tpu.memory_space<vmem>>, vector<128x512xbf16>
    %cst_17 = arith.constant dense<0.000000e+00> : vector<72x512xf32>
    %25 = tpu.matmul %23, %24, %cst_17 {dimension_numbers = #tpu.dot_dimension_numbers<[1], [0], [0], [1], [0, 0, 1, 1], [], []>} : vector<72x128xbf16>, vector<128x512xbf16>, vector<72x512xf32> -> vector<72x512xf32>
    %c0_18 = arith.constant 0 : index
    %c0_19 = arith.constant 0 : index
    %26 = vector.load %arg7[%c0_18, %c0_19] : memref<128x512xbf16, #tpu.memory_space<vmem>>, vector<128x512xbf16>
    %c0_20 = arith.constant 0 : index
    %c0_21 = arith.constant 0 : index
    %27 = vector.load %arg8[%c0_20, %c0_21] : memref<1x512xf32, #tpu.memory_space<vmem>>, vector<1x512xf32>
    %c0_22 = arith.constant 0 : index
    %c0_23 = arith.constant 0 : index
    %28 = vector.load %arg9[%c0_22, %c0_23] : memref<256x512xbf16, #tpu.memory_space<vmem>>, vector<256x512xbf16>
    %c0_24 = arith.constant 0 : index
    %c0_25 = arith.constant 0 : index
    %29 = vector.load %arg10[%c0_24, %c0_25] : memref<1x512xf32, #tpu.memory_space<vmem>>, vector<1x512xf32>
    %c0_26 = arith.constant 0 : index
    %c0_27 = arith.constant 0 : index
    %30 = vector.load %arg11[%c0_26, %c0_27] : memref<128x128xbf16, #tpu.memory_space<vmem>>, vector<128x128xbf16>
    %c0_28 = arith.constant 0 : index
    %c0_29 = arith.constant 0 : index
    %31 = vector.load %arg12[%c0_28, %c0_29] : memref<1x128xf32, #tpu.memory_space<vmem>>, vector<1x128xf32>
    %cst_30 = arith.constant 0.000000e+00 : f32
    %32 = vector.broadcast %cst_30 : f32 to vector<8x128xf32>
    %cst_31 = arith.constant 0.000000e+00 : f32
    %33 = vector.broadcast %cst_31 : f32 to vector<8x128xf32>
    %cst_32 = arith.constant 0.000000e+00 : f32
    %34 = vector.broadcast %cst_32 : f32 to vector<8x128xf32>
    %cst_33 = arith.constant 0.000000e+00 : f32
    %35 = vector.broadcast %cst_33 : f32 to vector<8x128xf32>
    %36 = vector.extract_strided_slice %25 {offsets = [0, 0], sizes = [8, 512], strides = [1, 1]} : vector<72x512xf32> to vector<8x512xf32>
    %37 = arith.truncf %32 : vector<8x128xf32> to vector<8x128xbf16>
    %cst_34 = arith.constant dense<0.000000e+00> : vector<8x512xf32>
    %38 = tpu.matmul %37, %26, %cst_34 {dimension_numbers = #tpu.dot_dimension_numbers<[1], [0], [0], [1], [0, 0, 1, 1], [], []>} : vector<8x128xbf16>, vector<128x512xbf16>, vector<8x512xf32> -> vector<8x512xf32>
    %39 = arith.addf %36, %38 : vector<8x512xf32>
    %40 = vector.broadcast %27 : vector<1x512xf32> to vector<8x512xf32>
    %41 = arith.addf %39, %40 : vector<8x512xf32>
    %42 = vector.extract_strided_slice %41 {offsets = [0, 0], sizes = [8, 128], strides = [1, 1]} : vector<8x512xf32> to vector<8x128xf32>
    %43 = arith.negf %42 : vector<8x128xf32>
    %44 = math.exp %43 : vector<8x128xf32>
    %cst_35 = arith.constant 1.000000e+00 : f32
    %45 = vector.broadcast %cst_35 : f32 to vector<8x128xf32>
    %46 = arith.addf %45, %44 : vector<8x128xf32>
    %47 = arith.divf %45, %46 : vector<8x128xf32>
    %48 = vector.extract_strided_slice %41 {offsets = [0, 128], sizes = [8, 128], strides = [1, 1]} : vector<8x512xf32> to vector<8x128xf32>
    %49 = arith.negf %48 : vector<8x128xf32>
    %50 = math.exp %49 : vector<8x128xf32>
    %cst_36 = arith.constant 1.000000e+00 : f32
    %51 = vector.broadcast %cst_36 : f32 to vector<8x128xf32>
    %52 = arith.addf %51, %50 : vector<8x128xf32>
    %53 = arith.divf %51, %52 : vector<8x128xf32>
    %54 = vector.extract_strided_slice %41 {offsets = [0, 256], sizes = [8, 128], strides = [1, 1]} : vector<8x512xf32> to vector<8x128xf32>
    %55 = math.tanh %54 : vector<8x128xf32>
    %56 = vector.extract_strided_slice %41 {offsets = [0, 384], sizes = [8, 128], strides = [1, 1]} : vector<8x512xf32> to vector<8x128xf32>
    %57 = arith.negf %56 : vector<8x128xf32>
    %58 = math.exp %57 : vector<8x128xf32>
    %cst_37 = arith.constant 1.000000e+00 : f32
    %59 = vector.broadcast %cst_37 : f32 to vector<8x128xf32>
    %60 = arith.addf %59, %58 : vector<8x128xf32>
    %61 = arith.divf %59, %60 : vector<8x128xf32>
    %62 = arith.mulf %53, %34 : vector<8x128xf32>
    %63 = arith.mulf %47, %55 : vector<8x128xf32>
    %64 = arith.addf %62, %63 : vector<8x128xf32>
    %65 = math.tanh %64 : vector<8x128xf32>
    %66 = arith.mulf %61, %65 : vector<8x128xf32>
    %67 = tpu.concatenate %66, %33 in 1 : vector<8x128xf32>, vector<8x128xf32> -> vector<8x256xf32>
    %68 = arith.truncf %67 : vector<8x256xf32> to vector<8x256xbf16>
    %cst_38 = arith.constant dense<0.000000e+00> : vector<8x512xf32>
    %69 = tpu.matmul %68, %28, %cst_38 {dimension_numbers = #tpu.dot_dimension_numbers<[1], [0], [0], [1], [0, 0, 1, 1], [], []>} : vector<8x256xbf16>, vector<256x512xbf16>, vector<8x512xf32> -> vector<8x512xf32>
    %70 = vector.broadcast %29 : vector<1x512xf32> to vector<8x512xf32>
    %71 = arith.addf %69, %70 : vector<8x512xf32>
    %72 = vector.extract_strided_slice %71 {offsets = [0, 0], sizes = [8, 128], strides = [1, 1]} : vector<8x512xf32> to vector<8x128xf32>
    %73 = arith.negf %72 : vector<8x128xf32>
    %74 = math.exp %73 : vector<8x128xf32>
    %cst_39 = arith.constant 1.000000e+00 : f32
    %75 = vector.broadcast %cst_39 : f32 to vector<8x128xf32>
    %76 = arith.addf %75, %74 : vector<8x128xf32>
    %77 = arith.divf %75, %76 : vector<8x128xf32>
    %78 = vector.extract_strided_slice %71 {offsets = [0, 128], sizes = [8, 128], strides = [1, 1]} : vector<8x512xf32> to vector<8x128xf32>
    %79 = arith.negf %78 : vector<8x128xf32>
    %80 = math.exp %79 : vector<8x128xf32>
    %cst_40 = arith.constant 1.000000e+00 : f32
    %81 = vector.broadcast %cst_40 : f32 to vector<8x128xf32>
    %82 = arith.addf %81, %80 : vector<8x128xf32>
    %83 = arith.divf %81, %82 : vector<8x128xf32>
    %84 = vector.extract_strided_slice %71 {offsets = [0, 256], sizes = [8, 128], strides = [1, 1]} : vector<8x512xf32> to vector<8x128xf32>
    %85 = math.tanh %84 : vector<8x128xf32>
    %86 = vector.extract_strided_slice %71 {offsets = [0, 384], sizes = [8, 128], strides = [1, 1]} : vector<8x512xf32> to vector<8x128xf32>
    %87 = arith.negf %86 : vector<8x128xf32>
    %88 = math.exp %87 : vector<8x128xf32>
    %cst_41 = arith.constant 1.000000e+00 : f32
    %89 = vector.broadcast %cst_41 : f32 to vector<8x128xf32>
    %90 = arith.addf %89, %88 : vector<8x128xf32>
    %91 = arith.divf %89, %90 : vector<8x128xf32>
    %92 = arith.mulf %83, %35 : vector<8x128xf32>
    %93 = arith.mulf %77, %85 : vector<8x128xf32>
    %94 = arith.addf %92, %93 : vector<8x128xf32>
    %95 = math.tanh %94 : vector<8x128xf32>
    %96 = arith.mulf %91, %95 : vector<8x128xf32>
    %97 = arith.truncf %96 : vector<8x128xf32> to vector<8x128xbf16>
    %98 = vector.extract_strided_slice %25 {offsets = [8, 0], sizes = [8, 512], strides = [1, 1]} : vector<72x512xf32> to vector<8x512xf32>
    %99 = arith.truncf %66 : vector<8x128xf32> to vector<8x128xbf16>
    %cst_42 = arith.constant dense<0.000000e+00> : vector<8x512xf32>
    %100 = tpu.matmul %99, %26, %cst_42 {dimension_numbers = #tpu.dot_dimension_numbers<[1], [0], [0], [1], [0, 0, 1, 1], [], []>} : vector<8x128xbf16>, vector<128x512xbf16>, vector<8x512xf32> -> vector<8x512xf32>
    %101 = arith.addf %98, %100 : vector<8x512xf32>
    %102 = vector.broadcast %27 : vector<1x512xf32> to vector<8x512xf32>
    %103 = arith.addf %101, %102 : vector<8x512xf32>
    %104 = vector.extract_strided_slice %103 {offsets = [0, 0], sizes = [8, 128], strides = [1, 1]} : vector<8x512xf32> to vector<8x128xf32>
    %105 = arith.negf %104 : vector<8x128xf32>
    %106 = math.exp %105 : vector<8x128xf32>
    %cst_43 = arith.constant 1.000000e+00 : f32
    %107 = vector.broadcast %cst_43 : f32 to vector<8x128xf32>
    %108 = arith.addf %107, %106 : vector<8x128xf32>
    %109 = arith.divf %107, %108 : vector<8x128xf32>
    %110 = vector.extract_strided_slice %103 {offsets = [0, 128], sizes = [8, 128], strides = [1, 1]} : vector<8x512xf32> to vector<8x128xf32>
    %111 = arith.negf %110 : vector<8x128xf32>
    %112 = math.exp %111 : vector<8x128xf32>
    %cst_44 = arith.constant 1.000000e+00 : f32
    %113 = vector.broadcast %cst_44 : f32 to vector<8x128xf32>
    %114 = arith.addf %113, %112 : vector<8x128xf32>
    %115 = arith.divf %113, %114 : vector<8x128xf32>
    %116 = vector.extract_strided_slice %103 {offsets = [0, 256], sizes = [8, 128], strides = [1, 1]} : vector<8x512xf32> to vector<8x128xf32>
    %117 = math.tanh %116 : vector<8x128xf32>
    %118 = vector.extract_strided_slice %103 {offsets = [0, 384], sizes = [8, 128], strides = [1, 1]} : vector<8x512xf32> to vector<8x128xf32>
    %119 = arith.negf %118 : vector<8x128xf32>
    %120 = math.exp %119 : vector<8x128xf32>
    %cst_45 = arith.constant 1.000000e+00 : f32
    %121 = vector.broadcast %cst_45 : f32 to vector<8x128xf32>
    %122 = arith.addf %121, %120 : vector<8x128xf32>
    %123 = arith.divf %121, %122 : vector<8x128xf32>
    %124 = arith.mulf %115, %64 : vector<8x128xf32>
    %125 = arith.mulf %109, %117 : vector<8x128xf32>
    %126 = arith.addf %124, %125 : vector<8x128xf32>
    %127 = math.tanh %126 : vector<8x128xf32>
    %128 = arith.mulf %123, %127 : vector<8x128xf32>
    %129 = tpu.concatenate %128, %96 in 1 : vector<8x128xf32>, vector<8x128xf32> -> vector<8x256xf32>
    %130 = arith.truncf %129 : vector<8x256xf32> to vector<8x256xbf16>
    %cst_46 = arith.constant dense<0.000000e+00> : vector<8x512xf32>
    %131 = tpu.matmul %130, %28, %cst_46 {dimension_numbers = #tpu.dot_dimension_numbers<[1], [0], [0], [1], [0, 0, 1, 1], [], []>} : vector<8x256xbf16>, vector<256x512xbf16>, vector<8x512xf32> -> vector<8x512xf32>
    %132 = vector.broadcast %29 : vector<1x512xf32> to vector<8x512xf32>
    %133 = arith.addf %131, %132 : vector<8x512xf32>
    %134 = vector.extract_strided_slice %133 {offsets = [0, 0], sizes = [8, 128], strides = [1, 1]} : vector<8x512xf32> to vector<8x128xf32>
    %135 = arith.negf %134 : vector<8x128xf32>
    %136 = math.exp %135 : vector<8x128xf32>
    %cst_47 = arith.constant 1.000000e+00 : f32
    %137 = vector.broadcast %cst_47 : f32 to vector<8x128xf32>
    %138 = arith.addf %137, %136 : vector<8x128xf32>
    %139 = arith.divf %137, %138 : vector<8x128xf32>
    %140 = vector.extract_strided_slice %133 {offsets = [0, 128], sizes = [8, 128], strides = [1, 1]} : vector<8x512xf32> to vector<8x128xf32>
    %141 = arith.negf %140 : vector<8x128xf32>
    %142 = math.exp %141 : vector<8x128xf32>
    %cst_48 = arith.constant 1.000000e+00 : f32
    %143 = vector.broadcast %cst_48 : f32 to vector<8x128xf32>
    %144 = arith.addf %143, %142 : vector<8x128xf32>
    %145 = arith.divf %143, %144 : vector<8x128xf32>
    %146 = vector.extract_strided_slice %133 {offsets = [0, 256], sizes = [8, 128], strides = [1, 1]} : vector<8x512xf32> to vector<8x128xf32>
    %147 = math.tanh %146 : vector<8x128xf32>
    %148 = vector.extract_strided_slice %133 {offsets = [0, 384], sizes = [8, 128], strides = [1, 1]} : vector<8x512xf32> to vector<8x128xf32>
    %149 = arith.negf %148 : vector<8x128xf32>
    %150 = math.exp %149 : vector<8x128xf32>
    %cst_49 = arith.constant 1.000000e+00 : f32
    %151 = vector.broadcast %cst_49 : f32 to vector<8x128xf32>
    %152 = arith.addf %151, %150 : vector<8x128xf32>
    %153 = arith.divf %151, %152 : vector<8x128xf32>
    %154 = arith.mulf %145, %94 : vector<8x128xf32>
    %155 = arith.mulf %139, %147 : vector<8x128xf32>
    %156 = arith.addf %154, %155 : vector<8x128xf32>
    %157 = math.tanh %156 : vector<8x128xf32>
    %158 = arith.mulf %153, %157 : vector<8x128xf32>
    %159 = arith.truncf %158 : vector<8x128xf32> to vector<8x128xbf16>
    %160 = vector.extract_strided_slice %25 {offsets = [16, 0], sizes = [8, 512], strides = [1, 1]} : vector<72x512xf32> to vector<8x512xf32>
    %161 = arith.truncf %128 : vector<8x128xf32> to vector<8x128xbf16>
    %cst_50 = arith.constant dense<0.000000e+00> : vector<8x512xf32>
    %162 = tpu.matmul %161, %26, %cst_50 {dimension_numbers = #tpu.dot_dimension_numbers<[1], [0], [0], [1], [0, 0, 1, 1], [], []>} : vector<8x128xbf16>, vector<128x512xbf16>, vector<8x512xf32> -> vector<8x512xf32>
    %163 = arith.addf %160, %162 : vector<8x512xf32>
    %164 = vector.broadcast %27 : vector<1x512xf32> to vector<8x512xf32>
    %165 = arith.addf %163, %164 : vector<8x512xf32>
    %166 = vector.extract_strided_slice %165 {offsets = [0, 0], sizes = [8, 128], strides = [1, 1]} : vector<8x512xf32> to vector<8x128xf32>
    %167 = arith.negf %166 : vector<8x128xf32>
    %168 = math.exp %167 : vector<8x128xf32>
    %cst_51 = arith.constant 1.000000e+00 : f32
    %169 = vector.broadcast %cst_51 : f32 to vector<8x128xf32>
    %170 = arith.addf %169, %168 : vector<8x128xf32>
    %171 = arith.divf %169, %170 : vector<8x128xf32>
    %172 = vector.extract_strided_slice %165 {offsets = [0, 128], sizes = [8, 128], strides = [1, 1]} : vector<8x512xf32> to vector<8x128xf32>
    %173 = arith.negf %172 : vector<8x128xf32>
    %174 = math.exp %173 : vector<8x128xf32>
    %cst_52 = arith.constant 1.000000e+00 : f32
    %175 = vector.broadcast %cst_52 : f32 to vector<8x128xf32>
    %176 = arith.addf %175, %174 : vector<8x128xf32>
    %177 = arith.divf %175, %176 : vector<8x128xf32>
    %178 = vector.extract_strided_slice %165 {offsets = [0, 256], sizes = [8, 128], strides = [1, 1]} : vector<8x512xf32> to vector<8x128xf32>
    %179 = math.tanh %178 : vector<8x128xf32>
    %180 = vector.extract_strided_slice %165 {offsets = [0, 384], sizes = [8, 128], strides = [1, 1]} : vector<8x512xf32> to vector<8x128xf32>
    %181 = arith.negf %180 : vector<8x128xf32>
    %182 = math.exp %181 : vector<8x128xf32>
    %cst_53 = arith.constant 1.000000e+00 : f32
    %183 = vector.broadcast %cst_53 : f32 to vector<8x128xf32>
    %184 = arith.addf %183, %182 : vector<8x128xf32>
    %185 = arith.divf %183, %184 : vector<8x128xf32>
    %186 = arith.mulf %177, %126 : vector<8x128xf32>
    %187 = arith.mulf %171, %179 : vector<8x128xf32>
    %188 = arith.addf %186, %187 : vector<8x128xf32>
    %189 = math.tanh %188 : vector<8x128xf32>
    %190 = arith.mulf %185, %189 : vector<8x128xf32>
    %191 = tpu.concatenate %190, %158 in 1 : vector<8x128xf32>, vector<8x128xf32> -> vector<8x256xf32>
    %192 = arith.truncf %191 : vector<8x256xf32> to vector<8x256xbf16>
    %cst_54 = arith.constant dense<0.000000e+00> : vector<8x512xf32>
    %193 = tpu.matmul %192, %28, %cst_54 {dimension_numbers = #tpu.dot_dimension_numbers<[1], [0], [0], [1], [0, 0, 1, 1], [], []>} : vector<8x256xbf16>, vector<256x512xbf16>, vector<8x512xf32> -> vector<8x512xf32>
    %194 = vector.broadcast %29 : vector<1x512xf32> to vector<8x512xf32>
    %195 = arith.addf %193, %194 : vector<8x512xf32>
    %196 = vector.extract_strided_slice %195 {offsets = [0, 0], sizes = [8, 128], strides = [1, 1]} : vector<8x512xf32> to vector<8x128xf32>
    %197 = arith.negf %196 : vector<8x128xf32>
    %198 = math.exp %197 : vector<8x128xf32>
    %cst_55 = arith.constant 1.000000e+00 : f32
    %199 = vector.broadcast %cst_55 : f32 to vector<8x128xf32>
    %200 = arith.addf %199, %198 : vector<8x128xf32>
    %201 = arith.divf %199, %200 : vector<8x128xf32>
    %202 = vector.extract_strided_slice %195 {offsets = [0, 128], sizes = [8, 128], strides = [1, 1]} : vector<8x512xf32> to vector<8x128xf32>
    %203 = arith.negf %202 : vector<8x128xf32>
    %204 = math.exp %203 : vector<8x128xf32>
    %cst_56 = arith.constant 1.000000e+00 : f32
    %205 = vector.broadcast %cst_56 : f32 to vector<8x128xf32>
    %206 = arith.addf %205, %204 : vector<8x128xf32>
    %207 = arith.divf %205, %206 : vector<8x128xf32>
    %208 = vector.extract_strided_slice %195 {offsets = [0, 256], sizes = [8, 128], strides = [1, 1]} : vector<8x512xf32> to vector<8x128xf32>
    %209 = math.tanh %208 : vector<8x128xf32>
    %210 = vector.extract_strided_slice %195 {offsets = [0, 384], sizes = [8, 128], strides = [1, 1]} : vector<8x512xf32> to vector<8x128xf32>
    %211 = arith.negf %210 : vector<8x128xf32>
    %212 = math.exp %211 : vector<8x128xf32>
    %cst_57 = arith.constant 1.000000e+00 : f32
    %213 = vector.broadcast %cst_57 : f32 to vector<8x128xf32>
    %214 = arith.addf %213, %212 : vector<8x128xf32>
    %215 = arith.divf %213, %214 : vector<8x128xf32>
    %216 = arith.mulf %207, %156 : vector<8x128xf32>
    %217 = arith.mulf %201, %209 : vector<8x128xf32>
    %218 = arith.addf %216, %217 : vector<8x128xf32>
    %219 = math.tanh %218 : vector<8x128xf32>
    %220 = arith.mulf %215, %219 : vector<8x128xf32>
    %221 = arith.truncf %220 : vector<8x128xf32> to vector<8x128xbf16>
    %222 = vector.extract_strided_slice %25 {offsets = [24, 0], sizes = [8, 512], strides = [1, 1]} : vector<72x512xf32> to vector<8x512xf32>
    %223 = arith.truncf %190 : vector<8x128xf32> to vector<8x128xbf16>
    %cst_58 = arith.constant dense<0.000000e+00> : vector<8x512xf32>
    %224 = tpu.matmul %223, %26, %cst_58 {dimension_numbers = #tpu.dot_dimension_numbers<[1], [0], [0], [1], [0, 0, 1, 1], [], []>} : vector<8x128xbf16>, vector<128x512xbf16>, vector<8x512xf32> -> vector<8x512xf32>
    %225 = arith.addf %222, %224 : vector<8x512xf32>
    %226 = vector.broadcast %27 : vector<1x512xf32> to vector<8x512xf32>
    %227 = arith.addf %225, %226 : vector<8x512xf32>
    %228 = vector.extract_strided_slice %227 {offsets = [0, 0], sizes = [8, 128], strides = [1, 1]} : vector<8x512xf32> to vector<8x128xf32>
    %229 = arith.negf %228 : vector<8x128xf32>
    %230 = math.exp %229 : vector<8x128xf32>
    %cst_59 = arith.constant 1.000000e+00 : f32
    %231 = vector.broadcast %cst_59 : f32 to vector<8x128xf32>
    %232 = arith.addf %231, %230 : vector<8x128xf32>
    %233 = arith.divf %231, %232 : vector<8x128xf32>
    %234 = vector.extract_strided_slice %227 {offsets = [0, 128], sizes = [8, 128], strides = [1, 1]} : vector<8x512xf32> to vector<8x128xf32>
    %235 = arith.negf %234 : vector<8x128xf32>
    %236 = math.exp %235 : vector<8x128xf32>
    %cst_60 = arith.constant 1.000000e+00 : f32
    %237 = vector.broadcast %cst_60 : f32 to vector<8x128xf32>
    %238 = arith.addf %237, %236 : vector<8x128xf32>
    %239 = arith.divf %237, %238 : vector<8x128xf32>
    %240 = vector.extract_strided_slice %227 {offsets = [0, 256], sizes = [8, 128], strides = [1, 1]} : vector<8x512xf32> to vector<8x128xf32>
    %241 = math.tanh %240 : vector<8x128xf32>
    %242 = vector.extract_strided_slice %227 {offsets = [0, 384], sizes = [8, 128], strides = [1, 1]} : vector<8x512xf32> to vector<8x128xf32>
    %243 = arith.negf %242 : vector<8x128xf32>
    %244 = math.exp %243 : vector<8x128xf32>
    %cst_61 = arith.constant 1.000000e+00 : f32
    %245 = vector.broadcast %cst_61 : f32 to vector<8x128xf32>
    %246 = arith.addf %245, %244 : vector<8x128xf32>
    %247 = arith.divf %245, %246 : vector<8x128xf32>
    %248 = arith.mulf %239, %188 : vector<8x128xf32>
    %249 = arith.mulf %233, %241 : vector<8x128xf32>
    %250 = arith.addf %248, %249 : vector<8x128xf32>
    %251 = math.tanh %250 : vector<8x128xf32>
    %252 = arith.mulf %247, %251 : vector<8x128xf32>
    %253 = tpu.concatenate %252, %220 in 1 : vector<8x128xf32>, vector<8x128xf32> -> vector<8x256xf32>
    %254 = arith.truncf %253 : vector<8x256xf32> to vector<8x256xbf16>
    %cst_62 = arith.constant dense<0.000000e+00> : vector<8x512xf32>
    %255 = tpu.matmul %254, %28, %cst_62 {dimension_numbers = #tpu.dot_dimension_numbers<[1], [0], [0], [1], [0, 0, 1, 1], [], []>} : vector<8x256xbf16>, vector<256x512xbf16>, vector<8x512xf32> -> vector<8x512xf32>
    %256 = vector.broadcast %29 : vector<1x512xf32> to vector<8x512xf32>
    %257 = arith.addf %255, %256 : vector<8x512xf32>
    %258 = vector.extract_strided_slice %257 {offsets = [0, 0], sizes = [8, 128], strides = [1, 1]} : vector<8x512xf32> to vector<8x128xf32>
    %259 = arith.negf %258 : vector<8x128xf32>
    %260 = math.exp %259 : vector<8x128xf32>
    %cst_63 = arith.constant 1.000000e+00 : f32
    %261 = vector.broadcast %cst_63 : f32 to vector<8x128xf32>
    %262 = arith.addf %261, %260 : vector<8x128xf32>
    %263 = arith.divf %261, %262 : vector<8x128xf32>
    %264 = vector.extract_strided_slice %257 {offsets = [0, 128], sizes = [8, 128], strides = [1, 1]} : vector<8x512xf32> to vector<8x128xf32>
    %265 = arith.negf %264 : vector<8x128xf32>
    %266 = math.exp %265 : vector<8x128xf32>
    %cst_64 = arith.constant 1.000000e+00 : f32
    %267 = vector.broadcast %cst_64 : f32 to vector<8x128xf32>
    %268 = arith.addf %267, %266 : vector<8x128xf32>
    %269 = arith.divf %267, %268 : vector<8x128xf32>
    %270 = vector.extract_strided_slice %257 {offsets = [0, 256], sizes = [8, 128], strides = [1, 1]} : vector<8x512xf32> to vector<8x128xf32>
    %271 = math.tanh %270 : vector<8x128xf32>
    %272 = vector.extract_strided_slice %257 {offsets = [0, 384], sizes = [8, 128], strides = [1, 1]} : vector<8x512xf32> to vector<8x128xf32>
    %273 = arith.negf %272 : vector<8x128xf32>
    %274 = math.exp %273 : vector<8x128xf32>
    %cst_65 = arith.constant 1.000000e+00 : f32
    %275 = vector.broadcast %cst_65 : f32 to vector<8x128xf32>
    %276 = arith.addf %275, %274 : vector<8x128xf32>
    %277 = arith.divf %275, %276 : vector<8x128xf32>
    %278 = arith.mulf %269, %218 : vector<8x128xf32>
    %279 = arith.mulf %263, %271 : vector<8x128xf32>
    %280 = arith.addf %278, %279 : vector<8x128xf32>
    %281 = math.tanh %280 : vector<8x128xf32>
    %282 = arith.mulf %277, %281 : vector<8x128xf32>
    %283 = arith.truncf %282 : vector<8x128xf32> to vector<8x128xbf16>
    %284 = vector.extract_strided_slice %25 {offsets = [32, 0], sizes = [8, 512], strides = [1, 1]} : vector<72x512xf32> to vector<8x512xf32>
    %285 = arith.truncf %252 : vector<8x128xf32> to vector<8x128xbf16>
    %cst_66 = arith.constant dense<0.000000e+00> : vector<8x512xf32>
    %286 = tpu.matmul %285, %26, %cst_66 {dimension_numbers = #tpu.dot_dimension_numbers<[1], [0], [0], [1], [0, 0, 1, 1], [], []>} : vector<8x128xbf16>, vector<128x512xbf16>, vector<8x512xf32> -> vector<8x512xf32>
    %287 = arith.addf %284, %286 : vector<8x512xf32>
    %288 = vector.broadcast %27 : vector<1x512xf32> to vector<8x512xf32>
    %289 = arith.addf %287, %288 : vector<8x512xf32>
    %290 = vector.extract_strided_slice %289 {offsets = [0, 0], sizes = [8, 128], strides = [1, 1]} : vector<8x512xf32> to vector<8x128xf32>
    %291 = arith.negf %290 : vector<8x128xf32>
    %292 = math.exp %291 : vector<8x128xf32>
    %cst_67 = arith.constant 1.000000e+00 : f32
    %293 = vector.broadcast %cst_67 : f32 to vector<8x128xf32>
    %294 = arith.addf %293, %292 : vector<8x128xf32>
    %295 = arith.divf %293, %294 : vector<8x128xf32>
    %296 = vector.extract_strided_slice %289 {offsets = [0, 128], sizes = [8, 128], strides = [1, 1]} : vector<8x512xf32> to vector<8x128xf32>
    %297 = arith.negf %296 : vector<8x128xf32>
    %298 = math.exp %297 : vector<8x128xf32>
    %cst_68 = arith.constant 1.000000e+00 : f32
    %299 = vector.broadcast %cst_68 : f32 to vector<8x128xf32>
    %300 = arith.addf %299, %298 : vector<8x128xf32>
    %301 = arith.divf %299, %300 : vector<8x128xf32>
    %302 = vector.extract_strided_slice %289 {offsets = [0, 256], sizes = [8, 128], strides = [1, 1]} : vector<8x512xf32> to vector<8x128xf32>
    %303 = math.tanh %302 : vector<8x128xf32>
    %304 = vector.extract_strided_slice %289 {offsets = [0, 384], sizes = [8, 128], strides = [1, 1]} : vector<8x512xf32> to vector<8x128xf32>
    %305 = arith.negf %304 : vector<8x128xf32>
    %306 = math.exp %305 : vector<8x128xf32>
    %cst_69 = arith.constant 1.000000e+00 : f32
    %307 = vector.broadcast %cst_69 : f32 to vector<8x128xf32>
    %308 = arith.addf %307, %306 : vector<8x128xf32>
    %309 = arith.divf %307, %308 : vector<8x128xf32>
    %310 = arith.mulf %301, %250 : vector<8x128xf32>
    %311 = arith.mulf %295, %303 : vector<8x128xf32>
    %312 = arith.addf %310, %311 : vector<8x128xf32>
    %313 = math.tanh %312 : vector<8x128xf32>
    %314 = arith.mulf %309, %313 : vector<8x128xf32>
    %315 = tpu.concatenate %314, %282 in 1 : vector<8x128xf32>, vector<8x128xf32> -> vector<8x256xf32>
    %316 = arith.truncf %315 : vector<8x256xf32> to vector<8x256xbf16>
    %cst_70 = arith.constant dense<0.000000e+00> : vector<8x512xf32>
    %317 = tpu.matmul %316, %28, %cst_70 {dimension_numbers = #tpu.dot_dimension_numbers<[1], [0], [0], [1], [0, 0, 1, 1], [], []>} : vector<8x256xbf16>, vector<256x512xbf16>, vector<8x512xf32> -> vector<8x512xf32>
    %318 = vector.broadcast %29 : vector<1x512xf32> to vector<8x512xf32>
    %319 = arith.addf %317, %318 : vector<8x512xf32>
    %320 = vector.extract_strided_slice %319 {offsets = [0, 0], sizes = [8, 128], strides = [1, 1]} : vector<8x512xf32> to vector<8x128xf32>
    %321 = arith.negf %320 : vector<8x128xf32>
    %322 = math.exp %321 : vector<8x128xf32>
    %cst_71 = arith.constant 1.000000e+00 : f32
    %323 = vector.broadcast %cst_71 : f32 to vector<8x128xf32>
    %324 = arith.addf %323, %322 : vector<8x128xf32>
    %325 = arith.divf %323, %324 : vector<8x128xf32>
    %326 = vector.extract_strided_slice %319 {offsets = [0, 128], sizes = [8, 128], strides = [1, 1]} : vector<8x512xf32> to vector<8x128xf32>
    %327 = arith.negf %326 : vector<8x128xf32>
    %328 = math.exp %327 : vector<8x128xf32>
    %cst_72 = arith.constant 1.000000e+00 : f32
    %329 = vector.broadcast %cst_72 : f32 to vector<8x128xf32>
    %330 = arith.addf %329, %328 : vector<8x128xf32>
    %331 = arith.divf %329, %330 : vector<8x128xf32>
    %332 = vector.extract_strided_slice %319 {offsets = [0, 256], sizes = [8, 128], strides = [1, 1]} : vector<8x512xf32> to vector<8x128xf32>
    %333 = math.tanh %332 : vector<8x128xf32>
    %334 = vector.extract_strided_slice %319 {offsets = [0, 384], sizes = [8, 128], strides = [1, 1]} : vector<8x512xf32> to vector<8x128xf32>
    %335 = arith.negf %334 : vector<8x128xf32>
    %336 = math.exp %335 : vector<8x128xf32>
    %cst_73 = arith.constant 1.000000e+00 : f32
    %337 = vector.broadcast %cst_73 : f32 to vector<8x128xf32>
    %338 = arith.addf %337, %336 : vector<8x128xf32>
    %339 = arith.divf %337, %338 : vector<8x128xf32>
    %340 = arith.mulf %331, %280 : vector<8x128xf32>
    %341 = arith.mulf %325, %333 : vector<8x128xf32>
    %342 = arith.addf %340, %341 : vector<8x128xf32>
    %343 = math.tanh %342 : vector<8x128xf32>
    %344 = arith.mulf %339, %343 : vector<8x128xf32>
    %345 = arith.truncf %344 : vector<8x128xf32> to vector<8x128xbf16>
    %346 = vector.extract_strided_slice %25 {offsets = [40, 0], sizes = [8, 512], strides = [1, 1]} : vector<72x512xf32> to vector<8x512xf32>
    %347 = arith.truncf %314 : vector<8x128xf32> to vector<8x128xbf16>
    %cst_74 = arith.constant dense<0.000000e+00> : vector<8x512xf32>
    %348 = tpu.matmul %347, %26, %cst_74 {dimension_numbers = #tpu.dot_dimension_numbers<[1], [0], [0], [1], [0, 0, 1, 1], [], []>} : vector<8x128xbf16>, vector<128x512xbf16>, vector<8x512xf32> -> vector<8x512xf32>
    %349 = arith.addf %346, %348 : vector<8x512xf32>
    %350 = vector.broadcast %27 : vector<1x512xf32> to vector<8x512xf32>
    %351 = arith.addf %349, %350 : vector<8x512xf32>
    %352 = vector.extract_strided_slice %351 {offsets = [0, 0], sizes = [8, 128], strides = [1, 1]} : vector<8x512xf32> to vector<8x128xf32>
    %353 = arith.negf %352 : vector<8x128xf32>
    %354 = math.exp %353 : vector<8x128xf32>
    %cst_75 = arith.constant 1.000000e+00 : f32
    %355 = vector.broadcast %cst_75 : f32 to vector<8x128xf32>
    %356 = arith.addf %355, %354 : vector<8x128xf32>
    %357 = arith.divf %355, %356 : vector<8x128xf32>
    %358 = vector.extract_strided_slice %351 {offsets = [0, 128], sizes = [8, 128], strides = [1, 1]} : vector<8x512xf32> to vector<8x128xf32>
    %359 = arith.negf %358 : vector<8x128xf32>
    %360 = math.exp %359 : vector<8x128xf32>
    %cst_76 = arith.constant 1.000000e+00 : f32
    %361 = vector.broadcast %cst_76 : f32 to vector<8x128xf32>
    %362 = arith.addf %361, %360 : vector<8x128xf32>
    %363 = arith.divf %361, %362 : vector<8x128xf32>
    %364 = vector.extract_strided_slice %351 {offsets = [0, 256], sizes = [8, 128], strides = [1, 1]} : vector<8x512xf32> to vector<8x128xf32>
    %365 = math.tanh %364 : vector<8x128xf32>
    %366 = vector.extract_strided_slice %351 {offsets = [0, 384], sizes = [8, 128], strides = [1, 1]} : vector<8x512xf32> to vector<8x128xf32>
    %367 = arith.negf %366 : vector<8x128xf32>
    %368 = math.exp %367 : vector<8x128xf32>
    %cst_77 = arith.constant 1.000000e+00 : f32
    %369 = vector.broadcast %cst_77 : f32 to vector<8x128xf32>
    %370 = arith.addf %369, %368 : vector<8x128xf32>
    %371 = arith.divf %369, %370 : vector<8x128xf32>
    %372 = arith.mulf %363, %312 : vector<8x128xf32>
    %373 = arith.mulf %357, %365 : vector<8x128xf32>
    %374 = arith.addf %372, %373 : vector<8x128xf32>
    %375 = math.tanh %374 : vector<8x128xf32>
    %376 = arith.mulf %371, %375 : vector<8x128xf32>
    %377 = tpu.concatenate %376, %344 in 1 : vector<8x128xf32>, vector<8x128xf32> -> vector<8x256xf32>
    %378 = arith.truncf %377 : vector<8x256xf32> to vector<8x256xbf16>
    %cst_78 = arith.constant dense<0.000000e+00> : vector<8x512xf32>
    %379 = tpu.matmul %378, %28, %cst_78 {dimension_numbers = #tpu.dot_dimension_numbers<[1], [0], [0], [1], [0, 0, 1, 1], [], []>} : vector<8x256xbf16>, vector<256x512xbf16>, vector<8x512xf32> -> vector<8x512xf32>
    %380 = vector.broadcast %29 : vector<1x512xf32> to vector<8x512xf32>
    %381 = arith.addf %379, %380 : vector<8x512xf32>
    %382 = vector.extract_strided_slice %381 {offsets = [0, 0], sizes = [8, 128], strides = [1, 1]} : vector<8x512xf32> to vector<8x128xf32>
    %383 = arith.negf %382 : vector<8x128xf32>
    %384 = math.exp %383 : vector<8x128xf32>
    %cst_79 = arith.constant 1.000000e+00 : f32
    %385 = vector.broadcast %cst_79 : f32 to vector<8x128xf32>
    %386 = arith.addf %385, %384 : vector<8x128xf32>
    %387 = arith.divf %385, %386 : vector<8x128xf32>
    %388 = vector.extract_strided_slice %381 {offsets = [0, 128], sizes = [8, 128], strides = [1, 1]} : vector<8x512xf32> to vector<8x128xf32>
    %389 = arith.negf %388 : vector<8x128xf32>
    %390 = math.exp %389 : vector<8x128xf32>
    %cst_80 = arith.constant 1.000000e+00 : f32
    %391 = vector.broadcast %cst_80 : f32 to vector<8x128xf32>
    %392 = arith.addf %391, %390 : vector<8x128xf32>
    %393 = arith.divf %391, %392 : vector<8x128xf32>
    %394 = vector.extract_strided_slice %381 {offsets = [0, 256], sizes = [8, 128], strides = [1, 1]} : vector<8x512xf32> to vector<8x128xf32>
    %395 = math.tanh %394 : vector<8x128xf32>
    %396 = vector.extract_strided_slice %381 {offsets = [0, 384], sizes = [8, 128], strides = [1, 1]} : vector<8x512xf32> to vector<8x128xf32>
    %397 = arith.negf %396 : vector<8x128xf32>
    %398 = math.exp %397 : vector<8x128xf32>
    %cst_81 = arith.constant 1.000000e+00 : f32
    %399 = vector.broadcast %cst_81 : f32 to vector<8x128xf32>
    %400 = arith.addf %399, %398 : vector<8x128xf32>
    %401 = arith.divf %399, %400 : vector<8x128xf32>
    %402 = arith.mulf %393, %342 : vector<8x128xf32>
    %403 = arith.mulf %387, %395 : vector<8x128xf32>
    %404 = arith.addf %402, %403 : vector<8x128xf32>
    %405 = math.tanh %404 : vector<8x128xf32>
    %406 = arith.mulf %401, %405 : vector<8x128xf32>
    %407 = arith.truncf %406 : vector<8x128xf32> to vector<8x128xbf16>
    %408 = vector.extract_strided_slice %25 {offsets = [48, 0], sizes = [8, 512], strides = [1, 1]} : vector<72x512xf32> to vector<8x512xf32>
    %409 = arith.truncf %376 : vector<8x128xf32> to vector<8x128xbf16>
    %cst_82 = arith.constant dense<0.000000e+00> : vector<8x512xf32>
    %410 = tpu.matmul %409, %26, %cst_82 {dimension_numbers = #tpu.dot_dimension_numbers<[1], [0], [0], [1], [0, 0, 1, 1], [], []>} : vector<8x128xbf16>, vector<128x512xbf16>, vector<8x512xf32> -> vector<8x512xf32>
    %411 = arith.addf %408, %410 : vector<8x512xf32>
    %412 = vector.broadcast %27 : vector<1x512xf32> to vector<8x512xf32>
    %413 = arith.addf %411, %412 : vector<8x512xf32>
    %414 = vector.extract_strided_slice %413 {offsets = [0, 0], sizes = [8, 128], strides = [1, 1]} : vector<8x512xf32> to vector<8x128xf32>
    %415 = arith.negf %414 : vector<8x128xf32>
    %416 = math.exp %415 : vector<8x128xf32>
    %cst_83 = arith.constant 1.000000e+00 : f32
    %417 = vector.broadcast %cst_83 : f32 to vector<8x128xf32>
    %418 = arith.addf %417, %416 : vector<8x128xf32>
    %419 = arith.divf %417, %418 : vector<8x128xf32>
    %420 = vector.extract_strided_slice %413 {offsets = [0, 128], sizes = [8, 128], strides = [1, 1]} : vector<8x512xf32> to vector<8x128xf32>
    %421 = arith.negf %420 : vector<8x128xf32>
    %422 = math.exp %421 : vector<8x128xf32>
    %cst_84 = arith.constant 1.000000e+00 : f32
    %423 = vector.broadcast %cst_84 : f32 to vector<8x128xf32>
    %424 = arith.addf %423, %422 : vector<8x128xf32>
    %425 = arith.divf %423, %424 : vector<8x128xf32>
    %426 = vector.extract_strided_slice %413 {offsets = [0, 256], sizes = [8, 128], strides = [1, 1]} : vector<8x512xf32> to vector<8x128xf32>
    %427 = math.tanh %426 : vector<8x128xf32>
    %428 = vector.extract_strided_slice %413 {offsets = [0, 384], sizes = [8, 128], strides = [1, 1]} : vector<8x512xf32> to vector<8x128xf32>
    %429 = arith.negf %428 : vector<8x128xf32>
    %430 = math.exp %429 : vector<8x128xf32>
    %cst_85 = arith.constant 1.000000e+00 : f32
    %431 = vector.broadcast %cst_85 : f32 to vector<8x128xf32>
    %432 = arith.addf %431, %430 : vector<8x128xf32>
    %433 = arith.divf %431, %432 : vector<8x128xf32>
    %434 = arith.mulf %425, %374 : vector<8x128xf32>
    %435 = arith.mulf %419, %427 : vector<8x128xf32>
    %436 = arith.addf %434, %435 : vector<8x128xf32>
    %437 = math.tanh %436 : vector<8x128xf32>
    %438 = arith.mulf %433, %437 : vector<8x128xf32>
    %439 = tpu.concatenate %438, %406 in 1 : vector<8x128xf32>, vector<8x128xf32> -> vector<8x256xf32>
    %440 = arith.truncf %439 : vector<8x256xf32> to vector<8x256xbf16>
    %cst_86 = arith.constant dense<0.000000e+00> : vector<8x512xf32>
    %441 = tpu.matmul %440, %28, %cst_86 {dimension_numbers = #tpu.dot_dimension_numbers<[1], [0], [0], [1], [0, 0, 1, 1], [], []>} : vector<8x256xbf16>, vector<256x512xbf16>, vector<8x512xf32> -> vector<8x512xf32>
    %442 = vector.broadcast %29 : vector<1x512xf32> to vector<8x512xf32>
    %443 = arith.addf %441, %442 : vector<8x512xf32>
    %444 = vector.extract_strided_slice %443 {offsets = [0, 0], sizes = [8, 128], strides = [1, 1]} : vector<8x512xf32> to vector<8x128xf32>
    %445 = arith.negf %444 : vector<8x128xf32>
    %446 = math.exp %445 : vector<8x128xf32>
    %cst_87 = arith.constant 1.000000e+00 : f32
    %447 = vector.broadcast %cst_87 : f32 to vector<8x128xf32>
    %448 = arith.addf %447, %446 : vector<8x128xf32>
    %449 = arith.divf %447, %448 : vector<8x128xf32>
    %450 = vector.extract_strided_slice %443 {offsets = [0, 128], sizes = [8, 128], strides = [1, 1]} : vector<8x512xf32> to vector<8x128xf32>
    %451 = arith.negf %450 : vector<8x128xf32>
    %452 = math.exp %451 : vector<8x128xf32>
    %cst_88 = arith.constant 1.000000e+00 : f32
    %453 = vector.broadcast %cst_88 : f32 to vector<8x128xf32>
    %454 = arith.addf %453, %452 : vector<8x128xf32>
    %455 = arith.divf %453, %454 : vector<8x128xf32>
    %456 = vector.extract_strided_slice %443 {offsets = [0, 256], sizes = [8, 128], strides = [1, 1]} : vector<8x512xf32> to vector<8x128xf32>
    %457 = math.tanh %456 : vector<8x128xf32>
    %458 = vector.extract_strided_slice %443 {offsets = [0, 384], sizes = [8, 128], strides = [1, 1]} : vector<8x512xf32> to vector<8x128xf32>
    %459 = arith.negf %458 : vector<8x128xf32>
    %460 = math.exp %459 : vector<8x128xf32>
    %cst_89 = arith.constant 1.000000e+00 : f32
    %461 = vector.broadcast %cst_89 : f32 to vector<8x128xf32>
    %462 = arith.addf %461, %460 : vector<8x128xf32>
    %463 = arith.divf %461, %462 : vector<8x128xf32>
    %464 = arith.mulf %455, %404 : vector<8x128xf32>
    %465 = arith.mulf %449, %457 : vector<8x128xf32>
    %466 = arith.addf %464, %465 : vector<8x128xf32>
    %467 = math.tanh %466 : vector<8x128xf32>
    %468 = arith.mulf %463, %467 : vector<8x128xf32>
    %469 = arith.truncf %468 : vector<8x128xf32> to vector<8x128xbf16>
    %470 = vector.extract_strided_slice %25 {offsets = [56, 0], sizes = [8, 512], strides = [1, 1]} : vector<72x512xf32> to vector<8x512xf32>
    %471 = arith.truncf %438 : vector<8x128xf32> to vector<8x128xbf16>
    %cst_90 = arith.constant dense<0.000000e+00> : vector<8x512xf32>
    %472 = tpu.matmul %471, %26, %cst_90 {dimension_numbers = #tpu.dot_dimension_numbers<[1], [0], [0], [1], [0, 0, 1, 1], [], []>} : vector<8x128xbf16>, vector<128x512xbf16>, vector<8x512xf32> -> vector<8x512xf32>
    %473 = arith.addf %470, %472 : vector<8x512xf32>
    %474 = vector.broadcast %27 : vector<1x512xf32> to vector<8x512xf32>
    %475 = arith.addf %473, %474 : vector<8x512xf32>
    %476 = vector.extract_strided_slice %475 {offsets = [0, 0], sizes = [8, 128], strides = [1, 1]} : vector<8x512xf32> to vector<8x128xf32>
    %477 = arith.negf %476 : vector<8x128xf32>
    %478 = math.exp %477 : vector<8x128xf32>
    %cst_91 = arith.constant 1.000000e+00 : f32
    %479 = vector.broadcast %cst_91 : f32 to vector<8x128xf32>
    %480 = arith.addf %479, %478 : vector<8x128xf32>
    %481 = arith.divf %479, %480 : vector<8x128xf32>
    %482 = vector.extract_strided_slice %475 {offsets = [0, 128], sizes = [8, 128], strides = [1, 1]} : vector<8x512xf32> to vector<8x128xf32>
    %483 = arith.negf %482 : vector<8x128xf32>
    %484 = math.exp %483 : vector<8x128xf32>
    %cst_92 = arith.constant 1.000000e+00 : f32
    %485 = vector.broadcast %cst_92 : f32 to vector<8x128xf32>
    %486 = arith.addf %485, %484 : vector<8x128xf32>
    %487 = arith.divf %485, %486 : vector<8x128xf32>
    %488 = vector.extract_strided_slice %475 {offsets = [0, 256], sizes = [8, 128], strides = [1, 1]} : vector<8x512xf32> to vector<8x128xf32>
    %489 = math.tanh %488 : vector<8x128xf32>
    %490 = vector.extract_strided_slice %475 {offsets = [0, 384], sizes = [8, 128], strides = [1, 1]} : vector<8x512xf32> to vector<8x128xf32>
    %491 = arith.negf %490 : vector<8x128xf32>
    %492 = math.exp %491 : vector<8x128xf32>
    %cst_93 = arith.constant 1.000000e+00 : f32
    %493 = vector.broadcast %cst_93 : f32 to vector<8x128xf32>
    %494 = arith.addf %493, %492 : vector<8x128xf32>
    %495 = arith.divf %493, %494 : vector<8x128xf32>
    %496 = arith.mulf %487, %436 : vector<8x128xf32>
    %497 = arith.mulf %481, %489 : vector<8x128xf32>
    %498 = arith.addf %496, %497 : vector<8x128xf32>
    %499 = math.tanh %498 : vector<8x128xf32>
    %500 = arith.mulf %495, %499 : vector<8x128xf32>
    %501 = tpu.concatenate %500, %468 in 1 : vector<8x128xf32>, vector<8x128xf32> -> vector<8x256xf32>
    %502 = arith.truncf %501 : vector<8x256xf32> to vector<8x256xbf16>
    %cst_94 = arith.constant dense<0.000000e+00> : vector<8x512xf32>
    %503 = tpu.matmul %502, %28, %cst_94 {dimension_numbers = #tpu.dot_dimension_numbers<[1], [0], [0], [1], [0, 0, 1, 1], [], []>} : vector<8x256xbf16>, vector<256x512xbf16>, vector<8x512xf32> -> vector<8x512xf32>
    %504 = vector.broadcast %29 : vector<1x512xf32> to vector<8x512xf32>
    %505 = arith.addf %503, %504 : vector<8x512xf32>
    %506 = vector.extract_strided_slice %505 {offsets = [0, 0], sizes = [8, 128], strides = [1, 1]} : vector<8x512xf32> to vector<8x128xf32>
    %507 = arith.negf %506 : vector<8x128xf32>
    %508 = math.exp %507 : vector<8x128xf32>
    %cst_95 = arith.constant 1.000000e+00 : f32
    %509 = vector.broadcast %cst_95 : f32 to vector<8x128xf32>
    %510 = arith.addf %509, %508 : vector<8x128xf32>
    %511 = arith.divf %509, %510 : vector<8x128xf32>
    %512 = vector.extract_strided_slice %505 {offsets = [0, 128], sizes = [8, 128], strides = [1, 1]} : vector<8x512xf32> to vector<8x128xf32>
    %513 = arith.negf %512 : vector<8x128xf32>
    %514 = math.exp %513 : vector<8x128xf32>
    %cst_96 = arith.constant 1.000000e+00 : f32
    %515 = vector.broadcast %cst_96 : f32 to vector<8x128xf32>
    %516 = arith.addf %515, %514 : vector<8x128xf32>
    %517 = arith.divf %515, %516 : vector<8x128xf32>
    %518 = vector.extract_strided_slice %505 {offsets = [0, 256], sizes = [8, 128], strides = [1, 1]} : vector<8x512xf32> to vector<8x128xf32>
    %519 = math.tanh %518 : vector<8x128xf32>
    %520 = vector.extract_strided_slice %505 {offsets = [0, 384], sizes = [8, 128], strides = [1, 1]} : vector<8x512xf32> to vector<8x128xf32>
    %521 = arith.negf %520 : vector<8x128xf32>
    %522 = math.exp %521 : vector<8x128xf32>
    %cst_97 = arith.constant 1.000000e+00 : f32
    %523 = vector.broadcast %cst_97 : f32 to vector<8x128xf32>
    %524 = arith.addf %523, %522 : vector<8x128xf32>
    %525 = arith.divf %523, %524 : vector<8x128xf32>
    %526 = arith.mulf %517, %466 : vector<8x128xf32>
    %527 = arith.mulf %511, %519 : vector<8x128xf32>
    %528 = arith.addf %526, %527 : vector<8x128xf32>
    %529 = math.tanh %528 : vector<8x128xf32>
    %530 = arith.mulf %525, %529 : vector<8x128xf32>
    %531 = arith.truncf %530 : vector<8x128xf32> to vector<8x128xbf16>
    %532 = vector.extract_strided_slice %25 {offsets = [64, 0], sizes = [8, 512], strides = [1, 1]} : vector<72x512xf32> to vector<8x512xf32>
    %533 = arith.truncf %500 : vector<8x128xf32> to vector<8x128xbf16>
    %cst_98 = arith.constant dense<0.000000e+00> : vector<8x512xf32>
    %534 = tpu.matmul %533, %26, %cst_98 {dimension_numbers = #tpu.dot_dimension_numbers<[1], [0], [0], [1], [0, 0, 1, 1], [], []>} : vector<8x128xbf16>, vector<128x512xbf16>, vector<8x512xf32> -> vector<8x512xf32>
    %535 = arith.addf %532, %534 : vector<8x512xf32>
    %536 = vector.broadcast %27 : vector<1x512xf32> to vector<8x512xf32>
    %537 = arith.addf %535, %536 : vector<8x512xf32>
    %538 = vector.extract_strided_slice %537 {offsets = [0, 0], sizes = [8, 128], strides = [1, 1]} : vector<8x512xf32> to vector<8x128xf32>
    %539 = arith.negf %538 : vector<8x128xf32>
    %540 = math.exp %539 : vector<8x128xf32>
    %cst_99 = arith.constant 1.000000e+00 : f32
    %541 = vector.broadcast %cst_99 : f32 to vector<8x128xf32>
    %542 = arith.addf %541, %540 : vector<8x128xf32>
    %543 = arith.divf %541, %542 : vector<8x128xf32>
    %544 = vector.extract_strided_slice %537 {offsets = [0, 128], sizes = [8, 128], strides = [1, 1]} : vector<8x512xf32> to vector<8x128xf32>
    %545 = arith.negf %544 : vector<8x128xf32>
    %546 = math.exp %545 : vector<8x128xf32>
    %cst_100 = arith.constant 1.000000e+00 : f32
    %547 = vector.broadcast %cst_100 : f32 to vector<8x128xf32>
    %548 = arith.addf %547, %546 : vector<8x128xf32>
    %549 = arith.divf %547, %548 : vector<8x128xf32>
    %550 = vector.extract_strided_slice %537 {offsets = [0, 256], sizes = [8, 128], strides = [1, 1]} : vector<8x512xf32> to vector<8x128xf32>
    %551 = math.tanh %550 : vector<8x128xf32>
    %552 = vector.extract_strided_slice %537 {offsets = [0, 384], sizes = [8, 128], strides = [1, 1]} : vector<8x512xf32> to vector<8x128xf32>
    %553 = arith.negf %552 : vector<8x128xf32>
    %554 = math.exp %553 : vector<8x128xf32>
    %cst_101 = arith.constant 1.000000e+00 : f32
    %555 = vector.broadcast %cst_101 : f32 to vector<8x128xf32>
    %556 = arith.addf %555, %554 : vector<8x128xf32>
    %557 = arith.divf %555, %556 : vector<8x128xf32>
    %558 = arith.mulf %549, %498 : vector<8x128xf32>
    %559 = arith.mulf %543, %551 : vector<8x128xf32>
    %560 = arith.addf %558, %559 : vector<8x128xf32>
    %561 = math.tanh %560 : vector<8x128xf32>
    %562 = arith.mulf %557, %561 : vector<8x128xf32>
    %563 = tpu.concatenate %562, %530 in 1 : vector<8x128xf32>, vector<8x128xf32> -> vector<8x256xf32>
    %564 = arith.truncf %563 : vector<8x256xf32> to vector<8x256xbf16>
    %cst_102 = arith.constant dense<0.000000e+00> : vector<8x512xf32>
    %565 = tpu.matmul %564, %28, %cst_102 {dimension_numbers = #tpu.dot_dimension_numbers<[1], [0], [0], [1], [0, 0, 1, 1], [], []>} : vector<8x256xbf16>, vector<256x512xbf16>, vector<8x512xf32> -> vector<8x512xf32>
    %566 = vector.broadcast %29 : vector<1x512xf32> to vector<8x512xf32>
    %567 = arith.addf %565, %566 : vector<8x512xf32>
    %568 = vector.extract_strided_slice %567 {offsets = [0, 0], sizes = [8, 128], strides = [1, 1]} : vector<8x512xf32> to vector<8x128xf32>
    %569 = arith.negf %568 : vector<8x128xf32>
    %570 = math.exp %569 : vector<8x128xf32>
    %cst_103 = arith.constant 1.000000e+00 : f32
    %571 = vector.broadcast %cst_103 : f32 to vector<8x128xf32>
    %572 = arith.addf %571, %570 : vector<8x128xf32>
    %573 = arith.divf %571, %572 : vector<8x128xf32>
    %574 = vector.extract_strided_slice %567 {offsets = [0, 128], sizes = [8, 128], strides = [1, 1]} : vector<8x512xf32> to vector<8x128xf32>
    %575 = arith.negf %574 : vector<8x128xf32>
    %576 = math.exp %575 : vector<8x128xf32>
    %cst_104 = arith.constant 1.000000e+00 : f32
    %577 = vector.broadcast %cst_104 : f32 to vector<8x128xf32>
    %578 = arith.addf %577, %576 : vector<8x128xf32>
    %579 = arith.divf %577, %578 : vector<8x128xf32>
    %580 = vector.extract_strided_slice %567 {offsets = [0, 256], sizes = [8, 128], strides = [1, 1]} : vector<8x512xf32> to vector<8x128xf32>
    %581 = math.tanh %580 : vector<8x128xf32>
    %582 = vector.extract_strided_slice %567 {offsets = [0, 384], sizes = [8, 128], strides = [1, 1]} : vector<8x512xf32> to vector<8x128xf32>
    %583 = arith.negf %582 : vector<8x128xf32>
    %584 = math.exp %583 : vector<8x128xf32>
    %cst_105 = arith.constant 1.000000e+00 : f32
    %585 = vector.broadcast %cst_105 : f32 to vector<8x128xf32>
    %586 = arith.addf %585, %584 : vector<8x128xf32>
    %587 = arith.divf %585, %586 : vector<8x128xf32>
    %588 = arith.mulf %579, %528 : vector<8x128xf32>
    %589 = arith.mulf %573, %581 : vector<8x128xf32>
    %590 = arith.addf %588, %589 : vector<8x128xf32>
    %591 = math.tanh %590 : vector<8x128xf32>
    %592 = arith.mulf %587, %591 : vector<8x128xf32>
    %593 = arith.truncf %592 : vector<8x128xf32> to vector<8x128xbf16>
    %594 = tpu.concatenate %97, %159, %221, %283, %345, %407, %469, %531, %593 in 0 : vector<8x128xbf16>, vector<8x128xbf16>, vector<8x128xbf16>, vector<8x128xbf16>, vector<8x128xbf16>, vector<8x128xbf16>, vector<8x128xbf16>, vector<8x128xbf16>, vector<8x128xbf16> -> vector<72x128xbf16>
    %cst_106 = arith.constant dense<0.000000e+00> : vector<72x128xf32>
    %595 = tpu.matmul %594, %30, %cst_106 {dimension_numbers = #tpu.dot_dimension_numbers<[1], [0], [0], [1], [0, 0, 1, 1], [], []>} : vector<72x128xbf16>, vector<128x128xbf16>, vector<72x128xf32> -> vector<72x128xf32>
    %596 = vector.broadcast %31 : vector<1x128xf32> to vector<72x128xf32>
    %597 = arith.addf %595, %596 : vector<72x128xf32>
    %c0_107 = arith.constant 0 : index
    %c0_108 = arith.constant 0 : index
    %598 = vector.load %arg13[%c0_107, %c0_108] : memref<72x128xf32, #tpu.memory_space<vmem>>, vector<72x128xf32>
    tpu.vector_store %arg13[%c0_107, %c0_108], %597 {strides = array<i32>} : memref<72x128xf32, #tpu.memory_space<vmem>>, vector<72x128xf32>,
    return
  }
}

</mosaic_0001>

<llo_original>
// kernel: caption_generator_forward.1
$region0: #{caption_generator_forward.1}
  #allocation0 [shape = 'u32[]', space=smem, size = 0x4, offset = 0x4, fixed_abs, tag = 'smem constant byte address 0x4 - core index']
  #allocation1 [shape = 'u32[72,128]{1,0:T(1,128)}', space=vmem, size = 0x9000, scoped, tag = 'internal scratch']
  %s0 = inlined_call_operand.vmem [shape: bf16[512,128], index: 0, kind: input, shape index: {}]
  %s1 = inlined_call_operand.vmem [shape: bf16[128,128], index: 1, kind: input, shape index: {}]
  %s2 = inlined_call_operand.vmem [shape: f32[1,128], index: 2, kind: input, shape index: {}]
  %s3 = inlined_call_operand.vmem [shape: bf16[128,128], index: 3, kind: input, shape index: {}]
  %s4 = inlined_call_operand.vmem [shape: f32[1,128], index: 4, kind: input, shape index: {}]
  %s5 = inlined_call_operand.vmem [shape: bf16[64,128], index: 5, kind: input, shape index: {}]
  %s6 = inlined_call_operand.vmem [shape: bf16[128,512], index: 6, kind: input, shape index: {}]
  %s7 = inlined_call_operand.vmem [shape: bf16[128,512], index: 7, kind: input, shape index: {}]
  %s8 = inlined_call_operand.vmem [shape: f32[1,512], index: 8, kind: input, shape index: {}]
  %s9 = inlined_call_operand.vmem [shape: bf16[256,512], index: 9, kind: input, shape index: {}]
  %s10 = inlined_call_operand.vmem [shape: f32[1,512], index: 10, kind: input, shape index: {}]
  %s11 = inlined_call_operand.vmem [shape: bf16[128,128], index: 11, kind: input, shape index: {}]
  %s12 = inlined_call_operand.vmem [shape: f32[1,128], index: 12, kind: input, shape index: {}]
  %s13 = inlined_call_operand.vmem [shape: f32[72,128], index: 13, kind: output, shape index: {}]
  %s14 = sld [smem:[#allocation0]]
  $region62: #{caption_generator_forward.1} parent=0
    _
  %s16 = ssub.s32 1, %s14
  %s17 = scalar_select 0, %s16, %s14
  // Predicated region
  $region2: #{caption_generator_forward.1} parent=0 // pred_check
    _
  $region3: #{caption_generator_forward.1} parent=0 // pred_check_branch
    %19 = sbr.rel (0) target = $region5
  $region4: #{caption_generator_forward.1} parent=0 // pred_region
    _
  $region5: #{caption_generator_forward.1} parent=0 // pred_fallthru
    _
  // Predicated region
  $region6: #{caption_generator_forward.1} parent=0 // pred_check
    _
  $region7: #{caption_generator_forward.1} parent=0 // pred_check_branch
    %21 = sbr.rel (0) target = $region9
  $region8: #{caption_generator_forward.1} parent=0 // pred_region
    _
  $region9: #{caption_generator_forward.1} parent=0 // pred_fallthru
    _
  // Predicated region
  $region10: #{caption_generator_forward.1} parent=0 // pred_check
    _
  $region11: #{caption_generator_forward.1} parent=0 // pred_check_branch
    %23 = sbr.rel (0) target = $region13
  $region12: #{caption_generator_forward.1} parent=0 // pred_region
    _
  $region13: #{caption_generator_forward.1} parent=0 // pred_fallthru
    _
  // Predicated region
  $region14: #{caption_generator_forward.1} parent=0 // pred_check
    _
  $region15: #{caption_generator_forward.1} parent=0 // pred_check_branch
    %25 = sbr.rel (0) target = $region17
  $region16: #{caption_generator_forward.1} parent=0 // pred_region
    _
  $region17: #{caption_generator_forward.1} parent=0 // pred_fallthru
    _
  // Predicated region
  $region18: #{caption_generator_forward.1} parent=0 // pred_check
    _
  $region19: #{caption_generator_forward.1} parent=0 // pred_check_branch
    %27 = sbr.rel (0) target = $region21
  $region20: #{caption_generator_forward.1} parent=0 // pred_region
    _
  $region21: #{caption_generator_forward.1} parent=0 // pred_fallthru
    _
  // Predicated region
  $region22: #{caption_generator_forward.1} parent=0 // pred_check
    _
  $region23: #{caption_generator_forward.1} parent=0 // pred_check_branch
    %29 = sbr.rel (0) target = $region25
  $region24: #{caption_generator_forward.1} parent=0 // pred_region
    _
  $region25: #{caption_generator_forward.1} parent=0 // pred_fallthru
    _
  // Predicated region
  $region26: #{caption_generator_forward.1} parent=0 // pred_check
    _
  $region27: #{caption_generator_forward.1} parent=0 // pred_check_branch
    %31 = sbr.rel (0) target = $region29
  $region28: #{caption_generator_forward.1} parent=0 // pred_region
    _
  $region29: #{caption_generator_forward.1} parent=0 // pred_fallthru
    _
  // Predicated region
  $region30: #{caption_generator_forward.1} parent=0 // pred_check
    _
  $region31: #{caption_generator_forward.1} parent=0 // pred_check_branch
    %33 = sbr.rel (0) target = $region33
  $region32: #{caption_generator_forward.1} parent=0 // pred_region
    _
  $region33: #{caption_generator_forward.1} parent=0 // pred_fallthru
    _
  // Predicated region
  $region34: #{caption_generator_forward.1} parent=0 // pred_check
    _
  $region35: #{caption_generator_forward.1} parent=0 // pred_check_branch
    %35 = sbr.rel (0) target = $region37
  $region36: #{caption_generator_forward.1} parent=0 // pred_region
    _
  $region37: #{caption_generator_forward.1} parent=0 // pred_fallthru
    _
  // Predicated region
  $region38: #{caption_generator_forward.1} parent=0 // pred_check
    _
  $region39: #{caption_generator_forward.1} parent=0 // pred_check_branch
    %37 = sbr.rel (0) target = $region41
  $region40: #{caption_generator_forward.1} parent=0 // pred_region
    _
  $region41: #{caption_generator_forward.1} parent=0 // pred_fallthru
    _
  // Predicated region
  $region42: #{caption_generator_forward.1} parent=0 // pred_check
    _
  $region43: #{caption_generator_forward.1} parent=0 // pred_check_branch
    %39 = sbr.rel (0) target = $region45
  $region44: #{caption_generator_forward.1} parent=0 // pred_region
    _
  $region45: #{caption_generator_forward.1} parent=0 // pred_fallthru
    _
  // Predicated region
  $region46: #{caption_generator_forward.1} parent=0 // pred_check
    _
  $region47: #{caption_generator_forward.1} parent=0 // pred_check_branch
    %41 = sbr.rel (0) target = $region49
  $region48: #{caption_generator_forward.1} parent=0 // pred_region
    _
  $region49: #{caption_generator_forward.1} parent=0 // pred_fallthru
    _
  // Predicated region
  $region50: #{caption_generator_forward.1} parent=0 // pred_check
    _
  $region51: #{caption_generator_forward.1} parent=0 // pred_check_branch
    %43 = sbr.rel (0) target = $region53
  $region52: #{caption_generator_forward.1} parent=0 // pred_region
    _
  $region53: #{caption_generator_forward.1} parent=0 // pred_fallthru
    _
  %v45 = vld [vmem:[%s0] sm:$0xf]
  %v46 = vld [vmem:[%s0 + $0x4] sm:$0xf]
  %v47 = vld [vmem:[%s0 + $0x8] sm:$0xf]
  %v48 = vld [vmem:[%s0 + $0xc] sm:$0xf]
  %v49 = vld [vmem:[%s0 + $0x10] sm:$0xf]
  %v50 = vld [vmem:[%s0 + $0x14] sm:$0xf]
  %v51 = vld [vmem:[%s0 + $0x18] sm:$0xf]
  %v52 = vld [vmem:[%s0 + $0x1c] sm:$0xf]
  %v53 = vld [vmem:[%s0 + $0x20] sm:$0xf]
  %v54 = vld [vmem:[%s0 + $0x24] sm:$0xf]
  %v55 = vld [vmem:[%s0 + $0x28] sm:$0xf]
  %v56 = vld [vmem:[%s0 + $0x2c] sm:$0xf]
  %v57 = vld [vmem:[%s0 + $0x30] sm:$0xf]
  %v58 = vld [vmem:[%s0 + $0x34] sm:$0xf]
  %v59 = vld [vmem:[%s0 + $0x38] sm:$0xf]
  %v60 = vld [vmem:[%s0 + $0x3c] sm:$0xf]
  %v61 = vld [vmem:[%s0 + $0x40] sm:$0xf]
  %v62 = vld [vmem:[%s0 + $0x44] sm:$0xf]
  %v63 = vld [vmem:[%s0 + $0x48] sm:$0xf]
  %v64 = vld [vmem:[%s0 + $0x4c] sm:$0xf]
  %v65 = vld [vmem:[%s0 + $0x50] sm:$0xf]
  %v66 = vld [vmem:[%s0 + $0x54] sm:$0xf]
  %v67 = vld [vmem:[%s0 + $0x58] sm:$0xf]
  %v68 = vld [vmem:[%s0 + $0x5c] sm:$0xf]
  %v69 = vld [vmem:[%s0 + $0x60] sm:$0xf]
  %v70 = vld [vmem:[%s0 + $0x64] sm:$0xf]
  %v71 = vld [vmem:[%s0 + $0x68] sm:$0xf]
  %v72 = vld [vmem:[%s0 + $0x6c] sm:$0xf]
  %v73 = vld [vmem:[%s0 + $0x70] sm:$0xf]
  %v74 = vld [vmem:[%s0 + $0x74] sm:$0xf]
  %v75 = vld [vmem:[%s0 + $0x78] sm:$0xf]
  %v76 = vld [vmem:[%s0 + $0x7c] sm:$0xf]
  %v77 = vld [vmem:[%s0 + $0x80] sm:$0xf]
  %v78 = vld [vmem:[%s0 + $0x84] sm:$0xf]
  %v79 = vld [vmem:[%s0 + $0x88] sm:$0xf]
  %v80 = vld [vmem:[%s0 + $0x8c] sm:$0xf]
  %v81 = vld [vmem:[%s0 + $0x90] sm:$0xf]
  %v82 = vld [vmem:[%s0 + $0x94] sm:$0xf]
  %v83 = vld [vmem:[%s0 + $0x98] sm:$0xf]
  %v84 = vld [vmem:[%s0 + $0x9c] sm:$0xf]
  %v85 = vld [vmem:[%s0 + $0xa0] sm:$0xf]
  %v86 = vld [vmem:[%s0 + $0xa4] sm:$0xf]
  %v87 = vld [vmem:[%s0 + $0xa8] sm:$0xf]
  %v88 = vld [vmem:[%s0 + $0xac] sm:$0xf]
  %v89 = vld [vmem:[%s0 + $0xb0] sm:$0xf]
  %v90 = vld [vmem:[%s0 + $0xb4] sm:$0xf]
  %v91 = vld [vmem:[%s0 + $0xb8] sm:$0xf]
  %v92 = vld [vmem:[%s0 + $0xbc] sm:$0xf]
  %v93 = vld [vmem:[%s0 + $0xc0] sm:$0xf]
  %v94 = vld [vmem:[%s0 + $0xc4] sm:$0xf]
  %v95 = vld [vmem:[%s0 + $0xc8] sm:$0xf]
  %v96 = vld [vmem:[%s0 + $0xcc] sm:$0xf]
  %v97 = vld [vmem:[%s0 + $0xd0] sm:$0xf]
  %v98 = vld [vmem:[%s0 + $0xd4] sm:$0xf]
  %v99 = vld [vmem:[%s0 + $0xd8] sm:$0xf]
  %v100 = vld [vmem:[%s0 + $0xdc] sm:$0xf]
  %v101 = vld [vmem:[%s0 + $0xe0] sm:$0xf]
  %v102 = vld [vmem:[%s0 + $0xe4] sm:$0xf]
  %v103 = vld [vmem:[%s0 + $0xe8] sm:$0xf]
  %v104 = vld [vmem:[%s0 + $0xec] sm:$0xf]
  %v105 = vld [vmem:[%s0 + $0xf0] sm:$0xf]
  %v106 = vld [vmem:[%s0 + $0xf4] sm:$0xf]
  %v107 = vld [vmem:[%s0 + $0xf8] sm:$0xf]
  %v108 = vld [vmem:[%s0 + $0xfc] sm:$0xf]
  %v109 = vld [vmem:[%s1] sm:$0xf]
  %v110 = vld [vmem:[%s1 + $0x4] sm:$0xf]
  %v111 = vld [vmem:[%s1 + $0x8] sm:$0xf]
  %v112 = vld [vmem:[%s1 + $0xc] sm:$0xf]
  %v113 = vld [vmem:[%s1 + $0x10] sm:$0xf]
  %v114 = vld [vmem:[%s1 + $0x14] sm:$0xf]
  %v115 = vld [vmem:[%s1 + $0x18] sm:$0xf]
  %v116 = vld [vmem:[%s1 + $0x1c] sm:$0xf]
  %v117 = vld [vmem:[%s1 + $0x20] sm:$0xf]
  %v118 = vld [vmem:[%s1 + $0x24] sm:$0xf]
  %v119 = vld [vmem:[%s1 + $0x28] sm:$0xf]
  %v120 = vld [vmem:[%s1 + $0x2c] sm:$0xf]
  %v121 = vld [vmem:[%s1 + $0x30] sm:$0xf]
  %v122 = vld [vmem:[%s1 + $0x34] sm:$0xf]
  %v123 = vld [vmem:[%s1 + $0x38] sm:$0xf]
  %v124 = vld [vmem:[%s1 + $0x3c] sm:$0xf]
  %v125 = vld [vmem:[%s2] sm:$0x1]
  %v127 = vperm.slane %v125, 0
  %v193 = vunpack.c.l.b16 %v45
  %v194 = vunpack.c.l.b16 %v46
  %v195 = vunpack.c.l.b16 %v47
  %v196 = vunpack.c.l.b16 %v48
  %v197 = vunpack.c.l.b16 %v49
  %v198 = vunpack.c.l.b16 %v50
  %v199 = vunpack.c.l.b16 %v51
  %v200 = vunpack.c.l.b16 %v52
  %v201 = vunpack.c.l.b16 %v53
  %v202 = vunpack.c.l.b16 %v54
  %v203 = vunpack.c.l.b16 %v55
  %v204 = vunpack.c.l.b16 %v56
  %v205 = vunpack.c.l.b16 %v57
  %v206 = vunpack.c.l.b16 %v58
  %v207 = vunpack.c.l.b16 %v59
  %v208 = vunpack.c.l.b16 %v60
  %v209 = vunpack.c.l.b16 %v61
  %v210 = vunpack.c.l.b16 %v62
  %v211 = vunpack.c.l.b16 %v63
  %v212 = vunpack.c.l.b16 %v64
  %v213 = vunpack.c.l.b16 %v65
  %v214 = vunpack.c.l.b16 %v66
  %v215 = vunpack.c.l.b16 %v67
  %v216 = vunpack.c.l.b16 %v68
  %v217 = vunpack.c.l.b16 %v69
  %v218 = vunpack.c.l.b16 %v70
  %v219 = vunpack.c.l.b16 %v71
  %v220 = vunpack.c.l.b16 %v72
  %v221 = vunpack.c.l.b16 %v73
  %v222 = vunpack.c.l.b16 %v74
  %v223 = vunpack.c.l.b16 %v75
  %v224 = vunpack.c.l.b16 %v76
  %v225 = vunpack.c.l.b16 %v77
  %v226 = vunpack.c.l.b16 %v78
  %v227 = vunpack.c.l.b16 %v79
  %v228 = vunpack.c.l.b16 %v80
  %v229 = vunpack.c.l.b16 %v81
  %v230 = vunpack.c.l.b16 %v82
  %v231 = vunpack.c.l.b16 %v83
  %v232 = vunpack.c.l.b16 %v84
  %v233 = vunpack.c.l.b16 %v85
  %v234 = vunpack.c.l.b16 %v86
  %v235 = vunpack.c.l.b16 %v87
  %v236 = vunpack.c.l.b16 %v88
  %v237 = vunpack.c.l.b16 %v89
  %v238 = vunpack.c.l.b16 %v90
  %v239 = vunpack.c.l.b16 %v91
  %v240 = vunpack.c.l.b16 %v92
  %v241 = vunpack.c.l.b16 %v93
  %v242 = vunpack.c.l.b16 %v94
  %v243 = vunpack.c.l.b16 %v95
  %v244 = vunpack.c.l.b16 %v96
  %v245 = vunpack.c.l.b16 %v97
  %v246 = vunpack.c.l.b16 %v98
  %v247 = vunpack.c.l.b16 %v99
  %v248 = vunpack.c.l.b16 %v100
  %v249 = vunpack.c.l.b16 %v101
  %v250 = vunpack.c.l.b16 %v102
  %v251 = vunpack.c.l.b16 %v103
  %v252 = vunpack.c.l.b16 %v104
  %v253 = vunpack.c.l.b16 %v105
  %v254 = vunpack.c.l.b16 %v106
  %v255 = vunpack.c.l.b16 %v107
  %v256 = vunpack.c.l.b16 %v108
  %v257 = vpack.c.b16 %v194, %v193
  %v258 = vpack.c.b16 %v196, %v195
  %v259 = vpack.c.b16 %v198, %v197
  %v260 = vpack.c.b16 %v200, %v199
  %v261 = vpack.c.b16 %v202, %v201
  %v262 = vpack.c.b16 %v204, %v203
  %v263 = vpack.c.b16 %v206, %v205
  %v264 = vpack.c.b16 %v208, %v207
  %v265 = vpack.c.b16 %v210, %v209
  %v266 = vpack.c.b16 %v212, %v211
  %v267 = vpack.c.b16 %v214, %v213
  %v268 = vpack.c.b16 %v216, %v215
  %v269 = vpack.c.b16 %v218, %v217
  %v270 = vpack.c.b16 %v220, %v219
  %v271 = vpack.c.b16 %v222, %v221
  %v272 = vpack.c.b16 %v224, %v223
  %v273 = vpack.c.b16 %v226, %v225
  %v274 = vpack.c.b16 %v228, %v227
  %v275 = vpack.c.b16 %v230, %v229
  %v276 = vpack.c.b16 %v232, %v231
  %v277 = vpack.c.b16 %v234, %v233
  %v278 = vpack.c.b16 %v236, %v235
  %v279 = vpack.c.b16 %v238, %v237
  %v280 = vpack.c.b16 %v240, %v239
  %v281 = vpack.c.b16 %v242, %v241
  %v282 = vpack.c.b16 %v244, %v243
  %v283 = vpack.c.b16 %v246, %v245
  %v284 = vpack.c.b16 %v248, %v247
  %v285 = vpack.c.b16 %v250, %v249
  %v286 = vpack.c.b16 %v252, %v251
  %v287 = vpack.c.b16 %v254, %v253
  %v288 = vpack.c.b16 %v256, %v255
  %v337 = vunpack.c.l.b16 %v109
  %v338 = vunpack.c.l.b16 %v110
  %v339 = vunpack.c.l.b16 %v111
  %v340 = vunpack.c.l.b16 %v112
  %v341 = vunpack.c.l.b16 %v113
  %v342 = vunpack.c.l.b16 %v114
  %v343 = vunpack.c.l.b16 %v115
  %v344 = vunpack.c.l.b16 %v116
  %v345 = vunpack.c.l.b16 %v117
  %v346 = vunpack.c.l.b16 %v118
  %v347 = vunpack.c.l.b16 %v119
  %v348 = vunpack.c.l.b16 %v120
  %v349 = vunpack.c.l.b16 %v121
  %v350 = vunpack.c.l.b16 %v122
  %v351 = vunpack.c.l.b16 %v123
  %v352 = vunpack.c.l.b16 %v124
  %v353 = vpack.c.b16 %v338, %v337
  %v354 = vpack.c.b16 %v340, %v339
  %v355 = vpack.c.b16 %v342, %v341
  %v356 = vpack.c.b16 %v344, %v343
  %v357 = vpack.c.b16 %v346, %v345
  %v358 = vpack.c.b16 %v348, %v347
  %v359 = vpack.c.b16 %v350, %v349
  %v360 = vpack.c.b16 %v352, %v351
  %369 = vmatpush.bf16.msra.mxu0 %v360
  %370 = vmatpush.bf16.msra.mxu0 %v359
  %371 = vmatpush.bf16.msra.mxu0 %v358
  %372 = vmatpush.bf16.msra.mxu0 %v357
  %373 = vmatpush.bf16.msra.mxu0 %v356
  %374 = vmatpush.bf16.msra.mxu0 %v355
  %375 = vmatpush.bf16.msra.mxu0 %v354
  %376 = vmatpush.bf16.msra.mxu0 %v353
  %377 = vmatmul.bf16.gmra.mxu0 %v257
  %v378 = vpop.f32.mrf.mxu0
  %v379 = vadd.f32 %v127, %v378
  %v380 = vpop.f32.mrf.mxu0
  %v381 = vadd.f32 %v127, %v380
  %382 = vmatmul.bf16.gmra.mxu0 %v258
  %v383 = vpop.f32.mrf.mxu0
  %v384 = vadd.f32 %v127, %v383
  %v385 = vpop.f32.mrf.mxu0
  %v386 = vadd.f32 %v127, %v385
  %387 = vmatmul.bf16.gmra.mxu0 %v259
  %v388 = vpop.f32.mrf.mxu0
  %v389 = vadd.f32 %v127, %v388
  %v390 = vpop.f32.mrf.mxu0
  %v391 = vadd.f32 %v127, %v390
  %392 = vmatmul.bf16.gmra.mxu0 %v260
  %v393 = vpop.f32.mrf.mxu0
  %v394 = vadd.f32 %v127, %v393
  %v395 = vpop.f32.mrf.mxu0
  %v396 = vadd.f32 %v127, %v395
  %397 = vmatmul.bf16.gmra.mxu0 %v261
  %v398 = vpop.f32.mrf.mxu0
  %v399 = vadd.f32 %v127, %v398
  %v400 = vpop.f32.mrf.mxu0
  %v401 = vadd.f32 %v127, %v400
  %402 = vmatmul.bf16.gmra.mxu0 %v262
  %v403 = vpop.f32.mrf.mxu0
  %v404 = vadd.f32 %v127, %v403
  %v405 = vpop.f32.mrf.mxu0
  %v406 = vadd.f32 %v127, %v405
  %407 = vmatmul.bf16.gmra.mxu0 %v263
  %v408 = vpop.f32.mrf.mxu0
  %v409 = vadd.f32 %v127, %v408
  %v410 = vpop.f32.mrf.mxu0
  %v411 = vadd.f32 %v127, %v410
  %412 = vmatmul.bf16.gmra.mxu0 %v264
  %v413 = vpop.f32.mrf.mxu0
  %v414 = vadd.f32 %v127, %v413
  %v415 = vpop.f32.mrf.mxu0
  %v416 = vadd.f32 %v127, %v415
  %417 = vmatmul.bf16.gmra.mxu0 %v265
  %v418 = vpop.f32.mrf.mxu0
  %v419 = vadd.f32 %v127, %v418
  %v420 = vpop.f32.mrf.mxu0
  %v421 = vadd.f32 %v127, %v420
  %422 = vmatmul.bf16.gmra.mxu0 %v266
  %v423 = vpop.f32.mrf.mxu0
  %v424 = vadd.f32 %v127, %v423
  %v425 = vpop.f32.mrf.mxu0
  %v426 = vadd.f32 %v127, %v425
  %427 = vmatmul.bf16.gmra.mxu0 %v267
  %v428 = vpop.f32.mrf.mxu0
  %v429 = vadd.f32 %v127, %v428
  %v430 = vpop.f32.mrf.mxu0
  %v431 = vadd.f32 %v127, %v430
  %432 = vmatmul.bf16.gmra.mxu0 %v268
  %v433 = vpop.f32.mrf.mxu0
  %v434 = vadd.f32 %v127, %v433
  %v435 = vpop.f32.mrf.mxu0
  %v436 = vadd.f32 %v127, %v435
  %437 = vmatmul.bf16.gmra.mxu0 %v269
  %v438 = vpop.f32.mrf.mxu0
  %v439 = vadd.f32 %v127, %v438
  %v440 = vpop.f32.mrf.mxu0
  %v441 = vadd.f32 %v127, %v440
  %442 = vmatmul.bf16.gmra.mxu0 %v270
  %v443 = vpop.f32.mrf.mxu0
  %v444 = vadd.f32 %v127, %v443
  %v445 = vpop.f32.mrf.mxu0
  %v446 = vadd.f32 %v127, %v445
  %447 = vmatmul.bf16.gmra.mxu0 %v271
  %v448 = vpop.f32.mrf.mxu0
  %v449 = vadd.f32 %v127, %v448
  %v450 = vpop.f32.mrf.mxu0
  %v451 = vadd.f32 %v127, %v450
  %452 = vmatmul.bf16.gmra.mxu0 %v272
  %v453 = vpop.f32.mrf.mxu0
  %v454 = vadd.f32 %v127, %v453
  %v455 = vpop.f32.mrf.mxu0
  %v456 = vadd.f32 %v127, %v455
  %457 = vmatmul.bf16.gmra.mxu0 %v273
  %v458 = vpop.f32.mrf.mxu0
  %v459 = vadd.f32 %v127, %v458
  %v460 = vpop.f32.mrf.mxu0
  %v461 = vadd.f32 %v127, %v460
  %462 = vmatmul.bf16.gmra.mxu0 %v274
  %v463 = vpop.f32.mrf.mxu0
  %v464 = vadd.f32 %v127, %v463
  %v465 = vpop.f32.mrf.mxu0
  %v466 = vadd.f32 %v127, %v465
  %467 = vmatmul.bf16.gmra.mxu0 %v275
  %v468 = vpop.f32.mrf.mxu0
  %v469 = vadd.f32 %v127, %v468
  %v470 = vpop.f32.mrf.mxu0
  %v471 = vadd.f32 %v127, %v470
  %472 = vmatmul.bf16.gmra.mxu0 %v276
  %v473 = vpop.f32.mrf.mxu0
  %v474 = vadd.f32 %v127, %v473
  %v475 = vpop.f32.mrf.mxu0
  %v476 = vadd.f32 %v127, %v475
  %477 = vmatmul.bf16.gmra.mxu0 %v277
  %v478 = vpop.f32.mrf.mxu0
  %v479 = vadd.f32 %v127, %v478
  %v480 = vpop.f32.mrf.mxu0
  %v481 = vadd.f32 %v127, %v480
  %482 = vmatmul.bf16.gmra.mxu0 %v278
  %v483 = vpop.f32.mrf.mxu0
  %v484 = vadd.f32 %v127, %v483
  %v485 = vpop.f32.mrf.mxu0
  %v486 = vadd.f32 %v127, %v485
  %487 = vmatmul.bf16.gmra.mxu0 %v279
  %v488 = vpop.f32.mrf.mxu0
  %v489 = vadd.f32 %v127, %v488
  %v490 = vpop.f32.mrf.mxu0
  %v491 = vadd.f32 %v127, %v490
  %492 = vmatmul.bf16.gmra.mxu0 %v280
  %v493 = vpop.f32.mrf.mxu0
  %v494 = vadd.f32 %v127, %v493
  %v495 = vpop.f32.mrf.mxu0
  %v496 = vadd.f32 %v127, %v495
  %497 = vmatmul.bf16.gmra.mxu0 %v281
  %v498 = vpop.f32.mrf.mxu0
  %v499 = vadd.f32 %v127, %v498
  %v500 = vpop.f32.mrf.mxu0
  %v501 = vadd.f32 %v127, %v500
  %502 = vmatmul.bf16.gmra.mxu0 %v282
  %v503 = vpop.f32.mrf.mxu0
  %v504 = vadd.f32 %v127, %v503
  %v505 = vpop.f32.mrf.mxu0
  %v506 = vadd.f32 %v127, %v505
  %507 = vmatmul.bf16.gmra.mxu0 %v283
  %v508 = vpop.f32.mrf.mxu0
  %v509 = vadd.f32 %v127, %v508
  %v510 = vpop.f32.mrf.mxu0
  %v511 = vadd.f32 %v127, %v510
  %512 = vmatmul.bf16.gmra.mxu0 %v284
  %v513 = vpop.f32.mrf.mxu0
  %v514 = vadd.f32 %v127, %v513
  %v515 = vpop.f32.mrf.mxu0
  %v516 = vadd.f32 %v127, %v515
  %517 = vmatmul.bf16.gmra.mxu0 %v285
  %v518 = vpop.f32.mrf.mxu0
  %v519 = vadd.f32 %v127, %v518
  %v520 = vpop.f32.mrf.mxu0
  %v521 = vadd.f32 %v127, %v520
  %522 = vmatmul.bf16.gmra.mxu0 %v286
  %v523 = vpop.f32.mrf.mxu0
  %v524 = vadd.f32 %v127, %v523
  %v525 = vpop.f32.mrf.mxu0
  %v526 = vadd.f32 %v127, %v525
  %527 = vmatmul.bf16.gmra.mxu0 %v287
  %v528 = vpop.f32.mrf.mxu0
  %v529 = vadd.f32 %v127, %v528
  %v530 = vpop.f32.mrf.mxu0
  %v531 = vadd.f32 %v127, %v530
  %532 = vmatmul.bf16.gmra.mxu0 %v288
  %v533 = vpop.f32.mrf.mxu0
  %v534 = vadd.f32 %v127, %v533
  %v535 = vpop.f32.mrf.mxu0
  %v536 = vadd.f32 %v127, %v535
  %537 = vdwg.mxu0
  %v538 = vmax.f32 %v379, 0.0
  %v539 = vmax.f32 %v381, 0.0
  %v540 = vmax.f32 %v384, 0.0
  %v541 = vmax.f32 %v386, 0.0
  %v542 = vmax.f32 %v389, 0.0
  %v543 = vmax.f32 %v391, 0.0
  %v544 = vmax.f32 %v394, 0.0
  %v545 = vmax.f32 %v396, 0.0
  %v546 = vmax.f32 %v399, 0.0
  %v547 = vmax.f32 %v401, 0.0
  %v548 = vmax.f32 %v404, 0.0
  %v549 = vmax.f32 %v406, 0.0
  %v550 = vmax.f32 %v409, 0.0
  %v551 = vmax.f32 %v411, 0.0
  %v552 = vmax.f32 %v414, 0.0
  %v553 = vmax.f32 %v416, 0.0
  %v554 = vmax.f32 %v419, 0.0
  %v555 = vmax.f32 %v421, 0.0
  %v556 = vmax.f32 %v424, 0.0
  %v557 = vmax.f32 %v426, 0.0
  %v558 = vmax.f32 %v429, 0.0
  %v559 = vmax.f32 %v431, 0.0
  %v560 = vmax.f32 %v434, 0.0
  %v561 = vmax.f32 %v436, 0.0
  %v562 = vmax.f32 %v439, 0.0
  %v563 = vmax.f32 %v441, 0.0
  %v564 = vmax.f32 %v444, 0.0
  %v565 = vmax.f32 %v446, 0.0
  %v566 = vmax.f32 %v449, 0.0
  %v567 = vmax.f32 %v451, 0.0
  %v568 = vmax.f32 %v454, 0.0
  %v569 = vmax.f32 %v456, 0.0
  %v570 = vmax.f32 %v459, 0.0
  %v571 = vmax.f32 %v461, 0.0
  %v572 = vmax.f32 %v464, 0.0
  %v573 = vmax.f32 %v466, 0.0
  %v574 = vmax.f32 %v469, 0.0
  %v575 = vmax.f32 %v471, 0.0
  %v576 = vmax.f32 %v474, 0.0
  %v577 = vmax.f32 %v476, 0.0
  %v578 = vmax.f32 %v479, 0.0
  %v579 = vmax.f32 %v481, 0.0
  %v580 = vmax.f32 %v484, 0.0
  %v581 = vmax.f32 %v486, 0.0
  %v582 = vmax.f32 %v489, 0.0
  %v583 = vmax.f32 %v491, 0.0
  %v584 = vmax.f32 %v494, 0.0
  %v585 = vmax.f32 %v496, 0.0
  %v586 = vmax.f32 %v499, 0.0
  %v587 = vmax.f32 %v501, 0.0
  %v588 = vmax.f32 %v504, 0.0
  %v589 = vmax.f32 %v506, 0.0
  %v590 = vmax.f32 %v509, 0.0
  %v591 = vmax.f32 %v511, 0.0
  %v592 = vmax.f32 %v514, 0.0
  %v593 = vmax.f32 %v516, 0.0
  %v594 = vmax.f32 %v519, 0.0
  %v595 = vmax.f32 %v521, 0.0
  %v596 = vmax.f32 %v524, 0.0
  %v597 = vmax.f32 %v526, 0.0
  %v598 = vmax.f32 %v529, 0.0
  %v599 = vmax.f32 %v531, 0.0
  %v600 = vmax.f32 %v534, 0.0
  %v601 = vmax.f32 %v536, 0.0
  %v602 = vadd.f32 %v538, %v539
  %v603 = vadd.f32 %v602, %v540
  %v604 = vadd.f32 %v603, %v541
  %v605 = vadd.f32 %v604, %v542
  %v606 = vadd.f32 %v605, %v543
  %v607 = vadd.f32 %v606, %v544
  %v608 = vadd.f32 %v607, %v545
  %v609 = vadd.f32 %v608, %v546
  %v610 = vadd.f32 %v609, %v547
  %v611 = vadd.f32 %v610, %v548
  %v612 = vadd.f32 %v611, %v549
  %v613 = vadd.f32 %v612, %v550
  %v614 = vadd.f32 %v613, %v551
  %v615 = vadd.f32 %v614, %v552
  %v616 = vadd.f32 %v615, %v553
  %v617 = vadd.f32 %v616, %v554
  %v618 = vadd.f32 %v617, %v555
  %v619 = vadd.f32 %v618, %v556
  %v620 = vadd.f32 %v619, %v557
  %v621 = vadd.f32 %v620, %v558
  %v622 = vadd.f32 %v621, %v559
  %v623 = vadd.f32 %v622, %v560
  %v624 = vadd.f32 %v623, %v561
  %v625 = vadd.f32 %v624, %v562
  %v626 = vadd.f32 %v625, %v563
  %v627 = vadd.f32 %v626, %v564
  %v628 = vadd.f32 %v627, %v565
  %v629 = vadd.f32 %v628, %v566
  %v630 = vadd.f32 %v629, %v567
  %v631 = vadd.f32 %v630, %v568
  %v632 = vadd.f32 %v631, %v569
  %v633 = vrot.slane %v632, 4
  %v634 = vadd.f32 %v632, %v633
  %v635 = vrot.slane %v634, 2
  %v636 = vadd.f32 %v634, %v635
  %v637 = vrot.slane %v636, 1
  %v638 = vadd.f32 %v636, %v637
  %v639 = vadd.f32 %v570, %v571
  %v640 = vadd.f32 %v639, %v572
  %v641 = vadd.f32 %v640, %v573
  %v642 = vadd.f32 %v641, %v574
  %v643 = vadd.f32 %v642, %v575
  %v644 = vadd.f32 %v643, %v576
  %v645 = vadd.f32 %v644, %v577
  %v646 = vadd.f32 %v645, %v578
  %v647 = vadd.f32 %v646, %v579
  %v648 = vadd.f32 %v647, %v580
  %v649 = vadd.f32 %v648, %v581
  %v650 = vadd.f32 %v649, %v582
  %v651 = vadd.f32 %v650, %v583
  %v652 = vadd.f32 %v651, %v584
  %v653 = vadd.f32 %v652, %v585
  %v654 = vadd.f32 %v653, %v586
  %v655 = vadd.f32 %v654, %v587
  %v656 = vadd.f32 %v655, %v588
  %v657 = vadd.f32 %v656, %v589
  %v658 = vadd.f32 %v657, %v590
  %v659 = vadd.f32 %v658, %v591
  %v660 = vadd.f32 %v659, %v592
  %v661 = vadd.f32 %v660, %v593
  %v662 = vadd.f32 %v661, %v594
  %v663 = vadd.f32 %v662, %v595
  %v664 = vadd.f32 %v663, %v596
  %v665 = vadd.f32 %v664, %v597
  %v666 = vadd.f32 %v665, %v598
  %v667 = vadd.f32 %v666, %v599
  %v668 = vadd.f32 %v667, %v600
  %v669 = vadd.f32 %v668, %v601
  %v670 = vrot.slane %v669, 4
  %v671 = vadd.f32 %v669, %v670
  %v672 = vrot.slane %v671, 2
  %v673 = vadd.f32 %v671, %v672
  %v674 = vrot.slane %v673, 1
  %v675 = vadd.f32 %v673, %v674
  %v676 = vmul.f32 %v638, 0.00390625
  %v677 = vmul.f32 %v675, 0.00390625
  %vm680 = vcmask 1041409
  %v681 = vsel %vm680, %v677, %v676
  %vm683 = vcmask 1041408
  %v684 = vsel %vm683, %v681, 0.0
  %v685 = vpack.c.bf16 %v684, %v684
  %v686 = vld [vmem:[%s3] sm:$0xf]
  %v687 = vld [vmem:[%s3 + $0x4] sm:$0xf]
  %v688 = vld [vmem:[%s3 + $0x8] sm:$0xf]
  %v689 = vld [vmem:[%s3 + $0xc] sm:$0xf]
  %v690 = vld [vmem:[%s3 + $0x10] sm:$0xf]
  %v691 = vld [vmem:[%s3 + $0x14] sm:$0xf]
  %v692 = vld [vmem:[%s3 + $0x18] sm:$0xf]
  %v693 = vld [vmem:[%s3 + $0x1c] sm:$0xf]
  %v694 = vld [vmem:[%s3 + $0x20] sm:$0xf]
  %v695 = vld [vmem:[%s3 + $0x24] sm:$0xf]
  %v696 = vld [vmem:[%s3 + $0x28] sm:$0xf]
  %v697 = vld [vmem:[%s3 + $0x2c] sm:$0xf]
  %v698 = vld [vmem:[%s3 + $0x30] sm:$0xf]
  %v699 = vld [vmem:[%s3 + $0x34] sm:$0xf]
  %v700 = vld [vmem:[%s3 + $0x38] sm:$0xf]
  %v701 = vld [vmem:[%s3 + $0x3c] sm:$0xf]
  %v702 = vld [vmem:[%s4] sm:$0x1]
  %v704 = vperm.slane %v702, 0
  %v722 = vunpack.c.l.b16 %v686
  %v723 = vunpack.c.l.b16 %v687
  %v724 = vunpack.c.l.b16 %v688
  %v725 = vunpack.c.l.b16 %v689
  %v726 = vunpack.c.l.b16 %v690
  %v727 = vunpack.c.l.b16 %v691
  %v728 = vunpack.c.l.b16 %v692
  %v729 = vunpack.c.l.b16 %v693
  %v730 = vunpack.c.l.b16 %v694
  %v731 = vunpack.c.l.b16 %v695
  %v732 = vunpack.c.l.b16 %v696
  %v733 = vunpack.c.l.b16 %v697
  %v734 = vunpack.c.l.b16 %v698
  %v735 = vunpack.c.l.b16 %v699
  %v736 = vunpack.c.l.b16 %v700
  %v737 = vunpack.c.l.b16 %v701
  %v738 = vpack.c.b16 %v723, %v722
  %v739 = vpack.c.b16 %v725, %v724
  %v740 = vpack.c.b16 %v727, %v726
  %v741 = vpack.c.b16 %v729, %v728
  %v742 = vpack.c.b16 %v731, %v730
  %v743 = vpack.c.b16 %v733, %v732
  %v744 = vpack.c.b16 %v735, %v734
  %v745 = vpack.c.b16 %v737, %v736
  %754 = vmatpush.bf16.msra.mxu0 %v745
  %755 = vmatpush.bf16.msra.mxu0 %v744
  %756 = vmatpush.bf16.msra.mxu0 %v743
  %757 = vmatpush.bf16.msra.mxu0 %v742
  %758 = vmatpush.bf16.msra.mxu0 %v741
  %759 = vmatpush.bf16.msra.mxu0 %v740
  %760 = vmatpush.bf16.msra.mxu0 %v739
  %761 = vmatpush.bf16.msra.mxu0 %v738
  %762 = vmatmul.bf16.gmra.mxu0 %v685
  %v763 = vpop.f32.mrf.mxu0
  %v764 = vadd.f32 %v704, %v763
  %v765 = vpop.f32.mrf.mxu0
  %766 = vdwg.mxu0
  %v767 = vpack.c.bf16 %v764, %v764
  %v768 = vld [vmem:[%s5] sm:$0xf]
  %v769 = vld [vmem:[%s5 + $0x4] sm:$0xf]
  %v770 = vld [vmem:[%s5 + $0x8] sm:$0xf]
  %v771 = vld [vmem:[%s5 + $0xc] sm:$0xf]
  %v772 = vld [vmem:[%s5 + $0x10] sm:$0xf]
  %v773 = vld [vmem:[%s5 + $0x14] sm:$0xf]
  %v774 = vld [vmem:[%s5 + $0x18] sm:$0xf]
  %v775 = vld [vmem:[%s5 + $0x1c] sm:$0xf]
  %v784 = vunpack.c.l.b16 %v768
  %v785 = vunpack.c.l.b16 %v769
  %v786 = vunpack.c.l.b16 %v770
  %v787 = vunpack.c.l.b16 %v771
  %v788 = vunpack.c.l.b16 %v772
  %v789 = vunpack.c.l.b16 %v773
  %v790 = vunpack.c.l.b16 %v774
  %v791 = vunpack.c.l.b16 %v775
  %v792 = vpack.c.b16 %v784, %v784
  %v793 = vpack.c.b16 %v786, %v785
  %v794 = vpack.c.b16 %v788, %v787
  %v795 = vpack.c.b16 %v790, %v789
  %v796 = vpack.c.b16 %v791, %v791
  %vm801 = vcmask 1043456
  %v804 = vsel %vm801, %v767, %v792
  %v806 = vld [vmem:[%s6] sm:$0xff]
  %v807 = vld [vmem:[%s6 + $0x8] sm:$0xff]
  %v808 = vld [vmem:[%s6 + $0x10] sm:$0xff]
  %v809 = vld [vmem:[%s6 + $0x18] sm:$0xff]
  %v810 = vld [vmem:[%s6 + $0x20] sm:$0xff]
  %v811 = vld [vmem:[%s6 + $0x28] sm:$0xff]
  %v812 = vld [vmem:[%s6 + $0x30] sm:$0xff]
  %v813 = vld [vmem:[%s6 + $0x38] sm:$0xff]
  %v814 = vld [vmem:[%s6 + $0x40] sm:$0xff]
  %v815 = vld [vmem:[%s6 + $0x48] sm:$0xff]
  %v816 = vld [vmem:[%s6 + $0x50] sm:$0xff]
  %v817 = vld [vmem:[%s6 + $0x58] sm:$0xff]
  %v818 = vld [vmem:[%s6 + $0x60] sm:$0xff]
  %v819 = vld [vmem:[%s6 + $0x68] sm:$0xff]
  %v820 = vld [vmem:[%s6 + $0x70] sm:$0xff]
  %v821 = vld [vmem:[%s6 + $0x78] sm:$0xff]
  %v822 = vld [vmem:[%s6 + $0x80] sm:$0xff]
  %v823 = vld [vmem:[%s6 + $0x88] sm:$0xff]
  %v824 = vld [vmem:[%s6 + $0x90] sm:$0xff]
  %v825 = vld [vmem:[%s6 + $0x98] sm:$0xff]
  %v826 = vld [vmem:[%s6 + $0xa0] sm:$0xff]
  %v827 = vld [vmem:[%s6 + $0xa8] sm:$0xff]
  %v828 = vld [vmem:[%s6 + $0xb0] sm:$0xff]
  %v829 = vld [vmem:[%s6 + $0xb8] sm:$0xff]
  %v830 = vld [vmem:[%s6 + $0xc0] sm:$0xff]
  %v831 = vld [vmem:[%s6 + $0xc8] sm:$0xff]
  %v832 = vld [vmem:[%s6 + $0xd0] sm:$0xff]
  %v833 = vld [vmem:[%s6 + $0xd8] sm:$0xff]
  %v834 = vld [vmem:[%s6 + $0xe0] sm:$0xff]
  %v835 = vld [vmem:[%s6 + $0xe8] sm:$0xff]
  %v836 = vld [vmem:[%s6 + $0xf0] sm:$0xff]
  %v837 = vld [vmem:[%s6 + $0xf8] sm:$0xff]
  %v870 = vunpack.c.l.b16 %v806
  %v871 = vunpack.c.h.b16 %v806
  %v872 = vunpack.c.l.b16 %v807
  %v873 = vunpack.c.h.b16 %v807
  %v874 = vunpack.c.l.b16 %v808
  %v875 = vunpack.c.h.b16 %v808
  %v876 = vunpack.c.l.b16 %v809
  %v877 = vunpack.c.h.b16 %v809
  %v878 = vunpack.c.l.b16 %v810
  %v879 = vunpack.c.h.b16 %v810
  %v880 = vunpack.c.l.b16 %v811
  %v881 = vunpack.c.h.b16 %v811
  %v882 = vunpack.c.l.b16 %v812
  %v883 = vunpack.c.h.b16 %v812
  %v884 = vunpack.c.l.b16 %v813
  %v885 = vunpack.c.h.b16 %v813
  %v886 = vunpack.c.l.b16 %v814
  %v887 = vunpack.c.h.b16 %v814
  %v888 = vunpack.c.l.b16 %v815
  %v889 = vunpack.c.h.b16 %v815
  %v890 = vunpack.c.l.b16 %v816
  %v891 = vunpack.c.h.b16 %v816
  %v892 = vunpack.c.l.b16 %v817
  %v893 = vunpack.c.h.b16 %v817
  %v894 = vunpack.c.l.b16 %v818
  %v895 = vunpack.c.h.b16 %v818
  %v896 = vunpack.c.l.b16 %v819
  %v897 = vunpack.c.h.b16 %v819
  %v898 = vunpack.c.l.b16 %v820
  %v899 = vunpack.c.h.b16 %v820
  %v900 = vunpack.c.l.b16 %v821
  %v901 = vunpack.c.h.b16 %v821
  %v902 = vunpack.c.l.b16 %v822
  %v903 = vunpack.c.h.b16 %v822
  %v904 = vunpack.c.l.b16 %v823
  %v905 = vunpack.c.h.b16 %v823
  %v906 = vunpack.c.l.b16 %v824
  %v907 = vunpack.c.h.b16 %v824
  %v908 = vunpack.c.l.b16 %v825
  %v909 = vunpack.c.h.b16 %v825
  %v910 = vunpack.c.l.b16 %v826
  %v911 = vunpack.c.h.b16 %v826
  %v912 = vunpack.c.l.b16 %v827
  %v913 = vunpack.c.h.b16 %v827
  %v914 = vunpack.c.l.b16 %v828
  %v915 = vunpack.c.h.b16 %v828
  %v916 = vunpack.c.l.b16 %v829
  %v917 = vunpack.c.h.b16 %v829
  %v918 = vunpack.c.l.b16 %v830
  %v919 = vunpack.c.h.b16 %v830
  %v920 = vunpack.c.l.b16 %v831
  %v921 = vunpack.c.h.b16 %v831
  %v922 = vunpack.c.l.b16 %v832
  %v923 = vunpack.c.h.b16 %v832
  %v924 = vunpack.c.l.b16 %v833
  %v925 = vunpack.c.h.b16 %v833
  %v926 = vunpack.c.l.b16 %v834
  %v927 = vunpack.c.h.b16 %v834
  %v928 = vunpack.c.l.b16 %v835
  %v929 = vunpack.c.h.b16 %v835
  %v930 = vunpack.c.l.b16 %v836
  %v931 = vunpack.c.h.b16 %v836
  %v932 = vunpack.c.l.b16 %v837
  %v933 = vunpack.c.h.b16 %v837
  %v934 = vpack.c.b16 %v874, %v870
  %v935 = vpack.c.b16 %v875, %v871
  %v936 = vpack.c.b16 %v876, %v872
  %v937 = vpack.c.b16 %v877, %v873
  %v938 = vpack.c.b16 %v882, %v878
  %v939 = vpack.c.b16 %v883, %v879
  %v940 = vpack.c.b16 %v884, %v880
  %v941 = vpack.c.b16 %v885, %v881
  %v942 = vpack.c.b16 %v890, %v886
  %v943 = vpack.c.b16 %v891, %v887
  %v944 = vpack.c.b16 %v892, %v888
  %v945 = vpack.c.b16 %v893, %v889
  %v946 = vpack.c.b16 %v898, %v894
  %v947 = vpack.c.b16 %v899, %v895
  %v948 = vpack.c.b16 %v900, %v896
  %v949 = vpack.c.b16 %v901, %v897
  %v950 = vpack.c.b16 %v906, %v902
  %v951 = vpack.c.b16 %v907, %v903
  %v952 = vpack.c.b16 %v908, %v904
  %v953 = vpack.c.b16 %v909, %v905
  %v954 = vpack.c.b16 %v914, %v910
  %v955 = vpack.c.b16 %v915, %v911
  %v956 = vpack.c.b16 %v916, %v912
  %v957 = vpack.c.b16 %v917, %v913
  %v958 = vpack.c.b16 %v922, %v918
  %v959 = vpack.c.b16 %v923, %v919
  %v960 = vpack.c.b16 %v924, %v920
  %v961 = vpack.c.b16 %v925, %v921
  %v962 = vpack.c.b16 %v930, %v926
  %v963 = vpack.c.b16 %v931, %v927
  %v964 = vpack.c.b16 %v932, %v928
  %v965 = vpack.c.b16 %v933, %v929
  %998 = vmatpush.bf16.msra.mxu0 %v962
  %999 = vmatpush.bf16.msra.mxu0 %v958
  %1000 = vmatpush.bf16.msra.mxu0 %v954
  %1001 = vmatpush.bf16.msra.mxu0 %v950
  %1002 = vmatpush.bf16.msra.mxu0 %v946
  %1003 = vmatpush.bf16.msra.mxu0 %v942
  %1004 = vmatpush.bf16.msra.mxu0 %v938
  %1005 = vmatpush.bf16.msra.mxu0 %v934
  %1006 = vmatmul.bf16.gmra.mxu0 %v804
  %v1007 = vpop.f32.mrf.mxu0
  %v1008 = vadd.f32 0.0, %v1007
  %v1009 = vpop.f32.mrf.mxu0
  %v1010 = vadd.f32 0.0, %v1009
  %1011 = vmatmul.bf16.gmra.mxu0 %v793
  %v1012 = vpop.f32.mrf.mxu0
  %v1013 = vadd.f32 0.0, %v1012
  %v1014 = vpop.f32.mrf.mxu0
  %v1015 = vadd.f32 0.0, %v1014
  %1016 = vmatmul.bf16.gmra.mxu0 %v794
  %v1017 = vpop.f32.mrf.mxu0
  %v1018 = vadd.f32 0.0, %v1017
  %v1019 = vpop.f32.mrf.mxu0
  %v1020 = vadd.f32 0.0, %v1019
  %1021 = vmatmul.bf16.gmra.mxu0 %v795
  %v1022 = vpop.f32.mrf.mxu0
  %v1023 = vadd.f32 0.0, %v1022
  %v1024 = vpop.f32.mrf.mxu0
  %v1025 = vadd.f32 0.0, %v1024
  %1026 = vmatmul.bf16.gmra.mxu0 %v796
  %v1027 = vpop.f32.mrf.mxu0
  %v1028 = vadd.f32 0.0, %v1027
  %v1029 = vpop.f32.mrf.mxu0
  %1030 = vdwg.mxu0
  %1031 = vmatpush.bf16.msra.mxu0 %v963
  %1032 = vmatpush.bf16.msra.mxu0 %v959
  %1033 = vmatpush.bf16.msra.mxu0 %v955
  %1034 = vmatpush.bf16.msra.mxu0 %v951
  %1035 = vmatpush.bf16.msra.mxu0 %v947
  %1036 = vmatpush.bf16.msra.mxu0 %v943
  %1037 = vmatpush.bf16.msra.mxu0 %v939
  %1038 = vmatpush.bf16.msra.mxu0 %v935
  %1039 = vmatmul.bf16.gmra.mxu0 %v804
  %v1040 = vpop.f32.mrf.mxu0
  %v1041 = vadd.f32 0.0, %v1040
  %v1042 = vpop.f32.mrf.mxu0
  %v1043 = vadd.f32 0.0, %v1042
  %1044 = vmatmul.bf16.gmra.mxu0 %v793
  %v1045 = vpop.f32.mrf.mxu0
  %v1046 = vadd.f32 0.0, %v1045
  %v1047 = vpop.f32.mrf.mxu0
  %v1048 = vadd.f32 0.0, %v1047
  %1049 = vmatmul.bf16.gmra.mxu0 %v794
  %v1050 = vpop.f32.mrf.mxu0
  %v1051 = vadd.f32 0.0, %v1050
  %v1052 = vpop.f32.mrf.mxu0
  %v1053 = vadd.f32 0.0, %v1052
  %1054 = vmatmul.bf16.gmra.mxu0 %v795
  %v1055 = vpop.f32.mrf.mxu0
  %v1056 = vadd.f32 0.0, %v1055
  %v1057 = vpop.f32.mrf.mxu0
  %v1058 = vadd.f32 0.0, %v1057
  %1059 = vmatmul.bf16.gmra.mxu0 %v796
  %v1060 = vpop.f32.mrf.mxu0
  %v1061 = vadd.f32 0.0, %v1060
  %v1062 = vpop.f32.mrf.mxu0
  %1063 = vdwg.mxu0
  %1064 = vmatpush.bf16.msra.mxu0 %v964
  %1065 = vmatpush.bf16.msra.mxu0 %v960
  %1066 = vmatpush.bf16.msra.mxu0 %v956
  %1067 = vmatpush.bf16.msra.mxu0 %v952
  %1068 = vmatpush.bf16.msra.mxu0 %v948
  %1069 = vmatpush.bf16.msra.mxu0 %v944
  %1070 = vmatpush.bf16.msra.mxu0 %v940
  %1071 = vmatpush.bf16.msra.mxu0 %v936
  %1072 = vmatmul.bf16.gmra.mxu0 %v804
  %v1073 = vpop.f32.mrf.mxu0
  %v1074 = vadd.f32 0.0, %v1073
  %v1075 = vpop.f32.mrf.mxu0
  %v1076 = vadd.f32 0.0, %v1075
  %1077 = vmatmul.bf16.gmra.mxu0 %v793
  %v1078 = vpop.f32.mrf.mxu0
  %v1079 = vadd.f32 0.0, %v1078
  %v1080 = vpop.f32.mrf.mxu0
  %v1081 = vadd.f32 0.0, %v1080
  %1082 = vmatmul.bf16.gmra.mxu0 %v794
  %v1083 = vpop.f32.mrf.mxu0
  %v1084 = vadd.f32 0.0, %v1083
  %v1085 = vpop.f32.mrf.mxu0
  %v1086 = vadd.f32 0.0, %v1085
  %1087 = vmatmul.bf16.gmra.mxu0 %v795
  %v1088 = vpop.f32.mrf.mxu0
  %v1089 = vadd.f32 0.0, %v1088
  %v1090 = vpop.f32.mrf.mxu0
  %v1091 = vadd.f32 0.0, %v1090
  %1092 = vmatmul.bf16.gmra.mxu0 %v796
  %v1093 = vpop.f32.mrf.mxu0
  %v1094 = vadd.f32 0.0, %v1093
  %v1095 = vpop.f32.mrf.mxu0
  %1096 = vdwg.mxu0
  %1097 = vmatpush.bf16.msra.mxu0 %v965
  %1098 = vmatpush.bf16.msra.mxu0 %v961
  %1099 = vmatpush.bf16.msra.mxu0 %v957
  %1100 = vmatpush.bf16.msra.mxu0 %v953
  %1101 = vmatpush.bf16.msra.mxu0 %v949
  %1102 = vmatpush.bf16.msra.mxu0 %v945
  %1103 = vmatpush.bf16.msra.mxu0 %v941
  %1104 = vmatpush.bf16.msra.mxu0 %v937
  %1105 = vmatmul.bf16.gmra.mxu0 %v804
  %v1106 = vpop.f32.mrf.mxu0
  %v1107 = vadd.f32 0.0, %v1106
  %v1108 = vpop.f32.mrf.mxu0
  %v1109 = vadd.f32 0.0, %v1108
  %1110 = vmatmul.bf16.gmra.mxu0 %v793
  %v1111 = vpop.f32.mrf.mxu0
  %v1112 = vadd.f32 0.0, %v1111
  %v1113 = vpop.f32.mrf.mxu0
  %v1114 = vadd.f32 0.0, %v1113
  %1115 = vmatmul.bf16.gmra.mxu0 %v794
  %v1116 = vpop.f32.mrf.mxu0
  %v1117 = vadd.f32 0.0, %v1116
  %v1118 = vpop.f32.mrf.mxu0
  %v1119 = vadd.f32 0.0, %v1118
  %1120 = vmatmul.bf16.gmra.mxu0 %v795
  %v1121 = vpop.f32.mrf.mxu0
  %v1122 = vadd.f32 0.0, %v1121
  %v1123 = vpop.f32.mrf.mxu0
  %v1124 = vadd.f32 0.0, %v1123
  %1125 = vmatmul.bf16.gmra.mxu0 %v796
  %v1126 = vpop.f32.mrf.mxu0
  %v1127 = vadd.f32 0.0, %v1126
  %v1128 = vpop.f32.mrf.mxu0
  %1129 = vdwg.mxu0
  %v1130 = vld [vmem:[%s7] sm:$0xff]
  %v1131 = vld [vmem:[%s7 + $0x8] sm:$0xff]
  %v1132 = vld [vmem:[%s7 + $0x10] sm:$0xff]
  %v1133 = vld [vmem:[%s7 + $0x18] sm:$0xff]
  %v1134 = vld [vmem:[%s7 + $0x20] sm:$0xff]
  %v1135 = vld [vmem:[%s7 + $0x28] sm:$0xff]
  %v1136 = vld [vmem:[%s7 + $0x30] sm:$0xff]
  %v1137 = vld [vmem:[%s7 + $0x38] sm:$0xff]
  %v1138 = vld [vmem:[%s7 + $0x40] sm:$0xff]
  %v1139 = vld [vmem:[%s7 + $0x48] sm:$0xff]
  %v1140 = vld [vmem:[%s7 + $0x50] sm:$0xff]
  %v1141 = vld [vmem:[%s7 + $0x58] sm:$0xff]
  %v1142 = vld [vmem:[%s7 + $0x60] sm:$0xff]
  %v1143 = vld [vmem:[%s7 + $0x68] sm:$0xff]
  %v1144 = vld [vmem:[%s7 + $0x70] sm:$0xff]
  %v1145 = vld [vmem:[%s7 + $0x78] sm:$0xff]
  %v1146 = vld [vmem:[%s7 + $0x80] sm:$0xff]
  %v1147 = vld [vmem:[%s7 + $0x88] sm:$0xff]
  %v1148 = vld [vmem:[%s7 + $0x90] sm:$0xff]
  %v1149 = vld [vmem:[%s7 + $0x98] sm:$0xff]
  %v1150 = vld [vmem:[%s7 + $0xa0] sm:$0xff]
  %v1151 = vld [vmem:[%s7 + $0xa8] sm:$0xff]
  %v1152 = vld [vmem:[%s7 + $0xb0] sm:$0xff]
  %v1153 = vld [vmem:[%s7 + $0xb8] sm:$0xff]
  %v1154 = vld [vmem:[%s7 + $0xc0] sm:$0xff]
  %v1155 = vld [vmem:[%s7 + $0xc8] sm:$0xff]
  %v1156 = vld [vmem:[%s7 + $0xd0] sm:$0xff]
  %v1157 = vld [vmem:[%s7 + $0xd8] sm:$0xff]
  %v1158 = vld [vmem:[%s7 + $0xe0] sm:$0xff]
  %v1159 = vld [vmem:[%s7 + $0xe8] sm:$0xff]
  %v1160 = vld [vmem:[%s7 + $0xf0] sm:$0xff]
  %v1161 = vld [vmem:[%s7 + $0xf8] sm:$0xff]
  %v1162 = vld [vmem:[%s8] sm:$0xf]
  %v1163 = vld [vmem:[%s9] sm:$0xff]
  %v1164 = vld [vmem:[%s9 + $0x8] sm:$0xff]
  %v1165 = vld [vmem:[%s9 + $0x10] sm:$0xff]
  %v1166 = vld [vmem:[%s9 + $0x18] sm:$0xff]
  %v1167 = vld [vmem:[%s9 + $0x20] sm:$0xff]
  %v1168 = vld [vmem:[%s9 + $0x28] sm:$0xff]
  %v1169 = vld [vmem:[%s9 + $0x30] sm:$0xff]
  %v1170 = vld [vmem:[%s9 + $0x38] sm:$0xff]
  %v1171 = vld [vmem:[%s9 + $0x40] sm:$0xff]
  %v1172 = vld [vmem:[%s9 + $0x48] sm:$0xff]
  %v1173 = vld [vmem:[%s9 + $0x50] sm:$0xff]
  %v1174 = vld [vmem:[%s9 + $0x58] sm:$0xff]
  %v1175 = vld [vmem:[%s9 + $0x60] sm:$0xff]
  %v1176 = vld [vmem:[%s9 + $0x68] sm:$0xff]
  %v1177 = vld [vmem:[%s9 + $0x70] sm:$0xff]
  %v1178 = vld [vmem:[%s9 + $0x78] sm:$0xff]
  %v1179 = vld [vmem:[%s9 + $0x80] sm:$0xff]
  %v1180 = vld [vmem:[%s9 + $0x88] sm:$0xff]
  %v1181 = vld [vmem:[%s9 + $0x90] sm:$0xff]
  %v1182 = vld [vmem:[%s9 + $0x98] sm:$0xff]
  %v1183 = vld [vmem:[%s9 + $0xa0] sm:$0xff]
  %v1184 = vld [vmem:[%s9 + $0xa8] sm:$0xff]
  %v1185 = vld [vmem:[%s9 + $0xb0] sm:$0xff]
  %v1186 = vld [vmem:[%s9 + $0xb8] sm:$0xff]
  %v1187 = vld [vmem:[%s9 + $0xc0] sm:$0xff]
  %v1188 = vld [vmem:[%s9 + $0xc8] sm:$0xff]
  %v1189 = vld [vmem:[%s9 + $0xd0] sm:$0xff]
  %v1190 = vld [vmem:[%s9 + $0xd8] sm:$0xff]
  %v1191 = vld [vmem:[%s9 + $0xe0] sm:$0xff]
  %v1192 = vld [vmem:[%s9 + $0xe8] sm:$0xff]
  %v1193 = vld [vmem:[%s9 + $0xf0] sm:$0xff]
  %v1194 = vld [vmem:[%s9 + $0xf8] sm:$0xff]
  %v1195 = vld [vmem:[%s9 + $0x100] sm:$0xff]
  %v1196 = vld [vmem:[%s9 + $0x108] sm:$0xff]
  %v1197 = vld [vmem:[%s9 + $0x110] sm:$0xff]
  %v1198 = vld [vmem:[%s9 + $0x118] sm:$0xff]
  %v1199 = vld [vmem:[%s9 + $0x120] sm:$0xff]
  %v1200 = vld [vmem:[%s9 + $0x128] sm:$0xff]
  %v1201 = vld [vmem:[%s9 + $0x130] sm:$0xff]
  %v1202 = vld [vmem:[%s9 + $0x138] sm:$0xff]
  %v1203 = vld [vmem:[%s9 + $0x140] sm:$0xff]
  %v1204 = vld [vmem:[%s9 + $0x148] sm:$0xff]
  %v1205 = vld [vmem:[%s9 + $0x150] sm:$0xff]
  %v1206 = vld [vmem:[%s9 + $0x158] sm:$0xff]
  %v1207 = vld [vmem:[%s9 + $0x160] sm:$0xff]
  %v1208 = vld [vmem:[%s9 + $0x168] sm:$0xff]
  %v1209 = vld [vmem:[%s9 + $0x170] sm:$0xff]
  %v1210 = vld [vmem:[%s9 + $0x178] sm:$0xff]
  %v1211 = vld [vmem:[%s9 + $0x180] sm:$0xff]
  %v1212 = vld [vmem:[%s9 + $0x188] sm:$0xff]
  %v1213 = vld [vmem:[%s9 + $0x190] sm:$0xff]
  %v1214 = vld [vmem:[%s9 + $0x198] sm:$0xff]
  %v1215 = vld [vmem:[%s9 + $0x1a0] sm:$0xff]
  %v1216 = vld [vmem:[%s9 + $0x1a8] sm:$0xff]
  %v1217 = vld [vmem:[%s9 + $0x1b0] sm:$0xff]
  %v1218 = vld [vmem:[%s9 + $0x1b8] sm:$0xff]
  %v1219 = vld [vmem:[%s9 + $0x1c0] sm:$0xff]
  %v1220 = vld [vmem:[%s9 + $0x1c8] sm:$0xff]
  %v1221 = vld [vmem:[%s9 + $0x1d0] sm:$0xff]
  %v1222 = vld [vmem:[%s9 + $0x1d8] sm:$0xff]
  %v1223 = vld [vmem:[%s9 + $0x1e0] sm:$0xff]
  %v1224 = vld [vmem:[%s9 + $0x1e8] sm:$0xff]
  %v1225 = vld [vmem:[%s9 + $0x1f0] sm:$0xff]
  %v1226 = vld [vmem:[%s9 + $0x1f8] sm:$0xff]
  %v1227 = vld [vmem:[%s10] sm:$0xf]
  %v1228 = vld [vmem:[%s11] sm:$0xf]
  %v1229 = vld [vmem:[%s11 + $0x4] sm:$0xf]
  %v1230 = vld [vmem:[%s11 + $0x8] sm:$0xf]
  %v1231 = vld [vmem:[%s11 + $0xc] sm:$0xf]
  %v1232 = vld [vmem:[%s11 + $0x10] sm:$0xf]
  %v1233 = vld [vmem:[%s11 + $0x14] sm:$0xf]
  %v1234 = vld [vmem:[%s11 + $0x18] sm:$0xf]
  %v1235 = vld [vmem:[%s11 + $0x1c] sm:$0xf]
  %v1236 = vld [vmem:[%s11 + $0x20] sm:$0xf]
  %v1237 = vld [vmem:[%s11 + $0x24] sm:$0xf]
  %v1238 = vld [vmem:[%s11 + $0x28] sm:$0xf]
  %v1239 = vld [vmem:[%s11 + $0x2c] sm:$0xf]
  %v1240 = vld [vmem:[%s11 + $0x30] sm:$0xf]
  %v1241 = vld [vmem:[%s11 + $0x34] sm:$0xf]
  %v1242 = vld [vmem:[%s11 + $0x38] sm:$0xf]
  %v1243 = vld [vmem:[%s11 + $0x3c] sm:$0xf]
  %v1244 = vld [vmem:[%s12] sm:$0x1]
  %v1277 = vunpack.c.l.b16 %v1130
  %v1278 = vunpack.c.h.b16 %v1130
  %v1279 = vunpack.c.l.b16 %v1131
  %v1280 = vunpack.c.h.b16 %v1131
  %v1281 = vunpack.c.l.b16 %v1132
  %v1282 = vunpack.c.h.b16 %v1132
  %v1283 = vunpack.c.l.b16 %v1133
  %v1284 = vunpack.c.h.b16 %v1133
  %v1285 = vunpack.c.l.b16 %v1134
  %v1286 = vunpack.c.h.b16 %v1134
  %v1287 = vunpack.c.l.b16 %v1135
  %v1288 = vunpack.c.h.b16 %v1135
  %v1289 = vunpack.c.l.b16 %v1136
  %v1290 = vunpack.c.h.b16 %v1136
  %v1291 = vunpack.c.l.b16 %v1137
  %v1292 = vunpack.c.h.b16 %v1137
  %v1293 = vunpack.c.l.b16 %v1138
  %v1294 = vunpack.c.h.b16 %v1138
  %v1295 = vunpack.c.l.b16 %v1139
  %v1296 = vunpack.c.h.b16 %v1139
  %v1297 = vunpack.c.l.b16 %v1140
  %v1298 = vunpack.c.h.b16 %v1140
  %v1299 = vunpack.c.l.b16 %v1141
  %v1300 = vunpack.c.h.b16 %v1141
  %v1301 = vunpack.c.l.b16 %v1142
  %v1302 = vunpack.c.h.b16 %v1142
  %v1303 = vunpack.c.l.b16 %v1143
  %v1304 = vunpack.c.h.b16 %v1143
  %v1305 = vunpack.c.l.b16 %v1144
  %v1306 = vunpack.c.h.b16 %v1144
  %v1307 = vunpack.c.l.b16 %v1145
  %v1308 = vunpack.c.h.b16 %v1145
  %v1309 = vunpack.c.l.b16 %v1146
  %v1310 = vunpack.c.h.b16 %v1146
  %v1311 = vunpack.c.l.b16 %v1147
  %v1312 = vunpack.c.h.b16 %v1147
  %v1313 = vunpack.c.l.b16 %v1148
  %v1314 = vunpack.c.h.b16 %v1148
  %v1315 = vunpack.c.l.b16 %v1149
  %v1316 = vunpack.c.h.b16 %v1149
  %v1317 = vunpack.c.l.b16 %v1150
  %v1318 = vunpack.c.h.b16 %v1150
  %v1319 = vunpack.c.l.b16 %v1151
  %v1320 = vunpack.c.h.b16 %v1151
  %v1321 = vunpack.c.l.b16 %v1152
  %v1322 = vunpack.c.h.b16 %v1152
  %v1323 = vunpack.c.l.b16 %v1153
  %v1324 = vunpack.c.h.b16 %v1153
  %v1325 = vunpack.c.l.b16 %v1154
  %v1326 = vunpack.c.h.b16 %v1154
  %v1327 = vunpack.c.l.b16 %v1155
  %v1328 = vunpack.c.h.b16 %v1155
  %v1329 = vunpack.c.l.b16 %v1156
  %v1330 = vunpack.c.h.b16 %v1156
  %v1331 = vunpack.c.l.b16 %v1157
  %v1332 = vunpack.c.h.b16 %v1157
  %v1333 = vunpack.c.l.b16 %v1158
  %v1334 = vunpack.c.h.b16 %v1158
  %v1335 = vunpack.c.l.b16 %v1159
  %v1336 = vunpack.c.h.b16 %v1159
  %v1337 = vunpack.c.l.b16 %v1160
  %v1338 = vunpack.c.h.b16 %v1160
  %v1339 = vunpack.c.l.b16 %v1161
  %v1340 = vunpack.c.h.b16 %v1161
  %v1341 = vpack.c.b16 %v1281, %v1277
  %v1342 = vpack.c.b16 %v1282, %v1278
  %v1343 = vpack.c.b16 %v1283, %v1279
  %v1344 = vpack.c.b16 %v1284, %v1280
  %v1345 = vpack.c.b16 %v1289, %v1285
  %v1346 = vpack.c.b16 %v1290, %v1286
  %v1347 = vpack.c.b16 %v1291, %v1287
  %v1348 = vpack.c.b16 %v1292, %v1288
  %v1349 = vpack.c.b16 %v1297, %v1293
  %v1350 = vpack.c.b16 %v1298, %v1294
  %v1351 = vpack.c.b16 %v1299, %v1295
  %v1352 = vpack.c.b16 %v1300, %v1296
  %v1353 = vpack.c.b16 %v1305, %v1301
  %v1354 = vpack.c.b16 %v1306, %v1302
  %v1355 = vpack.c.b16 %v1307, %v1303
  %v1356 = vpack.c.b16 %v1308, %v1304
  %v1357 = vpack.c.b16 %v1313, %v1309
  %v1358 = vpack.c.b16 %v1314, %v1310
  %v1359 = vpack.c.b16 %v1315, %v1311
  %v1360 = vpack.c.b16 %v1316, %v1312
  %v1361 = vpack.c.b16 %v1321, %v1317
  %v1362 = vpack.c.b16 %v1322, %v1318
  %v1363 = vpack.c.b16 %v1323, %v1319
  %v1364 = vpack.c.b16 %v1324, %v1320
  %v1365 = vpack.c.b16 %v1329, %v1325
  %v1366 = vpack.c.b16 %v1330, %v1326
  %v1367 = vpack.c.b16 %v1331, %v1327
  %v1368 = vpack.c.b16 %v1332, %v1328
  %v1369 = vpack.c.b16 %v1337, %v1333
  %v1370 = vpack.c.b16 %v1338, %v1334
  %v1371 = vpack.c.b16 %v1339, %v1335
  %v1372 = vpack.c.b16 %v1340, %v1336
  %1405 = vmatpush.bf16.msra.mxu0 %v1369
  %1406 = vmatpush.bf16.msra.mxu0 %v1365
  %1407 = vmatpush.bf16.msra.mxu0 %v1361
  %1408 = vmatpush.bf16.msra.mxu0 %v1357
  %1409 = vmatpush.bf16.msra.mxu0 %v1353
  %1410 = vmatpush.bf16.msra.mxu0 %v1349
  %1411 = vmatpush.bf16.msra.mxu0 %v1345
  %1412 = vmatpush.bf16.msra.mxu0 %v1341
  %1413 = vmatmul.bf16.gmra.mxu0 0
  %v1414 = vpop.f32.mrf.mxu0
  %v1415 = vadd.f32 0.0, %v1414
  %v1416 = vpop.f32.mrf.mxu0
  %1417 = vdwg.mxu0
  %1418 = vmatpush.bf16.msra.mxu0 %v1370
  %1419 = vmatpush.bf16.msra.mxu0 %v1366
  %1420 = vmatpush.bf16.msra.mxu0 %v1362
  %1421 = vmatpush.bf16.msra.mxu0 %v1358
  %1422 = vmatpush.bf16.msra.mxu0 %v1354
  %1423 = vmatpush.bf16.msra.mxu0 %v1350
  %1424 = vmatpush.bf16.msra.mxu0 %v1346
  %1425 = vmatpush.bf16.msra.mxu0 %v1342
  %1426 = vmatmul.bf16.gmra.mxu0 0
  %v1427 = vpop.f32.mrf.mxu0
  %v1428 = vadd.f32 0.0, %v1427
  %v1429 = vpop.f32.mrf.mxu0
  %1430 = vdwg.mxu0
  %1431 = vmatpush.bf16.msra.mxu0 %v1371
  %1432 = vmatpush.bf16.msra.mxu0 %v1367
  %1433 = vmatpush.bf16.msra.mxu0 %v1363
  %1434 = vmatpush.bf16.msra.mxu0 %v1359
  %1435 = vmatpush.bf16.msra.mxu0 %v1355
  %1436 = vmatpush.bf16.msra.mxu0 %v1351
  %1437 = vmatpush.bf16.msra.mxu0 %v1347
  %1438 = vmatpush.bf16.msra.mxu0 %v1343
  %1439 = vmatmul.bf16.gmra.mxu0 0
  %v1440 = vpop.f32.mrf.mxu0
  %v1441 = vadd.f32 0.0, %v1440
  %v1442 = vpop.f32.mrf.mxu0
  %1443 = vdwg.mxu0
  %1444 = vmatpush.bf16.msra.mxu0 %v1372
  %1445 = vmatpush.bf16.msra.mxu0 %v1368
  %1446 = vmatpush.bf16.msra.mxu0 %v1364
  %1447 = vmatpush.bf16.msra.mxu0 %v1360
  %1448 = vmatpush.bf16.msra.mxu0 %v1356
  %1449 = vmatpush.bf16.msra.mxu0 %v1352
  %1450 = vmatpush.bf16.msra.mxu0 %v1348
  %1451 = vmatpush.bf16.msra.mxu0 %v1344
  %1452 = vmatmul.bf16.gmra.mxu0 0
  %v1453 = vpop.f32.mrf.mxu0
  %v1454 = vadd.f32 0.0, %v1453
  %v1455 = vpop.f32.mrf.mxu0
  %1456 = vdwg.mxu0
  %v1457 = vadd.f32 %v1008, %v1415
  %v1458 = vadd.f32 %v1041, %v1428
  %v1459 = vadd.f32 %v1074, %v1441
  %v1460 = vadd.f32 %v1107, %v1454
  %v1462 = vperm.slane %v1162, 0
  %v1463 = vperm.slane %v1162, 1
  %v1464 = vperm.slane %v1162, 2
  %v1465 = vperm.slane %v1162, 3
  %v1470 = vadd.f32 %v1457, %v1462
  %v1471 = vadd.f32 %v1458, %v1463
  %v1472 = vadd.f32 %v1459, %v1464
  %v1473 = vadd.f32 %v1460, %v1465
  %v1474 = vxor.u32 %v1470, 2147483648
  %v1475 = vmul.f32 %v1474, 1.442695
  %v1476 = vpow.pop %v1475
  %v1477 = vadd.f32 %v1476, 1.0
  %v1478 = vrcp.pop %v1477
  %v1479 = vmul.f32 %v1477, %v1478
  %v1480 = vsub.f32 1.0, %v1479
  %v1481 = vmul.f32 %v1478, %v1480
  %v1482 = vadd.f32 %v1478, %v1481
  %vm1483 = vweird.f32 %v1477
  %vm1484 = vweird.f32 %v1478
  %vm1485 = vmor %vm1483, %vm1484
  %v1486 = vsel %vm1485, %v1478, %v1482
  %v1487 = vand.u32 2147483647, %v1477
  %vm1488 = vcmp.eq.f32.partialorder %v1487, 8.507059e+37
  %v1489 = vand.u32 %v1477, 2147483648
  %v1490 = vor.u32 1.1754944e-38, %v1489
  %v1491 = vsel %vm1488, %v1490, %v1486
  %v1492 = vmul.f32 1.0, %v1491
  %v1493 = vxor.u32 %v1471, 2147483648
  %v1494 = vmul.f32 %v1493, 1.442695
  %v1495 = vpow.pop %v1494
  %v1496 = vadd.f32 %v1495, 1.0
  %v1497 = vrcp.pop %v1496
  %v1498 = vmul.f32 %v1496, %v1497
  %v1499 = vsub.f32 1.0, %v1498
  %v1500 = vmul.f32 %v1497, %v1499
  %v1501 = vadd.f32 %v1497, %v1500
  %vm1502 = vweird.f32 %v1496
  %vm1503 = vweird.f32 %v1497
  %vm1504 = vmor %vm1502, %vm1503
  %v1505 = vsel %vm1504, %v1497, %v1501
  %v1506 = vand.u32 2147483647, %v1496
  %vm1507 = vcmp.eq.f32.partialorder %v1506, 8.507059e+37
  %v1508 = vand.u32 %v1496, 2147483648
  %v1509 = vor.u32 1.1754944e-38, %v1508
  %v1510 = vsel %vm1507, %v1509, %v1505
  %v1511 = vmul.f32 1.0, %v1510
  %v1512 = vtanh.pop %v1472
  %v1513 = vxor.u32 %v1473, 2147483648
  %v1514 = vmul.f32 %v1513, 1.442695
  %v1515 = vpow.pop %v1514
  %v1516 = vadd.f32 %v1515, 1.0
  %v1517 = vrcp.pop %v1516
  %v1518 = vmul.f32 %v1516, %v1517
  %v1519 = vsub.f32 1.0, %v1518
  %v1520 = vmul.f32 %v1517, %v1519
  %v1521 = vadd.f32 %v1517, %v1520
  %vm1522 = vweird.f32 %v1516
  %vm1523 = vweird.f32 %v1517
  %vm1524 = vmor %vm1522, %vm1523
  %v1525 = vsel %vm1524, %v1517, %v1521
  %v1526 = vand.u32 2147483647, %v1516
  %vm1527 = vcmp.eq.f32.partialorder %v1526, 8.507059e+37
  %v1528 = vand.u32 %v1516, 2147483648
  %v1529 = vor.u32 1.1754944e-38, %v1528
  %v1530 = vsel %vm1527, %v1529, %v1525
  %v1531 = vmul.f32 1.0, %v1530
  %v1532 = vmul.f32 %v1511, 0.0
  %v1533 = vmul.f32 %v1492, %v1512
  %v1534 = vadd.f32 %v1532, %v1533
  %v1535 = vtanh.pop %v1534
  %v1536 = vmul.f32 %v1531, %v1535
  %v1537 = vpack.c.bf16 %v1536, %v1536
  %v1538 = vpack.c.bf16 0.0, 0.0
  %v1540 = vperm.slane %v1227, 0
  %v1541 = vperm.slane %v1227, 1
  %v1542 = vperm.slane %v1227, 2
  %v1543 = vperm.slane %v1227, 3
  %v1612 = vunpack.c.l.b16 %v1163
  %v1613 = vunpack.c.h.b16 %v1163
  %v1614 = vunpack.c.l.b16 %v1164
  %v1615 = vunpack.c.h.b16 %v1164
  %v1616 = vunpack.c.l.b16 %v1165
  %v1617 = vunpack.c.h.b16 %v1165
  %v1618 = vunpack.c.l.b16 %v1166
  %v1619 = vunpack.c.h.b16 %v1166
  %v1620 = vunpack.c.l.b16 %v1167
  %v1621 = vunpack.c.h.b16 %v1167
  %v1622 = vunpack.c.l.b16 %v1168
  %v1623 = vunpack.c.h.b16 %v1168
  %v1624 = vunpack.c.l.b16 %v1169
  %v1625 = vunpack.c.h.b16 %v1169
  %v1626 = vunpack.c.l.b16 %v1170
  %v1627 = vunpack.c.h.b16 %v1170
  %v1628 = vunpack.c.l.b16 %v1171
  %v1629 = vunpack.c.h.b16 %v1171
  %v1630 = vunpack.c.l.b16 %v1172
  %v1631 = vunpack.c.h.b16 %v1172
  %v1632 = vunpack.c.l.b16 %v1173
  %v1633 = vunpack.c.h.b16 %v1173
  %v1634 = vunpack.c.l.b16 %v1174
  %v1635 = vunpack.c.h.b16 %v1174
  %v1636 = vunpack.c.l.b16 %v1175
  %v1637 = vunpack.c.h.b16 %v1175
  %v1638 = vunpack.c.l.b16 %v1176
  %v1639 = vunpack.c.h.b16 %v1176
  %v1640 = vunpack.c.l.b16 %v1177
  %v1641 = vunpack.c.h.b16 %v1177
  %v1642 = vunpack.c.l.b16 %v1178
  %v1643 = vunpack.c.h.b16 %v1178
  %v1644 = vunpack.c.l.b16 %v1179
  %v1645 = vunpack.c.h.b16 %v1179
  %v1646 = vunpack.c.l.b16 %v1180
  %v1647 = vunpack.c.h.b16 %v1180
  %v1648 = vunpack.c.l.b16 %v1181
  %v1649 = vunpack.c.h.b16 %v1181
  %v1650 = vunpack.c.l.b16 %v1182
  %v1651 = vunpack.c.h.b16 %v1182
  %v1652 = vunpack.c.l.b16 %v1183
  %v1653 = vunpack.c.h.b16 %v1183
  %v1654 = vunpack.c.l.b16 %v1184
  %v1655 = vunpack.c.h.b16 %v1184
  %v1656 = vunpack.c.l.b16 %v1185
  %v1657 = vunpack.c.h.b16 %v1185
  %v1658 = vunpack.c.l.b16 %v1186
  %v1659 = vunpack.c.h.b16 %v1186
  %v1660 = vunpack.c.l.b16 %v1187
  %v1661 = vunpack.c.h.b16 %v1187
  %v1662 = vunpack.c.l.b16 %v1188
  %v1663 = vunpack.c.h.b16 %v1188
  %v1664 = vunpack.c.l.b16 %v1189
  %v1665 = vunpack.c.h.b16 %v1189
  %v1666 = vunpack.c.l.b16 %v1190
  %v1667 = vunpack.c.h.b16 %v1190
  %v1668 = vunpack.c.l.b16 %v1191
  %v1669 = vunpack.c.h.b16 %v1191
  %v1670 = vunpack.c.l.b16 %v1192
  %v1671 = vunpack.c.h.b16 %v1192
  %v1672 = vunpack.c.l.b16 %v1193
  %v1673 = vunpack.c.h.b16 %v1193
  %v1674 = vunpack.c.l.b16 %v1194
  %v1675 = vunpack.c.h.b16 %v1194
  %v1676 = vunpack.c.l.b16 %v1195
  %v1677 = vunpack.c.h.b16 %v1195
  %v1678 = vunpack.c.l.b16 %v1196
  %v1679 = vunpack.c.h.b16 %v1196
  %v1680 = vunpack.c.l.b16 %v1197
  %v1681 = vunpack.c.h.b16 %v1197
  %v1682 = vunpack.c.l.b16 %v1198
  %v1683 = vunpack.c.h.b16 %v1198
  %v1684 = vunpack.c.l.b16 %v1199
  %v1685 = vunpack.c.h.b16 %v1199
  %v1686 = vunpack.c.l.b16 %v1200
  %v1687 = vunpack.c.h.b16 %v1200
  %v1688 = vunpack.c.l.b16 %v1201
  %v1689 = vunpack.c.h.b16 %v1201
  %v1690 = vunpack.c.l.b16 %v1202
  %v1691 = vunpack.c.h.b16 %v1202
  %v1692 = vunpack.c.l.b16 %v1203
  %v1693 = vunpack.c.h.b16 %v1203
  %v1694 = vunpack.c.l.b16 %v1204
  %v1695 = vunpack.c.h.b16 %v1204
  %v1696 = vunpack.c.l.b16 %v1205
  %v1697 = vunpack.c.h.b16 %v1205
  %v1698 = vunpack.c.l.b16 %v1206
  %v1699 = vunpack.c.h.b16 %v1206
  %v1700 = vunpack.c.l.b16 %v1207
  %v1701 = vunpack.c.h.b16 %v1207
  %v1702 = vunpack.c.l.b16 %v1208
  %v1703 = vunpack.c.h.b16 %v1208
  %v1704 = vunpack.c.l.b16 %v1209
  %v1705 = vunpack.c.h.b16 %v1209
  %v1706 = vunpack.c.l.b16 %v1210
  %v1707 = vunpack.c.h.b16 %v1210
  %v1708 = vunpack.c.l.b16 %v1211
  %v1709 = vunpack.c.h.b16 %v1211
  %v1710 = vunpack.c.l.b16 %v1212
  %v1711 = vunpack.c.h.b16 %v1212
  %v1712 = vunpack.c.l.b16 %v1213
  %v1713 = vunpack.c.h.b16 %v1213
  %v1714 = vunpack.c.l.b16 %v1214
  %v1715 = vunpack.c.h.b16 %v1214
  %v1716 = vunpack.c.l.b16 %v1215
  %v1717 = vunpack.c.h.b16 %v1215
  %v1718 = vunpack.c.l.b16 %v1216
  %v1719 = vunpack.c.h.b16 %v1216
  %v1720 = vunpack.c.l.b16 %v1217
  %v1721 = vunpack.c.h.b16 %v1217
  %v1722 = vunpack.c.l.b16 %v1218
  %v1723 = vunpack.c.h.b16 %v1218
  %v1724 = vunpack.c.l.b16 %v1219
  %v1725 = vunpack.c.h.b16 %v1219
  %v1726 = vunpack.c.l.b16 %v1220
  %v1727 = vunpack.c.h.b16 %v1220
  %v1728 = vunpack.c.l.b16 %v1221
  %v1729 = vunpack.c.h.b16 %v1221
  %v1730 = vunpack.c.l.b16 %v1222
  %v1731 = vunpack.c.h.b16 %v1222
  %v1732 = vunpack.c.l.b16 %v1223
  %v1733 = vunpack.c.h.b16 %v1223
  %v1734 = vunpack.c.l.b16 %v1224
  %v1735 = vunpack.c.h.b16 %v1224
  %v1736 = vunpack.c.l.b16 %v1225
  %v1737 = vunpack.c.h.b16 %v1225
  %v1738 = vunpack.c.l.b16 %v1226
  %v1739 = vunpack.c.h.b16 %v1226
  %v1740 = vpack.c.b16 %v1616, %v1612
  %v1741 = vpack.c.b16 %v1617, %v1613
  %v1742 = vpack.c.b16 %v1618, %v1614
  %v1743 = vpack.c.b16 %v1619, %v1615
  %v1744 = vpack.c.b16 %v1624, %v1620
  %v1745 = vpack.c.b16 %v1625, %v1621
  %v1746 = vpack.c.b16 %v1626, %v1622
  %v1747 = vpack.c.b16 %v1627, %v1623
  %v1748 = vpack.c.b16 %v1632, %v1628
  %v1749 = vpack.c.b16 %v1633, %v1629
  %v1750 = vpack.c.b16 %v1634, %v1630
  %v1751 = vpack.c.b16 %v1635, %v1631
  %v1752 = vpack.c.b16 %v1640, %v1636
  %v1753 = vpack.c.b16 %v1641, %v1637
  %v1754 = vpack.c.b16 %v1642, %v1638
  %v1755 = vpack.c.b16 %v1643, %v1639
  %v1756 = vpack.c.b16 %v1648, %v1644
  %v1757 = vpack.c.b16 %v1649, %v1645
  %v1758 = vpack.c.b16 %v1650, %v1646
  %v1759 = vpack.c.b16 %v1651, %v1647
  %v1760 = vpack.c.b16 %v1656, %v1652
  %v1761 = vpack.c.b16 %v1657, %v1653
  %v1762 = vpack.c.b16 %v1658, %v1654
  %v1763 = vpack.c.b16 %v1659, %v1655
  %v1764 = vpack.c.b16 %v1664, %v1660
  %v1765 = vpack.c.b16 %v1665, %v1661
  %v1766 = vpack.c.b16 %v1666, %v1662
  %v1767 = vpack.c.b16 %v1667, %v1663
  %v1768 = vpack.c.b16 %v1672, %v1668
  %v1769 = vpack.c.b16 %v1673, %v1669
  %v1770 = vpack.c.b16 %v1674, %v1670
  %v1771 = vpack.c.b16 %v1675, %v1671
  %v1772 = vpack.c.b16 %v1680, %v1676
  %v1773 = vpack.c.b16 %v1681, %v1677
  %v1774 = vpack.c.b16 %v1682, %v1678
  %v1775 = vpack.c.b16 %v1683, %v1679
  %v1776 = vpack.c.b16 %v1688, %v1684
  %v1777 = vpack.c.b16 %v1689, %v1685
  %v1778 = vpack.c.b16 %v1690, %v1686
  %v1779 = vpack.c.b16 %v1691, %v1687
  %v1780 = vpack.c.b16 %v1696, %v1692
  %v1781 = vpack.c.b16 %v1697, %v1693
  %v1782 = vpack.c.b16 %v1698, %v1694
  %v1783 = vpack.c.b16 %v1699, %v1695
  %v1784 = vpack.c.b16 %v1704, %v1700
  %v1785 = vpack.c.b16 %v1705, %v1701
  %v1786 = vpack.c.b16 %v1706, %v1702
  %v1787 = vpack.c.b16 %v1707, %v1703
  %v1788 = vpack.c.b16 %v1712, %v1708
  %v1789 = vpack.c.b16 %v1713, %v1709
  %v1790 = vpack.c.b16 %v1714, %v1710
  %v1791 = vpack.c.b16 %v1715, %v1711
  %v1792 = vpack.c.b16 %v1720, %v1716
  %v1793 = vpack.c.b16 %v1721, %v1717
  %v1794 = vpack.c.b16 %v1722, %v1718
  %v1795 = vpack.c.b16 %v1723, %v1719
  %v1796 = vpack.c.b16 %v1728, %v1724
  %v1797 = vpack.c.b16 %v1729, %v1725
  %v1798 = vpack.c.b16 %v1730, %v1726
  %v1799 = vpack.c.b16 %v1731, %v1727
  %v1800 = vpack.c.b16 %v1736, %v1732
  %v1801 = vpack.c.b16 %v1737, %v1733
  %v1802 = vpack.c.b16 %v1738, %v1734
  %v1803 = vpack.c.b16 %v1739, %v1735
  %1868 = vmatpush.bf16.msra.mxu0 %v1768
  %1869 = vmatpush.bf16.msra.mxu0 %v1764
  %1870 = vmatpush.bf16.msra.mxu0 %v1760
  %1871 = vmatpush.bf16.msra.mxu0 %v1756
  %1872 = vmatpush.bf16.msra.mxu0 %v1752
  %1873 = vmatpush.bf16.msra.mxu0 %v1748
  %1874 = vmatpush.bf16.msra.mxu0 %v1744
  %1875 = vmatpush.bf16.msra.mxu0 %v1740
  %1876 = vmatmul.bf16.gmra.mxu0 %v1537
  %v1877 = vpop.f32.mrf.mxu0
  %v1878 = vadd.f32 %v1540, %v1877
  %v1879 = vpop.f32.mrf.mxu0
  %1880 = vdwg.mxu0
  %1881 = vmatpush.bf16.msra.mxu0 %v1800
  %1882 = vmatpush.bf16.msra.mxu0 %v1796
  %1883 = vmatpush.bf16.msra.mxu0 %v1792
  %1884 = vmatpush.bf16.msra.mxu0 %v1788
  %1885 = vmatpush.bf16.msra.mxu0 %v1784
  %1886 = vmatpush.bf16.msra.mxu0 %v1780
  %1887 = vmatpush.bf16.msra.mxu0 %v1776
  %1888 = vmatpush.bf16.msra.mxu0 %v1772
  %1889 = vmatmul.bf16.gmra.mxu0 %v1538
  %v1890 = vpop.f32.mrf.mxu0
  %v1891 = vadd.f32 %v1878, %v1890
  %v1892 = vpop.f32.mrf.mxu0
  %1893 = vdwg.mxu0
  %1894 = vmatpush.bf16.msra.mxu0 %v1769
  %1895 = vmatpush.bf16.msra.mxu0 %v1765
  %1896 = vmatpush.bf16.msra.mxu0 %v1761
  %1897 = vmatpush.bf16.msra.mxu0 %v1757
  %1898 = vmatpush.bf16.msra.mxu0 %v1753
  %1899 = vmatpush.bf16.msra.mxu0 %v1749
  %1900 = vmatpush.bf16.msra.mxu0 %v1745
  %1901 = vmatpush.bf16.msra.mxu0 %v1741
  %1902 = vmatmul.bf16.gmra.mxu0 %v1537
  %v1903 = vpop.f32.mrf.mxu0
  %v1904 = vadd.f32 %v1541, %v1903
  %v1905 = vpop.f32.mrf.mxu0
  %1906 = vdwg.mxu0
  %1907 = vmatpush.bf16.msra.mxu0 %v1801
  %1908 = vmatpush.bf16.msra.mxu0 %v1797
  %1909 = vmatpush.bf16.msra.mxu0 %v1793
  %1910 = vmatpush.bf16.msra.mxu0 %v1789
  %1911 = vmatpush.bf16.msra.mxu0 %v1785
  %1912 = vmatpush.bf16.msra.mxu0 %v1781
  %1913 = vmatpush.bf16.msra.mxu0 %v1777
  %1914 = vmatpush.bf16.msra.mxu0 %v1773
  %1915 = vmatmul.bf16.gmra.mxu0 %v1538
  %v1916 = vpop.f32.mrf.mxu0
  %v1917 = vadd.f32 %v1904, %v1916
  %v1918 = vpop.f32.mrf.mxu0
  %1919 = vdwg.mxu0
  %1920 = vmatpush.bf16.msra.mxu0 %v1770
  %1921 = vmatpush.bf16.msra.mxu0 %v1766
  %1922 = vmatpush.bf16.msra.mxu0 %v1762
  %1923 = vmatpush.bf16.msra.mxu0 %v1758
  %1924 = vmatpush.bf16.msra.mxu0 %v1754
  %1925 = vmatpush.bf16.msra.mxu0 %v1750
  %1926 = vmatpush.bf16.msra.mxu0 %v1746
  %1927 = vmatpush.bf16.msra.mxu0 %v1742
  %1928 = vmatmul.bf16.gmra.mxu0 %v1537
  %v1929 = vpop.f32.mrf.mxu0
  %v1930 = vadd.f32 %v1542, %v1929
  %v1931 = vpop.f32.mrf.mxu0
  %1932 = vdwg.mxu0
  %1933 = vmatpush.bf16.msra.mxu0 %v1802
  %1934 = vmatpush.bf16.msra.mxu0 %v1798
  %1935 = vmatpush.bf16.msra.mxu0 %v1794
  %1936 = vmatpush.bf16.msra.mxu0 %v1790
  %1937 = vmatpush.bf16.msra.mxu0 %v1786
  %1938 = vmatpush.bf16.msra.mxu0 %v1782
  %1939 = vmatpush.bf16.msra.mxu0 %v1778
  %1940 = vmatpush.bf16.msra.mxu0 %v1774
  %1941 = vmatmul.bf16.gmra.mxu0 %v1538
  %v1942 = vpop.f32.mrf.mxu0
  %v1943 = vadd.f32 %v1930, %v1942
  %v1944 = vpop.f32.mrf.mxu0
  %1945 = vdwg.mxu0
  %1946 = vmatpush.bf16.msra.mxu0 %v1771
  %1947 = vmatpush.bf16.msra.mxu0 %v1767
  %1948 = vmatpush.bf16.msra.mxu0 %v1763
  %1949 = vmatpush.bf16.msra.mxu0 %v1759
  %1950 = vmatpush.bf16.msra.mxu0 %v1755
  %1951 = vmatpush.bf16.msra.mxu0 %v1751
  %1952 = vmatpush.bf16.msra.mxu0 %v1747
  %1953 = vmatpush.bf16.msra.mxu0 %v1743
  %1954 = vmatmul.bf16.gmra.mxu0 %v1537
  %v1955 = vpop.f32.mrf.mxu0
  %v1956 = vadd.f32 %v1543, %v1955
  %v1957 = vpop.f32.mrf.mxu0
  %1958 = vdwg.mxu0
  %1959 = vmatpush.bf16.msra.mxu0 %v1803
  %1960 = vmatpush.bf16.msra.mxu0 %v1799
  %1961 = vmatpush.bf16.msra.mxu0 %v1795
  %1962 = vmatpush.bf16.msra.mxu0 %v1791
  %1963 = vmatpush.bf16.msra.mxu0 %v1787
  %1964 = vmatpush.bf16.msra.mxu0 %v1783
  %1965 = vmatpush.bf16.msra.mxu0 %v1779
  %1966 = vmatpush.bf16.msra.mxu0 %v1775
  %1967 = vmatmul.bf16.gmra.mxu0 %v1538
  %v1968 = vpop.f32.mrf.mxu0
  %v1969 = vadd.f32 %v1956, %v1968
  %v1970 = vpop.f32.mrf.mxu0
  %1971 = vdwg.mxu0
  %v1972 = vxor.u32 %v1891, 2147483648
  %v1973 = vmul.f32 %v1972, 1.442695
  %v1974 = vpow.pop %v1973
  %v1975 = vadd.f32 %v1974, 1.0
  %v1976 = vrcp.pop %v1975
  %v1977 = vmul.f32 %v1975, %v1976
  %v1978 = vsub.f32 1.0, %v1977
  %v1979 = vmul.f32 %v1976, %v1978
  %v1980 = vadd.f32 %v1976, %v1979
  %vm1981 = vweird.f32 %v1975
  %vm1982 = vweird.f32 %v1976
  %vm1983 = vmor %vm1981, %vm1982
  %v1984 = vsel %vm1983, %v1976, %v1980
  %v1985 = vand.u32 2147483647, %v1975
  %vm1986 = vcmp.eq.f32.partialorder %v1985, 8.507059e+37
  %v1987 = vand.u32 %v1975, 2147483648
  %v1988 = vor.u32 1.1754944e-38, %v1987
  %v1989 = vsel %vm1986, %v1988, %v1984
  %v1990 = vmul.f32 1.0, %v1989
  %v1991 = vxor.u32 %v1917, 2147483648
  %v1992 = vmul.f32 %v1991, 1.442695
  %v1993 = vpow.pop %v1992
  %v1994 = vadd.f32 %v1993, 1.0
  %v1995 = vrcp.pop %v1994
  %v1996 = vmul.f32 %v1994, %v1995
  %v1997 = vsub.f32 1.0, %v1996
  %v1998 = vmul.f32 %v1995, %v1997
  %v1999 = vadd.f32 %v1995, %v1998
  %vm2000 = vweird.f32 %v1994
  %vm2001 = vweird.f32 %v1995
  %vm2002 = vmor %vm2000, %vm2001
  %v2003 = vsel %vm2002, %v1995, %v1999
  %v2004 = vand.u32 2147483647, %v1994
  %vm2005 = vcmp.eq.f32.partialorder %v2004, 8.507059e+37
  %v2006 = vand.u32 %v1994, 2147483648
  %v2007 = vor.u32 1.1754944e-38, %v2006
  %v2008 = vsel %vm2005, %v2007, %v2003
  %v2009 = vmul.f32 1.0, %v2008
  %v2010 = vtanh.pop %v1943
  %v2011 = vxor.u32 %v1969, 2147483648
  %v2012 = vmul.f32 %v2011, 1.442695
  %v2013 = vpow.pop %v2012
  %v2014 = vadd.f32 %v2013, 1.0
  %v2015 = vrcp.pop %v2014
  %v2016 = vmul.f32 %v2014, %v2015
  %v2017 = vsub.f32 1.0, %v2016
  %v2018 = vmul.f32 %v2015, %v2017
  %v2019 = vadd.f32 %v2015, %v2018
  %vm2020 = vweird.f32 %v2014
  %vm2021 = vweird.f32 %v2015
  %vm2022 = vmor %vm2020, %vm2021
  %v2023 = vsel %vm2022, %v2015, %v2019
  %v2024 = vand.u32 2147483647, %v2014
  %vm2025 = vcmp.eq.f32.partialorder %v2024, 8.507059e+37
  %v2026 = vand.u32 %v2014, 2147483648
  %v2027 = vor.u32 1.1754944e-38, %v2026
  %v2028 = vsel %vm2025, %v2027, %v2023
  %v2029 = vmul.f32 1.0, %v2028
  %v2030 = vmul.f32 %v2009, 0.0
  %v2031 = vmul.f32 %v1990, %v2010
  %v2032 = vadd.f32 %v2030, %v2031
  %v2033 = vtanh.pop %v2032
  %v2034 = vmul.f32 %v2029, %v2033
  %v2035 = vpack.c.bf16 %v2034, %v2034
  %2036 = vmatpush.bf16.msra.mxu0 %v1369
  %2037 = vmatpush.bf16.msra.mxu0 %v1365
  %2038 = vmatpush.bf16.msra.mxu0 %v1361
  %2039 = vmatpush.bf16.msra.mxu0 %v1357
  %2040 = vmatpush.bf16.msra.mxu0 %v1353
  %2041 = vmatpush.bf16.msra.mxu0 %v1349
  %2042 = vmatpush.bf16.msra.mxu0 %v1345
  %2043 = vmatpush.bf16.msra.mxu0 %v1341
  %2044 = vmatmul.bf16.gmra.mxu0 %v1537
  %v2045 = vpop.f32.mrf.mxu0
  %v2046 = vadd.f32 0.0, %v2045
  %v2047 = vpop.f32.mrf.mxu0
  %2048 = vdwg.mxu0
  %2049 = vmatpush.bf16.msra.mxu0 %v1370
  %2050 = vmatpush.bf16.msra.mxu0 %v1366
  %2051 = vmatpush.bf16.msra.mxu0 %v1362
  %2052 = vmatpush.bf16.msra.mxu0 %v1358
  %2053 = vmatpush.bf16.msra.mxu0 %v1354
  %2054 = vmatpush.bf16.msra.mxu0 %v1350
  %2055 = vmatpush.bf16.msra.mxu0 %v1346
  %2056 = vmatpush.bf16.msra.mxu0 %v1342
  %2057 = vmatmul.bf16.gmra.mxu0 %v1537
  %v2058 = vpop.f32.mrf.mxu0
  %v2059 = vadd.f32 0.0, %v2058
  %v2060 = vpop.f32.mrf.mxu0
  %2061 = vdwg.mxu0
  %2062 = vmatpush.bf16.msra.mxu0 %v1371
  %2063 = vmatpush.bf16.msra.mxu0 %v1367
  %2064 = vmatpush.bf16.msra.mxu0 %v1363
  %2065 = vmatpush.bf16.msra.mxu0 %v1359
  %2066 = vmatpush.bf16.msra.mxu0 %v1355
  %2067 = vmatpush.bf16.msra.mxu0 %v1351
  %2068 = vmatpush.bf16.msra.mxu0 %v1347
  %2069 = vmatpush.bf16.msra.mxu0 %v1343
  %2070 = vmatmul.bf16.gmra.mxu0 %v1537
  %v2071 = vpop.f32.mrf.mxu0
  %v2072 = vadd.f32 0.0, %v2071
  %v2073 = vpop.f32.mrf.mxu0
  %2074 = vdwg.mxu0
  %2075 = vmatpush.bf16.msra.mxu0 %v1372
  %2076 = vmatpush.bf16.msra.mxu0 %v1368
  %2077 = vmatpush.bf16.msra.mxu0 %v1364
  %2078 = vmatpush.bf16.msra.mxu0 %v1360
  %2079 = vmatpush.bf16.msra.mxu0 %v1356
  %2080 = vmatpush.bf16.msra.mxu0 %v1352
  %2081 = vmatpush.bf16.msra.mxu0 %v1348
  %2082 = vmatpush.bf16.msra.mxu0 %v1344
  %2083 = vmatmul.bf16.gmra.mxu0 %v1537
  %v2084 = vpop.f32.mrf.mxu0
  %v2085 = vadd.f32 0.0, %v2084
  %v2086 = vpop.f32.mrf.mxu0
  %2087 = vdwg.mxu0
  %v2088 = vadd.f32 %v1010, %v2046
  %v2089 = vadd.f32 %v1043, %v2059
  %v2090 = vadd.f32 %v1076, %v2072
  %v2091 = vadd.f32 %v1109, %v2085
  %v2092 = vadd.f32 %v2088, %v1462
  %v2093 = vadd.f32 %v2089, %v1463
  %v2094 = vadd.f32 %v2090, %v1464
  %v2095 = vadd.f32 %v2091, %v1465
  %v2096 = vxor.u32 %v2092, 2147483648
  %v2097 = vmul.f32 %v2096, 1.442695
  %v2098 = vpow.pop %v2097
  %v2099 = vadd.f32 %v2098, 1.0
  %v2100 = vrcp.pop %v2099
  %v2101 = vmul.f32 %v2099, %v2100
  %v2102 = vsub.f32 1.0, %v2101
  %v2103 = vmul.f32 %v2100, %v2102
  %v2104 = vadd.f32 %v2100, %v2103
  %vm2105 = vweird.f32 %v2099
  %vm2106 = vweird.f32 %v2100
  %vm2107 = vmor %vm2105, %vm2106
  %v2108 = vsel %vm2107, %v2100, %v2104
  %v2109 = vand.u32 2147483647, %v2099
  %vm2110 = vcmp.eq.f32.partialorder %v2109, 8.507059e+37
  %v2111 = vand.u32 %v2099, 2147483648
  %v2112 = vor.u32 1.1754944e-38, %v2111
  %v2113 = vsel %vm2110, %v2112, %v2108
  %v2114 = vmul.f32 1.0, %v2113
  %v2115 = vxor.u32 %v2093, 2147483648
  %v2116 = vmul.f32 %v2115, 1.442695
  %v2117 = vpow.pop %v2116
  %v2118 = vadd.f32 %v2117, 1.0
  %v2119 = vrcp.pop %v2118
  %v2120 = vmul.f32 %v2118, %v2119
  %v2121 = vsub.f32 1.0, %v2120
  %v2122 = vmul.f32 %v2119, %v2121
  %v2123 = vadd.f32 %v2119, %v2122
  %vm2124 = vweird.f32 %v2118
  %vm2125 = vweird.f32 %v2119
  %vm2126 = vmor %vm2124, %vm2125
  %v2127 = vsel %vm2126, %v2119, %v2123
  %v2128 = vand.u32 2147483647, %v2118
  %vm2129 = vcmp.eq.f32.partialorder %v2128, 8.507059e+37
  %v2130 = vand.u32 %v2118, 2147483648
  %v2131 = vor.u32 1.1754944e-38, %v2130
  %v2132 = vsel %vm2129, %v2131, %v2127
  %v2133 = vmul.f32 1.0, %v2132
  %v2134 = vtanh.pop %v2094
  %v2135 = vxor.u32 %v2095, 2147483648
  %v2136 = vmul.f32 %v2135, 1.442695
  %v2137 = vpow.pop %v2136
  %v2138 = vadd.f32 %v2137, 1.0
  %v2139 = vrcp.pop %v2138
  %v2140 = vmul.f32 %v2138, %v2139
  %v2141 = vsub.f32 1.0, %v2140
  %v2142 = vmul.f32 %v2139, %v2141
  %v2143 = vadd.f32 %v2139, %v2142
  %vm2144 = vweird.f32 %v2138
  %vm2145 = vweird.f32 %v2139
  %vm2146 = vmor %vm2144, %vm2145
  %v2147 = vsel %vm2146, %v2139, %v2143
  %v2148 = vand.u32 2147483647, %v2138
  %vm2149 = vcmp.eq.f32.partialorder %v2148, 8.507059e+37
  %v2150 = vand.u32 %v2138, 2147483648
  %v2151 = vor.u32 1.1754944e-38, %v2150
  %v2152 = vsel %vm2149, %v2151, %v2147
  %v2153 = vmul.f32 1.0, %v2152
  %v2154 = vmul.f32 %v2133, %v1534
  %v2155 = vmul.f32 %v2114, %v2134
  %v2156 = vadd.f32 %v2154, %v2155
  %v2157 = vtanh.pop %v2156
  %v2158 = vmul.f32 %v2153, %v2157
  %v2159 = vpack.c.bf16 %v2158, %v2158
  %2160 = vmatpush.bf16.msra.mxu0 %v1768
  %2161 = vmatpush.bf16.msra.mxu0 %v1764
  %2162 = vmatpush.bf16.msra.mxu0 %v1760
  %2163 = vmatpush.bf16.msra.mxu0 %v1756
  %2164 = vmatpush.bf16.msra.mxu0 %v1752
  %2165 = vmatpush.bf16.msra.mxu0 %v1748
  %2166 = vmatpush.bf16.msra.mxu0 %v1744
  %2167 = vmatpush.bf16.msra.mxu0 %v1740
  %2168 = vmatmul.bf16.gmra.mxu0 %v2159
  %v2169 = vpop.f32.mrf.mxu0
  %v2170 = vadd.f32 %v1540, %v2169
  %v2171 = vpop.f32.mrf.mxu0
  %2172 = vdwg.mxu0
  %2173 = vmatpush.bf16.msra.mxu0 %v1800
  %2174 = vmatpush.bf16.msra.mxu0 %v1796
  %2175 = vmatpush.bf16.msra.mxu0 %v1792
  %2176 = vmatpush.bf16.msra.mxu0 %v1788
  %2177 = vmatpush.bf16.msra.mxu0 %v1784
  %2178 = vmatpush.bf16.msra.mxu0 %v1780
  %2179 = vmatpush.bf16.msra.mxu0 %v1776
  %2180 = vmatpush.bf16.msra.mxu0 %v1772
  %2181 = vmatmul.bf16.gmra.mxu0 %v2035
  %v2182 = vpop.f32.mrf.mxu0
  %v2183 = vadd.f32 %v2170, %v2182
  %v2184 = vpop.f32.mrf.mxu0
  %2185 = vdwg.mxu0
  %2186 = vmatpush.bf16.msra.mxu0 %v1769
  %2187 = vmatpush.bf16.msra.mxu0 %v1765
  %2188 = vmatpush.bf16.msra.mxu0 %v1761
  %2189 = vmatpush.bf16.msra.mxu0 %v1757
  %2190 = vmatpush.bf16.msra.mxu0 %v1753
  %2191 = vmatpush.bf16.msra.mxu0 %v1749
  %2192 = vmatpush.bf16.msra.mxu0 %v1745
  %2193 = vmatpush.bf16.msra.mxu0 %v1741
  %2194 = vmatmul.bf16.gmra.mxu0 %v2159
  %v2195 = vpop.f32.mrf.mxu0
  %v2196 = vadd.f32 %v1541, %v2195
  %v2197 = vpop.f32.mrf.mxu0
  %2198 = vdwg.mxu0
  %2199 = vmatpush.bf16.msra.mxu0 %v1801
  %2200 = vmatpush.bf16.msra.mxu0 %v1797
  %2201 = vmatpush.bf16.msra.mxu0 %v1793
  %2202 = vmatpush.bf16.msra.mxu0 %v1789
  %2203 = vmatpush.bf16.msra.mxu0 %v1785
  %2204 = vmatpush.bf16.msra.mxu0 %v1781
  %2205 = vmatpush.bf16.msra.mxu0 %v1777
  %2206 = vmatpush.bf16.msra.mxu0 %v1773
  %2207 = vmatmul.bf16.gmra.mxu0 %v2035
  %v2208 = vpop.f32.mrf.mxu0
  %v2209 = vadd.f32 %v2196, %v2208
  %v2210 = vpop.f32.mrf.mxu0
  %2211 = vdwg.mxu0
  %2212 = vmatpush.bf16.msra.mxu0 %v1770
  %2213 = vmatpush.bf16.msra.mxu0 %v1766
  %2214 = vmatpush.bf16.msra.mxu0 %v1762
  %2215 = vmatpush.bf16.msra.mxu0 %v1758
  %2216 = vmatpush.bf16.msra.mxu0 %v1754
  %2217 = vmatpush.bf16.msra.mxu0 %v1750
  %2218 = vmatpush.bf16.msra.mxu0 %v1746
  %2219 = vmatpush.bf16.msra.mxu0 %v1742
  %2220 = vmatmul.bf16.gmra.mxu0 %v2159
  %v2221 = vpop.f32.mrf.mxu0
  %v2222 = vadd.f32 %v1542, %v2221
  %v2223 = vpop.f32.mrf.mxu0
  %2224 = vdwg.mxu0
  %2225 = vmatpush.bf16.msra.mxu0 %v1802
  %2226 = vmatpush.bf16.msra.mxu0 %v1798
  %2227 = vmatpush.bf16.msra.mxu0 %v1794
  %2228 = vmatpush.bf16.msra.mxu0 %v1790
  %2229 = vmatpush.bf16.msra.mxu0 %v1786
  %2230 = vmatpush.bf16.msra.mxu0 %v1782
  %2231 = vmatpush.bf16.msra.mxu0 %v1778
  %2232 = vmatpush.bf16.msra.mxu0 %v1774
  %2233 = vmatmul.bf16.gmra.mxu0 %v2035
  %v2234 = vpop.f32.mrf.mxu0
  %v2235 = vadd.f32 %v2222, %v2234
  %v2236 = vpop.f32.mrf.mxu0
  %2237 = vdwg.mxu0
  %2238 = vmatpush.bf16.msra.mxu0 %v1771
  %2239 = vmatpush.bf16.msra.mxu0 %v1767
  %2240 = vmatpush.bf16.msra.mxu0 %v1763
  %2241 = vmatpush.bf16.msra.mxu0 %v1759
  %2242 = vmatpush.bf16.msra.mxu0 %v1755
  %2243 = vmatpush.bf16.msra.mxu0 %v1751
  %2244 = vmatpush.bf16.msra.mxu0 %v1747
  %2245 = vmatpush.bf16.msra.mxu0 %v1743
  %2246 = vmatmul.bf16.gmra.mxu0 %v2159
  %v2247 = vpop.f32.mrf.mxu0
  %v2248 = vadd.f32 %v1543, %v2247
  %v2249 = vpop.f32.mrf.mxu0
  %2250 = vdwg.mxu0
  %2251 = vmatpush.bf16.msra.mxu0 %v1803
  %2252 = vmatpush.bf16.msra.mxu0 %v1799
  %2253 = vmatpush.bf16.msra.mxu0 %v1795
  %2254 = vmatpush.bf16.msra.mxu0 %v1791
  %2255 = vmatpush.bf16.msra.mxu0 %v1787
  %2256 = vmatpush.bf16.msra.mxu0 %v1783
  %2257 = vmatpush.bf16.msra.mxu0 %v1779
  %2258 = vmatpush.bf16.msra.mxu0 %v1775
  %2259 = vmatmul.bf16.gmra.mxu0 %v2035
  %v2260 = vpop.f32.mrf.mxu0
  %v2261 = vadd.f32 %v2248, %v2260
  %v2262 = vpop.f32.mrf.mxu0
  %2263 = vdwg.mxu0
  %v2264 = vxor.u32 %v2183, 2147483648
  %v2265 = vmul.f32 %v2264, 1.442695
  %v2266 = vpow.pop %v2265
  %v2267 = vadd.f32 %v2266, 1.0
  %v2268 = vrcp.pop %v2267
  %v2269 = vmul.f32 %v2267, %v2268
  %v2270 = vsub.f32 1.0, %v2269
  %v2271 = vmul.f32 %v2268, %v2270
  %v2272 = vadd.f32 %v2268, %v2271
  %vm2273 = vweird.f32 %v2267
  %vm2274 = vweird.f32 %v2268
  %vm2275 = vmor %vm2273, %vm2274
  %v2276 = vsel %vm2275, %v2268, %v2272
  %v2277 = vand.u32 2147483647, %v2267
  %vm2278 = vcmp.eq.f32.partialorder %v2277, 8.507059e+37
  %v2279 = vand.u32 %v2267, 2147483648
  %v2280 = vor.u32 1.1754944e-38, %v2279
  %v2281 = vsel %vm2278, %v2280, %v2276
  %v2282 = vmul.f32 1.0, %v2281
  %v2283 = vxor.u32 %v2209, 2147483648
  %v2284 = vmul.f32 %v2283, 1.442695
  %v2285 = vpow.pop %v2284
  %v2286 = vadd.f32 %v2285, 1.0
  %v2287 = vrcp.pop %v2286
  %v2288 = vmul.f32 %v2286, %v2287
  %v2289 = vsub.f32 1.0, %v2288
  %v2290 = vmul.f32 %v2287, %v2289
  %v2291 = vadd.f32 %v2287, %v2290
  %vm2292 = vweird.f32 %v2286
  %vm2293 = vweird.f32 %v2287
  %vm2294 = vmor %vm2292, %vm2293
  %v2295 = vsel %vm2294, %v2287, %v2291
  %v2296 = vand.u32 2147483647, %v2286
  %vm2297 = vcmp.eq.f32.partialorder %v2296, 8.507059e+37
  %v2298 = vand.u32 %v2286, 2147483648
  %v2299 = vor.u32 1.1754944e-38, %v2298
  %v2300 = vsel %vm2297, %v2299, %v2295
  %v2301 = vmul.f32 1.0, %v2300
  %v2302 = vtanh.pop %v2235
  %v2303 = vxor.u32 %v2261, 2147483648
  %v2304 = vmul.f32 %v2303, 1.442695
  %v2305 = vpow.pop %v2304
  %v2306 = vadd.f32 %v2305, 1.0
  %v2307 = vrcp.pop %v2306
  %v2308 = vmul.f32 %v2306, %v2307
  %v2309 = vsub.f32 1.0, %v2308
  %v2310 = vmul.f32 %v2307, %v2309
  %v2311 = vadd.f32 %v2307, %v2310
  %vm2312 = vweird.f32 %v2306
  %vm2313 = vweird.f32 %v2307
  %vm2314 = vmor %vm2312, %vm2313
  %v2315 = vsel %vm2314, %v2307, %v2311
  %v2316 = vand.u32 2147483647, %v2306
  %vm2317 = vcmp.eq.f32.partialorder %v2316, 8.507059e+37
  %v2318 = vand.u32 %v2306, 2147483648
  %v2319 = vor.u32 1.1754944e-38, %v2318
  %v2320 = vsel %vm2317, %v2319, %v2315
  %v2321 = vmul.f32 1.0, %v2320
  %v2322 = vmul.f32 %v2301, %v2032
  %v2323 = vmul.f32 %v2282, %v2302
  %v2324 = vadd.f32 %v2322, %v2323
  %v2325 = vtanh.pop %v2324
  %v2326 = vmul.f32 %v2321, %v2325
  %v2327 = vpack.c.bf16 %v2326, %v2326
  %2328 = vmatpush.bf16.msra.mxu0 %v1369
  %2329 = vmatpush.bf16.msra.mxu0 %v1365
  %2330 = vmatpush.bf16.msra.mxu0 %v1361
  %2331 = vmatpush.bf16.msra.mxu0 %v1357
  %2332 = vmatpush.bf16.msra.mxu0 %v1353
  %2333 = vmatpush.bf16.msra.mxu0 %v1349
  %2334 = vmatpush.bf16.msra.mxu0 %v1345
  %2335 = vmatpush.bf16.msra.mxu0 %v1341
  %2336 = vmatmul.bf16.gmra.mxu0 %v2159
  %v2337 = vpop.f32.mrf.mxu0
  %v2338 = vadd.f32 0.0, %v2337
  %v2339 = vpop.f32.mrf.mxu0
  %2340 = vdwg.mxu0
  %2341 = vmatpush.bf16.msra.mxu0 %v1370
  %2342 = vmatpush.bf16.msra.mxu0 %v1366
  %2343 = vmatpush.bf16.msra.mxu0 %v1362
  %2344 = vmatpush.bf16.msra.mxu0 %v1358
  %2345 = vmatpush.bf16.msra.mxu0 %v1354
  %2346 = vmatpush.bf16.msra.mxu0 %v1350
  %2347 = vmatpush.bf16.msra.mxu0 %v1346
  %2348 = vmatpush.bf16.msra.mxu0 %v1342
  %2349 = vmatmul.bf16.gmra.mxu0 %v2159
  %v2350 = vpop.f32.mrf.mxu0
  %v2351 = vadd.f32 0.0, %v2350
  %v2352 = vpop.f32.mrf.mxu0
  %2353 = vdwg.mxu0
  %2354 = vmatpush.bf16.msra.mxu0 %v1371
  %2355 = vmatpush.bf16.msra.mxu0 %v1367
  %2356 = vmatpush.bf16.msra.mxu0 %v1363
  %2357 = vmatpush.bf16.msra.mxu0 %v1359
  %2358 = vmatpush.bf16.msra.mxu0 %v1355
  %2359 = vmatpush.bf16.msra.mxu0 %v1351
  %2360 = vmatpush.bf16.msra.mxu0 %v1347
  %2361 = vmatpush.bf16.msra.mxu0 %v1343
  %2362 = vmatmul.bf16.gmra.mxu0 %v2159
  %v2363 = vpop.f32.mrf.mxu0
  %v2364 = vadd.f32 0.0, %v2363
  %v2365 = vpop.f32.mrf.mxu0
  %2366 = vdwg.mxu0
  %2367 = vmatpush.bf16.msra.mxu0 %v1372
  %2368 = vmatpush.bf16.msra.mxu0 %v1368
  %2369 = vmatpush.bf16.msra.mxu0 %v1364
  %2370 = vmatpush.bf16.msra.mxu0 %v1360
  %2371 = vmatpush.bf16.msra.mxu0 %v1356
  %2372 = vmatpush.bf16.msra.mxu0 %v1352
  %2373 = vmatpush.bf16.msra.mxu0 %v1348
  %2374 = vmatpush.bf16.msra.mxu0 %v1344
  %2375 = vmatmul.bf16.gmra.mxu0 %v2159
  %v2376 = vpop.f32.mrf.mxu0
  %v2377 = vadd.f32 0.0, %v2376
  %v2378 = vpop.f32.mrf.mxu0
  %2379 = vdwg.mxu0
  %v2380 = vadd.f32 %v1013, %v2338
  %v2381 = vadd.f32 %v1046, %v2351
  %v2382 = vadd.f32 %v1079, %v2364
  %v2383 = vadd.f32 %v1112, %v2377
  %v2384 = vadd.f32 %v2380, %v1462
  %v2385 = vadd.f32 %v2381, %v1463
  %v2386 = vadd.f32 %v2382, %v1464
  %v2387 = vadd.f32 %v2383, %v1465
  %v2388 = vxor.u32 %v2384, 2147483648
  %v2389 = vmul.f32 %v2388, 1.442695
  %v2390 = vpow.pop %v2389
  %v2391 = vadd.f32 %v2390, 1.0
  %v2392 = vrcp.pop %v2391
  %v2393 = vmul.f32 %v2391, %v2392
  %v2394 = vsub.f32 1.0, %v2393
  %v2395 = vmul.f32 %v2392, %v2394
  %v2396 = vadd.f32 %v2392, %v2395
  %vm2397 = vweird.f32 %v2391
  %vm2398 = vweird.f32 %v2392
  %vm2399 = vmor %vm2397, %vm2398
  %v2400 = vsel %vm2399, %v2392, %v2396
  %v2401 = vand.u32 2147483647, %v2391
  %vm2402 = vcmp.eq.f32.partialorder %v2401, 8.507059e+37
  %v2403 = vand.u32 %v2391, 2147483648
  %v2404 = vor.u32 1.1754944e-38, %v2403
  %v2405 = vsel %vm2402, %v2404, %v2400
  %v2406 = vmul.f32 1.0, %v2405
  %v2407 = vxor.u32 %v2385, 2147483648
  %v2408 = vmul.f32 %v2407, 1.442695
  %v2409 = vpow.pop %v2408
  %v2410 = vadd.f32 %v2409, 1.0
  %v2411 = vrcp.pop %v2410
  %v2412 = vmul.f32 %v2410, %v2411
  %v2413 = vsub.f32 1.0, %v2412
  %v2414 = vmul.f32 %v2411, %v2413
  %v2415 = vadd.f32 %v2411, %v2414
  %vm2416 = vweird.f32 %v2410
  %vm2417 = vweird.f32 %v2411
  %vm2418 = vmor %vm2416, %vm2417
  %v2419 = vsel %vm2418, %v2411, %v2415
  %v2420 = vand.u32 2147483647, %v2410
  %vm2421 = vcmp.eq.f32.partialorder %v2420, 8.507059e+37
  %v2422 = vand.u32 %v2410, 2147483648
  %v2423 = vor.u32 1.1754944e-38, %v2422
  %v2424 = vsel %vm2421, %v2423, %v2419
  %v2425 = vmul.f32 1.0, %v2424
  %v2426 = vtanh.pop %v2386
  %v2427 = vxor.u32 %v2387, 2147483648
  %v2428 = vmul.f32 %v2427, 1.442695
  %v2429 = vpow.pop %v2428
  %v2430 = vadd.f32 %v2429, 1.0
  %v2431 = vrcp.pop %v2430
  %v2432 = vmul.f32 %v2430, %v2431
  %v2433 = vsub.f32 1.0, %v2432
  %v2434 = vmul.f32 %v2431, %v2433
  %v2435 = vadd.f32 %v2431, %v2434
  %vm2436 = vweird.f32 %v2430
  %vm2437 = vweird.f32 %v2431
  %vm2438 = vmor %vm2436, %vm2437
  %v2439 = vsel %vm2438, %v2431, %v2435
  %v2440 = vand.u32 2147483647, %v2430
  %vm2441 = vcmp.eq.f32.partialorder %v2440, 8.507059e+37
  %v2442 = vand.u32 %v2430, 2147483648
  %v2443 = vor.u32 1.1754944e-38, %v2442
  %v2444 = vsel %vm2441, %v2443, %v2439
  %v2445 = vmul.f32 1.0, %v2444
  %v2446 = vmul.f32 %v2425, %v2156
  %v2447 = vmul.f32 %v2406, %v2426
  %v2448 = vadd.f32 %v2446, %v2447
  %v2449 = vtanh.pop %v2448
  %v2450 = vmul.f32 %v2445, %v2449
  %v2451 = vpack.c.bf16 %v2450, %v2450
  %2452 = vmatpush.bf16.msra.mxu0 %v1768
  %2453 = vmatpush.bf16.msra.mxu0 %v1764
  %2454 = vmatpush.bf16.msra.mxu0 %v1760
  %2455 = vmatpush.bf16.msra.mxu0 %v1756
  %2456 = vmatpush.bf16.msra.mxu0 %v1752
  %2457 = vmatpush.bf16.msra.mxu0 %v1748
  %2458 = vmatpush.bf16.msra.mxu0 %v1744
  %2459 = vmatpush.bf16.msra.mxu0 %v1740
  %2460 = vmatmul.bf16.gmra.mxu0 %v2451
  %v2461 = vpop.f32.mrf.mxu0
  %v2462 = vadd.f32 %v1540, %v2461
  %v2463 = vpop.f32.mrf.mxu0
  %2464 = vdwg.mxu0
  %2465 = vmatpush.bf16.msra.mxu0 %v1800
  %2466 = vmatpush.bf16.msra.mxu0 %v1796
  %2467 = vmatpush.bf16.msra.mxu0 %v1792
  %2468 = vmatpush.bf16.msra.mxu0 %v1788
  %2469 = vmatpush.bf16.msra.mxu0 %v1784
  %2470 = vmatpush.bf16.msra.mxu0 %v1780
  %2471 = vmatpush.bf16.msra.mxu0 %v1776
  %2472 = vmatpush.bf16.msra.mxu0 %v1772
  %2473 = vmatmul.bf16.gmra.mxu0 %v2327
  %v2474 = vpop.f32.mrf.mxu0
  %v2475 = vadd.f32 %v2462, %v2474
  %v2476 = vpop.f32.mrf.mxu0
  %2477 = vdwg.mxu0
  %2478 = vmatpush.bf16.msra.mxu0 %v1769
  %2479 = vmatpush.bf16.msra.mxu0 %v1765
  %2480 = vmatpush.bf16.msra.mxu0 %v1761
  %2481 = vmatpush.bf16.msra.mxu0 %v1757
  %2482 = vmatpush.bf16.msra.mxu0 %v1753
  %2483 = vmatpush.bf16.msra.mxu0 %v1749
  %2484 = vmatpush.bf16.msra.mxu0 %v1745
  %2485 = vmatpush.bf16.msra.mxu0 %v1741
  %2486 = vmatmul.bf16.gmra.mxu0 %v2451
  %v2487 = vpop.f32.mrf.mxu0
  %v2488 = vadd.f32 %v1541, %v2487
  %v2489 = vpop.f32.mrf.mxu0
  %2490 = vdwg.mxu0
  %2491 = vmatpush.bf16.msra.mxu0 %v1801
  %2492 = vmatpush.bf16.msra.mxu0 %v1797
  %2493 = vmatpush.bf16.msra.mxu0 %v1793
  %2494 = vmatpush.bf16.msra.mxu0 %v1789
  %2495 = vmatpush.bf16.msra.mxu0 %v1785
  %2496 = vmatpush.bf16.msra.mxu0 %v1781
  %2497 = vmatpush.bf16.msra.mxu0 %v1777
  %2498 = vmatpush.bf16.msra.mxu0 %v1773
  %2499 = vmatmul.bf16.gmra.mxu0 %v2327
  %v2500 = vpop.f32.mrf.mxu0
  %v2501 = vadd.f32 %v2488, %v2500
  %v2502 = vpop.f32.mrf.mxu0
  %2503 = vdwg.mxu0
  %2504 = vmatpush.bf16.msra.mxu0 %v1770
  %2505 = vmatpush.bf16.msra.mxu0 %v1766
  %2506 = vmatpush.bf16.msra.mxu0 %v1762
  %2507 = vmatpush.bf16.msra.mxu0 %v1758
  %2508 = vmatpush.bf16.msra.mxu0 %v1754
  %2509 = vmatpush.bf16.msra.mxu0 %v1750
  %2510 = vmatpush.bf16.msra.mxu0 %v1746
  %2511 = vmatpush.bf16.msra.mxu0 %v1742
  %2512 = vmatmul.bf16.gmra.mxu0 %v2451
  %v2513 = vpop.f32.mrf.mxu0
  %v2514 = vadd.f32 %v1542, %v2513
  %v2515 = vpop.f32.mrf.mxu0
  %2516 = vdwg.mxu0
  %2517 = vmatpush.bf16.msra.mxu0 %v1802
  %2518 = vmatpush.bf16.msra.mxu0 %v1798
  %2519 = vmatpush.bf16.msra.mxu0 %v1794
  %2520 = vmatpush.bf16.msra.mxu0 %v1790
  %2521 = vmatpush.bf16.msra.mxu0 %v1786
  %2522 = vmatpush.bf16.msra.mxu0 %v1782
  %2523 = vmatpush.bf16.msra.mxu0 %v1778
  %2524 = vmatpush.bf16.msra.mxu0 %v1774
  %2525 = vmatmul.bf16.gmra.mxu0 %v2327
  %v2526 = vpop.f32.mrf.mxu0
  %v2527 = vadd.f32 %v2514, %v2526
  %v2528 = vpop.f32.mrf.mxu0
  %2529 = vdwg.mxu0
  %2530 = vmatpush.bf16.msra.mxu0 %v1771
  %2531 = vmatpush.bf16.msra.mxu0 %v1767
  %2532 = vmatpush.bf16.msra.mxu0 %v1763
  %2533 = vmatpush.bf16.msra.mxu0 %v1759
  %2534 = vmatpush.bf16.msra.mxu0 %v1755
  %2535 = vmatpush.bf16.msra.mxu0 %v1751
  %2536 = vmatpush.bf16.msra.mxu0 %v1747
  %2537 = vmatpush.bf16.msra.mxu0 %v1743
  %2538 = vmatmul.bf16.gmra.mxu0 %v2451
  %v2539 = vpop.f32.mrf.mxu0
  %v2540 = vadd.f32 %v1543, %v2539
  %v2541 = vpop.f32.mrf.mxu0
  %2542 = vdwg.mxu0
  %2543 = vmatpush.bf16.msra.mxu0 %v1803
  %2544 = vmatpush.bf16.msra.mxu0 %v1799
  %2545 = vmatpush.bf16.msra.mxu0 %v1795
  %2546 = vmatpush.bf16.msra.mxu0 %v1791
  %2547 = vmatpush.bf16.msra.mxu0 %v1787
  %2548 = vmatpush.bf16.msra.mxu0 %v1783
  %2549 = vmatpush.bf16.msra.mxu0 %v1779
  %2550 = vmatpush.bf16.msra.mxu0 %v1775
  %2551 = vmatmul.bf16.gmra.mxu0 %v2327
  %v2552 = vpop.f32.mrf.mxu0
  %v2553 = vadd.f32 %v2540, %v2552
  %v2554 = vpop.f32.mrf.mxu0
  %2555 = vdwg.mxu0
  %v2556 = vxor.u32 %v2475, 2147483648
  %v2557 = vmul.f32 %v2556, 1.442695
  %v2558 = vpow.pop %v2557
  %v2559 = vadd.f32 %v2558, 1.0
  %v2560 = vrcp.pop %v2559
  %v2561 = vmul.f32 %v2559, %v2560
  %v2562 = vsub.f32 1.0, %v2561
  %v2563 = vmul.f32 %v2560, %v2562
  %v2564 = vadd.f32 %v2560, %v2563
  %vm2565 = vweird.f32 %v2559
  %vm2566 = vweird.f32 %v2560
  %vm2567 = vmor %vm2565, %vm2566
  %v2568 = vsel %vm2567, %v2560, %v2564
  %v2569 = vand.u32 2147483647, %v2559
  %vm2570 = vcmp.eq.f32.partialorder %v2569, 8.507059e+37
  %v2571 = vand.u32 %v2559, 2147483648
  %v2572 = vor.u32 1.1754944e-38, %v2571
  %v2573 = vsel %vm2570, %v2572, %v2568
  %v2574 = vmul.f32 1.0, %v2573
  %v2575 = vxor.u32 %v2501, 2147483648
  %v2576 = vmul.f32 %v2575, 1.442695
  %v2577 = vpow.pop %v2576
  %v2578 = vadd.f32 %v2577, 1.0
  %v2579 = vrcp.pop %v2578
  %v2580 = vmul.f32 %v2578, %v2579
  %v2581 = vsub.f32 1.0, %v2580
  %v2582 = vmul.f32 %v2579, %v2581
  %v2583 = vadd.f32 %v2579, %v2582
  %vm2584 = vweird.f32 %v2578
  %vm2585 = vweird.f32 %v2579
  %vm2586 = vmor %vm2584, %vm2585
  %v2587 = vsel %vm2586, %v2579, %v2583
  %v2588 = vand.u32 2147483647, %v2578
  %vm2589 = vcmp.eq.f32.partialorder %v2588, 8.507059e+37
  %v2590 = vand.u32 %v2578, 2147483648
  %v2591 = vor.u32 1.1754944e-38, %v2590
  %v2592 = vsel %vm2589, %v2591, %v2587
  %v2593 = vmul.f32 1.0, %v2592
  %v2594 = vtanh.pop %v2527
  %v2595 = vxor.u32 %v2553, 2147483648
  %v2596 = vmul.f32 %v2595, 1.442695
  %v2597 = vpow.pop %v2596
  %v2598 = vadd.f32 %v2597, 1.0
  %v2599 = vrcp.pop %v2598
  %v2600 = vmul.f32 %v2598, %v2599
  %v2601 = vsub.f32 1.0, %v2600
  %v2602 = vmul.f32 %v2599, %v2601
  %v2603 = vadd.f32 %v2599, %v2602
  %vm2604 = vweird.f32 %v2598
  %vm2605 = vweird.f32 %v2599
  %vm2606 = vmor %vm2604, %vm2605
  %v2607 = vsel %vm2606, %v2599, %v2603
  %v2608 = vand.u32 2147483647, %v2598
  %vm2609 = vcmp.eq.f32.partialorder %v2608, 8.507059e+37
  %v2610 = vand.u32 %v2598, 2147483648
  %v2611 = vor.u32 1.1754944e-38, %v2610
  %v2612 = vsel %vm2609, %v2611, %v2607
  %v2613 = vmul.f32 1.0, %v2612
  %v2614 = vmul.f32 %v2593, %v2324
  %v2615 = vmul.f32 %v2574, %v2594
  %v2616 = vadd.f32 %v2614, %v2615
  %v2617 = vtanh.pop %v2616
  %v2618 = vmul.f32 %v2613, %v2617
  %v2619 = vpack.c.bf16 %v2618, %v2618
  %2620 = vmatpush.bf16.msra.mxu0 %v1369
  %2621 = vmatpush.bf16.msra.mxu0 %v1365
  %2622 = vmatpush.bf16.msra.mxu0 %v1361
  %2623 = vmatpush.bf16.msra.mxu0 %v1357
  %2624 = vmatpush.bf16.msra.mxu0 %v1353
  %2625 = vmatpush.bf16.msra.mxu0 %v1349
  %2626 = vmatpush.bf16.msra.mxu0 %v1345
  %2627 = vmatpush.bf16.msra.mxu0 %v1341
  %2628 = vmatmul.bf16.gmra.mxu0 %v2451
  %v2629 = vpop.f32.mrf.mxu0
  %v2630 = vadd.f32 0.0, %v2629
  %v2631 = vpop.f32.mrf.mxu0
  %2632 = vdwg.mxu0
  %2633 = vmatpush.bf16.msra.mxu0 %v1370
  %2634 = vmatpush.bf16.msra.mxu0 %v1366
  %2635 = vmatpush.bf16.msra.mxu0 %v1362
  %2636 = vmatpush.bf16.msra.mxu0 %v1358
  %2637 = vmatpush.bf16.msra.mxu0 %v1354
  %2638 = vmatpush.bf16.msra.mxu0 %v1350
  %2639 = vmatpush.bf16.msra.mxu0 %v1346
  %2640 = vmatpush.bf16.msra.mxu0 %v1342
  %2641 = vmatmul.bf16.gmra.mxu0 %v2451
  %v2642 = vpop.f32.mrf.mxu0
  %v2643 = vadd.f32 0.0, %v2642
  %v2644 = vpop.f32.mrf.mxu0
  %2645 = vdwg.mxu0
  %2646 = vmatpush.bf16.msra.mxu0 %v1371
  %2647 = vmatpush.bf16.msra.mxu0 %v1367
  %2648 = vmatpush.bf16.msra.mxu0 %v1363
  %2649 = vmatpush.bf16.msra.mxu0 %v1359
  %2650 = vmatpush.bf16.msra.mxu0 %v1355
  %2651 = vmatpush.bf16.msra.mxu0 %v1351
  %2652 = vmatpush.bf16.msra.mxu0 %v1347
  %2653 = vmatpush.bf16.msra.mxu0 %v1343
  %2654 = vmatmul.bf16.gmra.mxu0 %v2451
  %v2655 = vpop.f32.mrf.mxu0
  %v2656 = vadd.f32 0.0, %v2655
  %v2657 = vpop.f32.mrf.mxu0
  %2658 = vdwg.mxu0
  %2659 = vmatpush.bf16.msra.mxu0 %v1372
  %2660 = vmatpush.bf16.msra.mxu0 %v1368
  %2661 = vmatpush.bf16.msra.mxu0 %v1364
  %2662 = vmatpush.bf16.msra.mxu0 %v1360
  %2663 = vmatpush.bf16.msra.mxu0 %v1356
  %2664 = vmatpush.bf16.msra.mxu0 %v1352
  %2665 = vmatpush.bf16.msra.mxu0 %v1348
  %2666 = vmatpush.bf16.msra.mxu0 %v1344
  %2667 = vmatmul.bf16.gmra.mxu0 %v2451
  %v2668 = vpop.f32.mrf.mxu0
  %v2669 = vadd.f32 0.0, %v2668
  %v2670 = vpop.f32.mrf.mxu0
  %2671 = vdwg.mxu0
  %v2672 = vadd.f32 %v1015, %v2630
  %v2673 = vadd.f32 %v1048, %v2643
  %v2674 = vadd.f32 %v1081, %v2656
  %v2675 = vadd.f32 %v1114, %v2669
  %v2676 = vadd.f32 %v2672, %v1462
  %v2677 = vadd.f32 %v2673, %v1463
  %v2678 = vadd.f32 %v2674, %v1464
  %v2679 = vadd.f32 %v2675, %v1465
  %v2680 = vxor.u32 %v2676, 2147483648
  %v2681 = vmul.f32 %v2680, 1.442695
  %v2682 = vpow.pop %v2681
  %v2683 = vadd.f32 %v2682, 1.0
  %v2684 = vrcp.pop %v2683
  %v2685 = vmul.f32 %v2683, %v2684
  %v2686 = vsub.f32 1.0, %v2685
  %v2687 = vmul.f32 %v2684, %v2686
  %v2688 = vadd.f32 %v2684, %v2687
  %vm2689 = vweird.f32 %v2683
  %vm2690 = vweird.f32 %v2684
  %vm2691 = vmor %vm2689, %vm2690
  %v2692 = vsel %vm2691, %v2684, %v2688
  %v2693 = vand.u32 2147483647, %v2683
  %vm2694 = vcmp.eq.f32.partialorder %v2693, 8.507059e+37
  %v2695 = vand.u32 %v2683, 2147483648
  %v2696 = vor.u32 1.1754944e-38, %v2695
  %v2697 = vsel %vm2694, %v2696, %v2692
  %v2698 = vmul.f32 1.0, %v2697
  %v2699 = vxor.u32 %v2677, 2147483648
  %v2700 = vmul.f32 %v2699, 1.442695
  %v2701 = vpow.pop %v2700
  %v2702 = vadd.f32 %v2701, 1.0
  %v2703 = vrcp.pop %v2702
  %v2704 = vmul.f32 %v2702, %v2703
  %v2705 = vsub.f32 1.0, %v2704
  %v2706 = vmul.f32 %v2703, %v2705
  %v2707 = vadd.f32 %v2703, %v2706
  %vm2708 = vweird.f32 %v2702
  %vm2709 = vweird.f32 %v2703
  %vm2710 = vmor %vm2708, %vm2709
  %v2711 = vsel %vm2710, %v2703, %v2707
  %v2712 = vand.u32 2147483647, %v2702
  %vm2713 = vcmp.eq.f32.partialorder %v2712, 8.507059e+37
  %v2714 = vand.u32 %v2702, 2147483648
  %v2715 = vor.u32 1.1754944e-38, %v2714
  %v2716 = vsel %vm2713, %v2715, %v2711
  %v2717 = vmul.f32 1.0, %v2716
  %v2718 = vtanh.pop %v2678
  %v2719 = vxor.u32 %v2679, 2147483648
  %v2720 = vmul.f32 %v2719, 1.442695
  %v2721 = vpow.pop %v2720
  %v2722 = vadd.f32 %v2721, 1.0
  %v2723 = vrcp.pop %v2722
  %v2724 = vmul.f32 %v2722, %v2723
  %v2725 = vsub.f32 1.0, %v2724
  %v2726 = vmul.f32 %v2723, %v2725
  %v2727 = vadd.f32 %v2723, %v2726
  %vm2728 = vweird.f32 %v2722
  %vm2729 = vweird.f32 %v2723
  %vm2730 = vmor %vm2728, %vm2729
  %v2731 = vsel %vm2730, %v2723, %v2727
  %v2732 = vand.u32 2147483647, %v2722
  %vm2733 = vcmp.eq.f32.partialorder %v2732, 8.507059e+37
  %v2734 = vand.u32 %v2722, 2147483648
  %v2735 = vor.u32 1.1754944e-38, %v2734
  %v2736 = vsel %vm2733, %v2735, %v2731
  %v2737 = vmul.f32 1.0, %v2736
  %v2738 = vmul.f32 %v2717, %v2448
  %v2739 = vmul.f32 %v2698, %v2718
  %v2740 = vadd.f32 %v2738, %v2739
  %v2741 = vtanh.pop %v2740
  %v2742 = vmul.f32 %v2737, %v2741
  %v2743 = vpack.c.bf16 %v2742, %v2742
  %2744 = vmatpush.bf16.msra.mxu0 %v1768
  %2745 = vmatpush.bf16.msra.mxu0 %v1764
  %2746 = vmatpush.bf16.msra.mxu0 %v1760
  %2747 = vmatpush.bf16.msra.mxu0 %v1756
  %2748 = vmatpush.bf16.msra.mxu0 %v1752
  %2749 = vmatpush.bf16.msra.mxu0 %v1748
  %2750 = vmatpush.bf16.msra.mxu0 %v1744
  %2751 = vmatpush.bf16.msra.mxu0 %v1740
  %2752 = vmatmul.bf16.gmra.mxu0 %v2743
  %v2753 = vpop.f32.mrf.mxu0
  %v2754 = vadd.f32 %v1540, %v2753
  %v2755 = vpop.f32.mrf.mxu0
  %2756 = vdwg.mxu0
  %2757 = vmatpush.bf16.msra.mxu0 %v1800
  %2758 = vmatpush.bf16.msra.mxu0 %v1796
  %2759 = vmatpush.bf16.msra.mxu0 %v1792
  %2760 = vmatpush.bf16.msra.mxu0 %v1788
  %2761 = vmatpush.bf16.msra.mxu0 %v1784
  %2762 = vmatpush.bf16.msra.mxu0 %v1780
  %2763 = vmatpush.bf16.msra.mxu0 %v1776
  %2764 = vmatpush.bf16.msra.mxu0 %v1772
  %2765 = vmatmul.bf16.gmra.mxu0 %v2619
  %v2766 = vpop.f32.mrf.mxu0
  %v2767 = vadd.f32 %v2754, %v2766
  %v2768 = vpop.f32.mrf.mxu0
  %2769 = vdwg.mxu0
  %2770 = vmatpush.bf16.msra.mxu0 %v1769
  %2771 = vmatpush.bf16.msra.mxu0 %v1765
  %2772 = vmatpush.bf16.msra.mxu0 %v1761
  %2773 = vmatpush.bf16.msra.mxu0 %v1757
  %2774 = vmatpush.bf16.msra.mxu0 %v1753
  %2775 = vmatpush.bf16.msra.mxu0 %v1749
  %2776 = vmatpush.bf16.msra.mxu0 %v1745
  %2777 = vmatpush.bf16.msra.mxu0 %v1741
  %2778 = vmatmul.bf16.gmra.mxu0 %v2743
  %v2779 = vpop.f32.mrf.mxu0
  %v2780 = vadd.f32 %v1541, %v2779
  %v2781 = vpop.f32.mrf.mxu0
  %2782 = vdwg.mxu0
  %2783 = vmatpush.bf16.msra.mxu0 %v1801
  %2784 = vmatpush.bf16.msra.mxu0 %v1797
  %2785 = vmatpush.bf16.msra.mxu0 %v1793
  %2786 = vmatpush.bf16.msra.mxu0 %v1789
  %2787 = vmatpush.bf16.msra.mxu0 %v1785
  %2788 = vmatpush.bf16.msra.mxu0 %v1781
  %2789 = vmatpush.bf16.msra.mxu0 %v1777
  %2790 = vmatpush.bf16.msra.mxu0 %v1773
  %2791 = vmatmul.bf16.gmra.mxu0 %v2619
  %v2792 = vpop.f32.mrf.mxu0
  %v2793 = vadd.f32 %v2780, %v2792
  %v2794 = vpop.f32.mrf.mxu0
  %2795 = vdwg.mxu0
  %2796 = vmatpush.bf16.msra.mxu0 %v1770
  %2797 = vmatpush.bf16.msra.mxu0 %v1766
  %2798 = vmatpush.bf16.msra.mxu0 %v1762
  %2799 = vmatpush.bf16.msra.mxu0 %v1758
  %2800 = vmatpush.bf16.msra.mxu0 %v1754
  %2801 = vmatpush.bf16.msra.mxu0 %v1750
  %2802 = vmatpush.bf16.msra.mxu0 %v1746
  %2803 = vmatpush.bf16.msra.mxu0 %v1742
  %2804 = vmatmul.bf16.gmra.mxu0 %v2743
  %v2805 = vpop.f32.mrf.mxu0
  %v2806 = vadd.f32 %v1542, %v2805
  %v2807 = vpop.f32.mrf.mxu0
  %2808 = vdwg.mxu0
  %2809 = vmatpush.bf16.msra.mxu0 %v1802
  %2810 = vmatpush.bf16.msra.mxu0 %v1798
  %2811 = vmatpush.bf16.msra.mxu0 %v1794
  %2812 = vmatpush.bf16.msra.mxu0 %v1790
  %2813 = vmatpush.bf16.msra.mxu0 %v1786
  %2814 = vmatpush.bf16.msra.mxu0 %v1782
  %2815 = vmatpush.bf16.msra.mxu0 %v1778
  %2816 = vmatpush.bf16.msra.mxu0 %v1774
  %2817 = vmatmul.bf16.gmra.mxu0 %v2619
  %v2818 = vpop.f32.mrf.mxu0
  %v2819 = vadd.f32 %v2806, %v2818
  %v2820 = vpop.f32.mrf.mxu0
  %2821 = vdwg.mxu0
  %2822 = vmatpush.bf16.msra.mxu0 %v1771
  %2823 = vmatpush.bf16.msra.mxu0 %v1767
  %2824 = vmatpush.bf16.msra.mxu0 %v1763
  %2825 = vmatpush.bf16.msra.mxu0 %v1759
  %2826 = vmatpush.bf16.msra.mxu0 %v1755
  %2827 = vmatpush.bf16.msra.mxu0 %v1751
  %2828 = vmatpush.bf16.msra.mxu0 %v1747
  %2829 = vmatpush.bf16.msra.mxu0 %v1743
  %2830 = vmatmul.bf16.gmra.mxu0 %v2743
  %v2831 = vpop.f32.mrf.mxu0
  %v2832 = vadd.f32 %v1543, %v2831
  %v2833 = vpop.f32.mrf.mxu0
  %2834 = vdwg.mxu0
  %2835 = vmatpush.bf16.msra.mxu0 %v1803
  %2836 = vmatpush.bf16.msra.mxu0 %v1799
  %2837 = vmatpush.bf16.msra.mxu0 %v1795
  %2838 = vmatpush.bf16.msra.mxu0 %v1791
  %2839 = vmatpush.bf16.msra.mxu0 %v1787
  %2840 = vmatpush.bf16.msra.mxu0 %v1783
  %2841 = vmatpush.bf16.msra.mxu0 %v1779
  %2842 = vmatpush.bf16.msra.mxu0 %v1775
  %2843 = vmatmul.bf16.gmra.mxu0 %v2619
  %v2844 = vpop.f32.mrf.mxu0
  %v2845 = vadd.f32 %v2832, %v2844
  %v2846 = vpop.f32.mrf.mxu0
  %2847 = vdwg.mxu0
  %v2848 = vxor.u32 %v2767, 2147483648
  %v2849 = vmul.f32 %v2848, 1.442695
  %v2850 = vpow.pop %v2849
  %v2851 = vadd.f32 %v2850, 1.0
  %v2852 = vrcp.pop %v2851
  %v2853 = vmul.f32 %v2851, %v2852
  %v2854 = vsub.f32 1.0, %v2853
  %v2855 = vmul.f32 %v2852, %v2854
  %v2856 = vadd.f32 %v2852, %v2855
  %vm2857 = vweird.f32 %v2851
  %vm2858 = vweird.f32 %v2852
  %vm2859 = vmor %vm2857, %vm2858
  %v2860 = vsel %vm2859, %v2852, %v2856
  %v2861 = vand.u32 2147483647, %v2851
  %vm2862 = vcmp.eq.f32.partialorder %v2861, 8.507059e+37
  %v2863 = vand.u32 %v2851, 2147483648
  %v2864 = vor.u32 1.1754944e-38, %v2863
  %v2865 = vsel %vm2862, %v2864, %v2860
  %v2866 = vmul.f32 1.0, %v2865
  %v2867 = vxor.u32 %v2793, 2147483648
  %v2868 = vmul.f32 %v2867, 1.442695
  %v2869 = vpow.pop %v2868
  %v2870 = vadd.f32 %v2869, 1.0
  %v2871 = vrcp.pop %v2870
  %v2872 = vmul.f32 %v2870, %v2871
  %v2873 = vsub.f32 1.0, %v2872
  %v2874 = vmul.f32 %v2871, %v2873
  %v2875 = vadd.f32 %v2871, %v2874
  %vm2876 = vweird.f32 %v2870
  %vm2877 = vweird.f32 %v2871
  %vm2878 = vmor %vm2876, %vm2877
  %v2879 = vsel %vm2878, %v2871, %v2875
  %v2880 = vand.u32 2147483647, %v2870
  %vm2881 = vcmp.eq.f32.partialorder %v2880, 8.507059e+37
  %v2882 = vand.u32 %v2870, 2147483648
  %v2883 = vor.u32 1.1754944e-38, %v2882
  %v2884 = vsel %vm2881, %v2883, %v2879
  %v2885 = vmul.f32 1.0, %v2884
  %v2886 = vtanh.pop %v2819
  %v2887 = vxor.u32 %v2845, 2147483648
  %v2888 = vmul.f32 %v2887, 1.442695
  %v2889 = vpow.pop %v2888
  %v2890 = vadd.f32 %v2889, 1.0
  %v2891 = vrcp.pop %v2890
  %v2892 = vmul.f32 %v2890, %v2891
  %v2893 = vsub.f32 1.0, %v2892
  %v2894 = vmul.f32 %v2891, %v2893
  %v2895 = vadd.f32 %v2891, %v2894
  %vm2896 = vweird.f32 %v2890
  %vm2897 = vweird.f32 %v2891
  %vm2898 = vmor %vm2896, %vm2897
  %v2899 = vsel %vm2898, %v2891, %v2895
  %v2900 = vand.u32 2147483647, %v2890
  %vm2901 = vcmp.eq.f32.partialorder %v2900, 8.507059e+37
  %v2902 = vand.u32 %v2890, 2147483648
  %v2903 = vor.u32 1.1754944e-38, %v2902
  %v2904 = vsel %vm2901, %v2903, %v2899
  %v2905 = vmul.f32 1.0, %v2904
  %v2906 = vmul.f32 %v2885, %v2616
  %v2907 = vmul.f32 %v2866, %v2886
  %v2908 = vadd.f32 %v2906, %v2907
  %v2909 = vtanh.pop %v2908
  %v2910 = vmul.f32 %v2905, %v2909
  %v2911 = vpack.c.bf16 %v2910, %v2910
  %2912 = vmatpush.bf16.msra.mxu0 %v1369
  %2913 = vmatpush.bf16.msra.mxu0 %v1365
  %2914 = vmatpush.bf16.msra.mxu0 %v1361
  %2915 = vmatpush.bf16.msra.mxu0 %v1357
  %2916 = vmatpush.bf16.msra.mxu0 %v1353
  %2917 = vmatpush.bf16.msra.mxu0 %v1349
  %2918 = vmatpush.bf16.msra.mxu0 %v1345
  %2919 = vmatpush.bf16.msra.mxu0 %v1341
  %2920 = vmatmul.bf16.gmra.mxu0 %v2743
  %v2921 = vpop.f32.mrf.mxu0
  %v2922 = vadd.f32 0.0, %v2921
  %v2923 = vpop.f32.mrf.mxu0
  %2924 = vdwg.mxu0
  %2925 = vmatpush.bf16.msra.mxu0 %v1370
  %2926 = vmatpush.bf16.msra.mxu0 %v1366
  %2927 = vmatpush.bf16.msra.mxu0 %v1362
  %2928 = vmatpush.bf16.msra.mxu0 %v1358
  %2929 = vmatpush.bf16.msra.mxu0 %v1354
  %2930 = vmatpush.bf16.msra.mxu0 %v1350
  %2931 = vmatpush.bf16.msra.mxu0 %v1346
  %2932 = vmatpush.bf16.msra.mxu0 %v1342
  %2933 = vmatmul.bf16.gmra.mxu0 %v2743
  %v2934 = vpop.f32.mrf.mxu0
  %v2935 = vadd.f32 0.0, %v2934
  %v2936 = vpop.f32.mrf.mxu0
  %2937 = vdwg.mxu0
  %2938 = vmatpush.bf16.msra.mxu0 %v1371
  %2939 = vmatpush.bf16.msra.mxu0 %v1367
  %2940 = vmatpush.bf16.msra.mxu0 %v1363
  %2941 = vmatpush.bf16.msra.mxu0 %v1359
  %2942 = vmatpush.bf16.msra.mxu0 %v1355
  %2943 = vmatpush.bf16.msra.mxu0 %v1351
  %2944 = vmatpush.bf16.msra.mxu0 %v1347
  %2945 = vmatpush.bf16.msra.mxu0 %v1343
  %2946 = vmatmul.bf16.gmra.mxu0 %v2743
  %v2947 = vpop.f32.mrf.mxu0
  %v2948 = vadd.f32 0.0, %v2947
  %v2949 = vpop.f32.mrf.mxu0
  %2950 = vdwg.mxu0
  %2951 = vmatpush.bf16.msra.mxu0 %v1372
  %2952 = vmatpush.bf16.msra.mxu0 %v1368
  %2953 = vmatpush.bf16.msra.mxu0 %v1364
  %2954 = vmatpush.bf16.msra.mxu0 %v1360
  %2955 = vmatpush.bf16.msra.mxu0 %v1356
  %2956 = vmatpush.bf16.msra.mxu0 %v1352
  %2957 = vmatpush.bf16.msra.mxu0 %v1348
  %2958 = vmatpush.bf16.msra.mxu0 %v1344
  %2959 = vmatmul.bf16.gmra.mxu0 %v2743
  %v2960 = vpop.f32.mrf.mxu0
  %v2961 = vadd.f32 0.0, %v2960
  %v2962 = vpop.f32.mrf.mxu0
  %2963 = vdwg.mxu0
  %v2964 = vadd.f32 %v1018, %v2922
  %v2965 = vadd.f32 %v1051, %v2935
  %v2966 = vadd.f32 %v1084, %v2948
  %v2967 = vadd.f32 %v1117, %v2961
  %v2968 = vadd.f32 %v2964, %v1462
  %v2969 = vadd.f32 %v2965, %v1463
  %v2970 = vadd.f32 %v2966, %v1464
  %v2971 = vadd.f32 %v2967, %v1465
  %v2972 = vxor.u32 %v2968, 2147483648
  %v2973 = vmul.f32 %v2972, 1.442695
  %v2974 = vpow.pop %v2973
  %v2975 = vadd.f32 %v2974, 1.0
  %v2976 = vrcp.pop %v2975
  %v2977 = vmul.f32 %v2975, %v2976
  %v2978 = vsub.f32 1.0, %v2977
  %v2979 = vmul.f32 %v2976, %v2978
  %v2980 = vadd.f32 %v2976, %v2979
  %vm2981 = vweird.f32 %v2975
  %vm2982 = vweird.f32 %v2976
  %vm2983 = vmor %vm2981, %vm2982
  %v2984 = vsel %vm2983, %v2976, %v2980
  %v2985 = vand.u32 2147483647, %v2975
  %vm2986 = vcmp.eq.f32.partialorder %v2985, 8.507059e+37
  %v2987 = vand.u32 %v2975, 2147483648
  %v2988 = vor.u32 1.1754944e-38, %v2987
  %v2989 = vsel %vm2986, %v2988, %v2984
  %v2990 = vmul.f32 1.0, %v2989
  %v2991 = vxor.u32 %v2969, 2147483648
  %v2992 = vmul.f32 %v2991, 1.442695
  %v2993 = vpow.pop %v2992
  %v2994 = vadd.f32 %v2993, 1.0
  %v2995 = vrcp.pop %v2994
  %v2996 = vmul.f32 %v2994, %v2995
  %v2997 = vsub.f32 1.0, %v2996
  %v2998 = vmul.f32 %v2995, %v2997
  %v2999 = vadd.f32 %v2995, %v2998
  %vm3000 = vweird.f32 %v2994
  %vm3001 = vweird.f32 %v2995
  %vm3002 = vmor %vm3000, %vm3001
  %v3003 = vsel %vm3002, %v2995, %v2999
  %v3004 = vand.u32 2147483647, %v2994
  %vm3005 = vcmp.eq.f32.partialorder %v3004, 8.507059e+37
  %v3006 = vand.u32 %v2994, 2147483648
  %v3007 = vor.u32 1.1754944e-38, %v3006
  %v3008 = vsel %vm3005, %v3007, %v3003
  %v3009 = vmul.f32 1.0, %v3008
  %v3010 = vtanh.pop %v2970
  %v3011 = vxor.u32 %v2971, 2147483648
  %v3012 = vmul.f32 %v3011, 1.442695
  %v3013 = vpow.pop %v3012
  %v3014 = vadd.f32 %v3013, 1.0
  %v3015 = vrcp.pop %v3014
  %v3016 = vmul.f32 %v3014, %v3015
  %v3017 = vsub.f32 1.0, %v3016
  %v3018 = vmul.f32 %v3015, %v3017
  %v3019 = vadd.f32 %v3015, %v3018
  %vm3020 = vweird.f32 %v3014
  %vm3021 = vweird.f32 %v3015
  %vm3022 = vmor %vm3020, %vm3021
  %v3023 = vsel %vm3022, %v3015, %v3019
  %v3024 = vand.u32 2147483647, %v3014
  %vm3025 = vcmp.eq.f32.partialorder %v3024, 8.507059e+37
  %v3026 = vand.u32 %v3014, 2147483648
  %v3027 = vor.u32 1.1754944e-38, %v3026
  %v3028 = vsel %vm3025, %v3027, %v3023
  %v3029 = vmul.f32 1.0, %v3028
  %v3030 = vmul.f32 %v3009, %v2740
  %v3031 = vmul.f32 %v2990, %v3010
  %v3032 = vadd.f32 %v3030, %v3031
  %v3033 = vtanh.pop %v3032
  %v3034 = vmul.f32 %v3029, %v3033
  %v3035 = vpack.c.bf16 %v3034, %v3034
  %3036 = vmatpush.bf16.msra.mxu0 %v1768
  %3037 = vmatpush.bf16.msra.mxu0 %v1764
  %3038 = vmatpush.bf16.msra.mxu0 %v1760
  %3039 = vmatpush.bf16.msra.mxu0 %v1756
  %3040 = vmatpush.bf16.msra.mxu0 %v1752
  %3041 = vmatpush.bf16.msra.mxu0 %v1748
  %3042 = vmatpush.bf16.msra.mxu0 %v1744
  %3043 = vmatpush.bf16.msra.mxu0 %v1740
  %3044 = vmatmul.bf16.gmra.mxu0 %v3035
  %v3045 = vpop.f32.mrf.mxu0
  %v3046 = vadd.f32 %v1540, %v3045
  %v3047 = vpop.f32.mrf.mxu0
  %3048 = vdwg.mxu0
  %3049 = vmatpush.bf16.msra.mxu0 %v1800
  %3050 = vmatpush.bf16.msra.mxu0 %v1796
  %3051 = vmatpush.bf16.msra.mxu0 %v1792
  %3052 = vmatpush.bf16.msra.mxu0 %v1788
  %3053 = vmatpush.bf16.msra.mxu0 %v1784
  %3054 = vmatpush.bf16.msra.mxu0 %v1780
  %3055 = vmatpush.bf16.msra.mxu0 %v1776
  %3056 = vmatpush.bf16.msra.mxu0 %v1772
  %3057 = vmatmul.bf16.gmra.mxu0 %v2911
  %v3058 = vpop.f32.mrf.mxu0
  %v3059 = vadd.f32 %v3046, %v3058
  %v3060 = vpop.f32.mrf.mxu0
  %3061 = vdwg.mxu0
  %3062 = vmatpush.bf16.msra.mxu0 %v1769
  %3063 = vmatpush.bf16.msra.mxu0 %v1765
  %3064 = vmatpush.bf16.msra.mxu0 %v1761
  %3065 = vmatpush.bf16.msra.mxu0 %v1757
  %3066 = vmatpush.bf16.msra.mxu0 %v1753
  %3067 = vmatpush.bf16.msra.mxu0 %v1749
  %3068 = vmatpush.bf16.msra.mxu0 %v1745
  %3069 = vmatpush.bf16.msra.mxu0 %v1741
  %3070 = vmatmul.bf16.gmra.mxu0 %v3035
  %v3071 = vpop.f32.mrf.mxu0
  %v3072 = vadd.f32 %v1541, %v3071
  %v3073 = vpop.f32.mrf.mxu0
  %3074 = vdwg.mxu0
  %3075 = vmatpush.bf16.msra.mxu0 %v1801
  %3076 = vmatpush.bf16.msra.mxu0 %v1797
  %3077 = vmatpush.bf16.msra.mxu0 %v1793
  %3078 = vmatpush.bf16.msra.mxu0 %v1789
  %3079 = vmatpush.bf16.msra.mxu0 %v1785
  %3080 = vmatpush.bf16.msra.mxu0 %v1781
  %3081 = vmatpush.bf16.msra.mxu0 %v1777
  %3082 = vmatpush.bf16.msra.mxu0 %v1773
  %3083 = vmatmul.bf16.gmra.mxu0 %v2911
  %v3084 = vpop.f32.mrf.mxu0
  %v3085 = vadd.f32 %v3072, %v3084
  %v3086 = vpop.f32.mrf.mxu0
  %3087 = vdwg.mxu0
  %3088 = vmatpush.bf16.msra.mxu0 %v1770
  %3089 = vmatpush.bf16.msra.mxu0 %v1766
  %3090 = vmatpush.bf16.msra.mxu0 %v1762
  %3091 = vmatpush.bf16.msra.mxu0 %v1758
  %3092 = vmatpush.bf16.msra.mxu0 %v1754
  %3093 = vmatpush.bf16.msra.mxu0 %v1750
  %3094 = vmatpush.bf16.msra.mxu0 %v1746
  %3095 = vmatpush.bf16.msra.mxu0 %v1742
  %3096 = vmatmul.bf16.gmra.mxu0 %v3035
  %v3097 = vpop.f32.mrf.mxu0
  %v3098 = vadd.f32 %v1542, %v3097
  %v3099 = vpop.f32.mrf.mxu0
  %3100 = vdwg.mxu0
  %3101 = vmatpush.bf16.msra.mxu0 %v1802
  %3102 = vmatpush.bf16.msra.mxu0 %v1798
  %3103 = vmatpush.bf16.msra.mxu0 %v1794
  %3104 = vmatpush.bf16.msra.mxu0 %v1790
  %3105 = vmatpush.bf16.msra.mxu0 %v1786
  %3106 = vmatpush.bf16.msra.mxu0 %v1782
  %3107 = vmatpush.bf16.msra.mxu0 %v1778
  %3108 = vmatpush.bf16.msra.mxu0 %v1774
  %3109 = vmatmul.bf16.gmra.mxu0 %v2911
  %v3110 = vpop.f32.mrf.mxu0
  %v3111 = vadd.f32 %v3098, %v3110
  %v3112 = vpop.f32.mrf.mxu0
  %3113 = vdwg.mxu0
  %3114 = vmatpush.bf16.msra.mxu0 %v1771
  %3115 = vmatpush.bf16.msra.mxu0 %v1767
  %3116 = vmatpush.bf16.msra.mxu0 %v1763
  %3117 = vmatpush.bf16.msra.mxu0 %v1759
  %3118 = vmatpush.bf16.msra.mxu0 %v1755
  %3119 = vmatpush.bf16.msra.mxu0 %v1751
  %3120 = vmatpush.bf16.msra.mxu0 %v1747
  %3121 = vmatpush.bf16.msra.mxu0 %v1743
  %3122 = vmatmul.bf16.gmra.mxu0 %v3035
  %v3123 = vpop.f32.mrf.mxu0
  %v3124 = vadd.f32 %v1543, %v3123
  %v3125 = vpop.f32.mrf.mxu0
  %3126 = vdwg.mxu0
  %3127 = vmatpush.bf16.msra.mxu0 %v1803
  %3128 = vmatpush.bf16.msra.mxu0 %v1799
  %3129 = vmatpush.bf16.msra.mxu0 %v1795
  %3130 = vmatpush.bf16.msra.mxu0 %v1791
  %3131 = vmatpush.bf16.msra.mxu0 %v1787
  %3132 = vmatpush.bf16.msra.mxu0 %v1783
  %3133 = vmatpush.bf16.msra.mxu0 %v1779
  %3134 = vmatpush.bf16.msra.mxu0 %v1775
  %3135 = vmatmul.bf16.gmra.mxu0 %v2911
  %v3136 = vpop.f32.mrf.mxu0
  %v3137 = vadd.f32 %v3124, %v3136
  %v3138 = vpop.f32.mrf.mxu0
  %3139 = vdwg.mxu0
  %v3140 = vxor.u32 %v3059, 2147483648
  %v3141 = vmul.f32 %v3140, 1.442695
  %v3142 = vpow.pop %v3141
  %v3143 = vadd.f32 %v3142, 1.0
  %v3144 = vrcp.pop %v3143
  %v3145 = vmul.f32 %v3143, %v3144
  %v3146 = vsub.f32 1.0, %v3145
  %v3147 = vmul.f32 %v3144, %v3146
  %v3148 = vadd.f32 %v3144, %v3147
  %vm3149 = vweird.f32 %v3143
  %vm3150 = vweird.f32 %v3144
  %vm3151 = vmor %vm3149, %vm3150
  %v3152 = vsel %vm3151, %v3144, %v3148
  %v3153 = vand.u32 2147483647, %v3143
  %vm3154 = vcmp.eq.f32.partialorder %v3153, 8.507059e+37
  %v3155 = vand.u32 %v3143, 2147483648
  %v3156 = vor.u32 1.1754944e-38, %v3155
  %v3157 = vsel %vm3154, %v3156, %v3152
  %v3158 = vmul.f32 1.0, %v3157
  %v3159 = vxor.u32 %v3085, 2147483648
  %v3160 = vmul.f32 %v3159, 1.442695
  %v3161 = vpow.pop %v3160
  %v3162 = vadd.f32 %v3161, 1.0
  %v3163 = vrcp.pop %v3162
  %v3164 = vmul.f32 %v3162, %v3163
  %v3165 = vsub.f32 1.0, %v3164
  %v3166 = vmul.f32 %v3163, %v3165
  %v3167 = vadd.f32 %v3163, %v3166
  %vm3168 = vweird.f32 %v3162
  %vm3169 = vweird.f32 %v3163
  %vm3170 = vmor %vm3168, %vm3169
  %v3171 = vsel %vm3170, %v3163, %v3167
  %v3172 = vand.u32 2147483647, %v3162
  %vm3173 = vcmp.eq.f32.partialorder %v3172, 8.507059e+37
  %v3174 = vand.u32 %v3162, 2147483648
  %v3175 = vor.u32 1.1754944e-38, %v3174
  %v3176 = vsel %vm3173, %v3175, %v3171
  %v3177 = vmul.f32 1.0, %v3176
  %v3178 = vtanh.pop %v3111
  %v3179 = vxor.u32 %v3137, 2147483648
  %v3180 = vmul.f32 %v3179, 1.442695
  %v3181 = vpow.pop %v3180
  %v3182 = vadd.f32 %v3181, 1.0
  %v3183 = vrcp.pop %v3182
  %v3184 = vmul.f32 %v3182, %v3183
  %v3185 = vsub.f32 1.0, %v3184
  %v3186 = vmul.f32 %v3183, %v3185
  %v3187 = vadd.f32 %v3183, %v3186
  %vm3188 = vweird.f32 %v3182
  %vm3189 = vweird.f32 %v3183
  %vm3190 = vmor %vm3188, %vm3189
  %v3191 = vsel %vm3190, %v3183, %v3187
  %v3192 = vand.u32 2147483647, %v3182
  %vm3193 = vcmp.eq.f32.partialorder %v3192, 8.507059e+37
  %v3194 = vand.u32 %v3182, 2147483648
  %v3195 = vor.u32 1.1754944e-38, %v3194
  %v3196 = vsel %vm3193, %v3195, %v3191
  %v3197 = vmul.f32 1.0, %v3196
  %v3198 = vmul.f32 %v3177, %v2908
  %v3199 = vmul.f32 %v3158, %v3178
  %v3200 = vadd.f32 %v3198, %v3199
  %v3201 = vtanh.pop %v3200
  %v3202 = vmul.f32 %v3197, %v3201
  %v3203 = vpack.c.bf16 %v3202, %v3202
  %3204 = vmatpush.bf16.msra.mxu0 %v1369
  %3205 = vmatpush.bf16.msra.mxu0 %v1365
  %3206 = vmatpush.bf16.msra.mxu0 %v1361
  %3207 = vmatpush.bf16.msra.mxu0 %v1357
  %3208 = vmatpush.bf16.msra.mxu0 %v1353
  %3209 = vmatpush.bf16.msra.mxu0 %v1349
  %3210 = vmatpush.bf16.msra.mxu0 %v1345
  %3211 = vmatpush.bf16.msra.mxu0 %v1341
  %3212 = vmatmul.bf16.gmra.mxu0 %v3035
  %v3213 = vpop.f32.mrf.mxu0
  %v3214 = vadd.f32 0.0, %v3213
  %v3215 = vpop.f32.mrf.mxu0
  %3216 = vdwg.mxu0
  %3217 = vmatpush.bf16.msra.mxu0 %v1370
  %3218 = vmatpush.bf16.msra.mxu0 %v1366
  %3219 = vmatpush.bf16.msra.mxu0 %v1362
  %3220 = vmatpush.bf16.msra.mxu0 %v1358
  %3221 = vmatpush.bf16.msra.mxu0 %v1354
  %3222 = vmatpush.bf16.msra.mxu0 %v1350
  %3223 = vmatpush.bf16.msra.mxu0 %v1346
  %3224 = vmatpush.bf16.msra.mxu0 %v1342
  %3225 = vmatmul.bf16.gmra.mxu0 %v3035
  %v3226 = vpop.f32.mrf.mxu0
  %v3227 = vadd.f32 0.0, %v3226
  %v3228 = vpop.f32.mrf.mxu0
  %3229 = vdwg.mxu0
  %3230 = vmatpush.bf16.msra.mxu0 %v1371
  %3231 = vmatpush.bf16.msra.mxu0 %v1367
  %3232 = vmatpush.bf16.msra.mxu0 %v1363
  %3233 = vmatpush.bf16.msra.mxu0 %v1359
  %3234 = vmatpush.bf16.msra.mxu0 %v1355
  %3235 = vmatpush.bf16.msra.mxu0 %v1351
  %3236 = vmatpush.bf16.msra.mxu0 %v1347
  %3237 = vmatpush.bf16.msra.mxu0 %v1343
  %3238 = vmatmul.bf16.gmra.mxu0 %v3035
  %v3239 = vpop.f32.mrf.mxu0
  %v3240 = vadd.f32 0.0, %v3239
  %v3241 = vpop.f32.mrf.mxu0
  %3242 = vdwg.mxu0
  %3243 = vmatpush.bf16.msra.mxu0 %v1372
  %3244 = vmatpush.bf16.msra.mxu0 %v1368
  %3245 = vmatpush.bf16.msra.mxu0 %v1364
  %3246 = vmatpush.bf16.msra.mxu0 %v1360
  %3247 = vmatpush.bf16.msra.mxu0 %v1356
  %3248 = vmatpush.bf16.msra.mxu0 %v1352
  %3249 = vmatpush.bf16.msra.mxu0 %v1348
  %3250 = vmatpush.bf16.msra.mxu0 %v1344
  %3251 = vmatmul.bf16.gmra.mxu0 %v3035
  %v3252 = vpop.f32.mrf.mxu0
  %v3253 = vadd.f32 0.0, %v3252
  %v3254 = vpop.f32.mrf.mxu0
  %3255 = vdwg.mxu0
  %v3256 = vadd.f32 %v1020, %v3214
  %v3257 = vadd.f32 %v1053, %v3227
  %v3258 = vadd.f32 %v1086, %v3240
  %v3259 = vadd.f32 %v1119, %v3253
  %v3260 = vadd.f32 %v3256, %v1462
  %v3261 = vadd.f32 %v3257, %v1463
  %v3262 = vadd.f32 %v3258, %v1464
  %v3263 = vadd.f32 %v3259, %v1465
  %v3264 = vxor.u32 %v3260, 2147483648
  %v3265 = vmul.f32 %v3264, 1.442695
  %v3266 = vpow.pop %v3265
  %v3267 = vadd.f32 %v3266, 1.0
  %v3268 = vrcp.pop %v3267
  %v3269 = vmul.f32 %v3267, %v3268
  %v3270 = vsub.f32 1.0, %v3269
  %v3271 = vmul.f32 %v3268, %v3270
  %v3272 = vadd.f32 %v3268, %v3271
  %vm3273 = vweird.f32 %v3267
  %vm3274 = vweird.f32 %v3268
  %vm3275 = vmor %vm3273, %vm3274
  %v3276 = vsel %vm3275, %v3268, %v3272
  %v3277 = vand.u32 2147483647, %v3267
  %vm3278 = vcmp.eq.f32.partialorder %v3277, 8.507059e+37
  %v3279 = vand.u32 %v3267, 2147483648
  %v3280 = vor.u32 1.1754944e-38, %v3279
  %v3281 = vsel %vm3278, %v3280, %v3276
  %v3282 = vmul.f32 1.0, %v3281
  %v3283 = vxor.u32 %v3261, 2147483648
  %v3284 = vmul.f32 %v3283, 1.442695
  %v3285 = vpow.pop %v3284
  %v3286 = vadd.f32 %v3285, 1.0
  %v3287 = vrcp.pop %v3286
  %v3288 = vmul.f32 %v3286, %v3287
  %v3289 = vsub.f32 1.0, %v3288
  %v3290 = vmul.f32 %v3287, %v3289
  %v3291 = vadd.f32 %v3287, %v3290
  %vm3292 = vweird.f32 %v3286
  %vm3293 = vweird.f32 %v3287
  %vm3294 = vmor %vm3292, %vm3293
  %v3295 = vsel %vm3294, %v3287, %v3291
  %v3296 = vand.u32 2147483647, %v3286
  %vm3297 = vcmp.eq.f32.partialorder %v3296, 8.507059e+37
  %v3298 = vand.u32 %v3286, 2147483648
  %v3299 = vor.u32 1.1754944e-38, %v3298
  %v3300 = vsel %vm3297, %v3299, %v3295
  %v3301 = vmul.f32 1.0, %v3300
  %v3302 = vtanh.pop %v3262
  %v3303 = vxor.u32 %v3263, 2147483648
  %v3304 = vmul.f32 %v3303, 1.442695
  %v3305 = vpow.pop %v3304
  %v3306 = vadd.f32 %v3305, 1.0
  %v3307 = vrcp.pop %v3306
  %v3308 = vmul.f32 %v3306, %v3307
  %v3309 = vsub.f32 1.0, %v3308
  %v3310 = vmul.f32 %v3307, %v3309
  %v3311 = vadd.f32 %v3307, %v3310
  %vm3312 = vweird.f32 %v3306
  %vm3313 = vweird.f32 %v3307
  %vm3314 = vmor %vm3312, %vm3313
  %v3315 = vsel %vm3314, %v3307, %v3311
  %v3316 = vand.u32 2147483647, %v3306
  %vm3317 = vcmp.eq.f32.partialorder %v3316, 8.507059e+37
  %v3318 = vand.u32 %v3306, 2147483648
  %v3319 = vor.u32 1.1754944e-38, %v3318
  %v3320 = vsel %vm3317, %v3319, %v3315
  %v3321 = vmul.f32 1.0, %v3320
  %v3322 = vmul.f32 %v3301, %v3032
  %v3323 = vmul.f32 %v3282, %v3302
  %v3324 = vadd.f32 %v3322, %v3323
  %v3325 = vtanh.pop %v3324
  %v3326 = vmul.f32 %v3321, %v3325
  %v3327 = vpack.c.bf16 %v3326, %v3326
  %3328 = vmatpush.bf16.msra.mxu0 %v1768
  %3329 = vmatpush.bf16.msra.mxu0 %v1764
  %3330 = vmatpush.bf16.msra.mxu0 %v1760
  %3331 = vmatpush.bf16.msra.mxu0 %v1756
  %3332 = vmatpush.bf16.msra.mxu0 %v1752
  %3333 = vmatpush.bf16.msra.mxu0 %v1748
  %3334 = vmatpush.bf16.msra.mxu0 %v1744
  %3335 = vmatpush.bf16.msra.mxu0 %v1740
  %3336 = vmatmul.bf16.gmra.mxu0 %v3327
  %v3337 = vpop.f32.mrf.mxu0
  %v3338 = vadd.f32 %v1540, %v3337
  %v3339 = vpop.f32.mrf.mxu0
  %3340 = vdwg.mxu0
  %3341 = vmatpush.bf16.msra.mxu0 %v1800
  %3342 = vmatpush.bf16.msra.mxu0 %v1796
  %3343 = vmatpush.bf16.msra.mxu0 %v1792
  %3344 = vmatpush.bf16.msra.mxu0 %v1788
  %3345 = vmatpush.bf16.msra.mxu0 %v1784
  %3346 = vmatpush.bf16.msra.mxu0 %v1780
  %3347 = vmatpush.bf16.msra.mxu0 %v1776
  %3348 = vmatpush.bf16.msra.mxu0 %v1772
  %3349 = vmatmul.bf16.gmra.mxu0 %v3203
  %v3350 = vpop.f32.mrf.mxu0
  %v3351 = vadd.f32 %v3338, %v3350
  %v3352 = vpop.f32.mrf.mxu0
  %3353 = vdwg.mxu0
  %3354 = vmatpush.bf16.msra.mxu0 %v1769
  %3355 = vmatpush.bf16.msra.mxu0 %v1765
  %3356 = vmatpush.bf16.msra.mxu0 %v1761
  %3357 = vmatpush.bf16.msra.mxu0 %v1757
  %3358 = vmatpush.bf16.msra.mxu0 %v1753
  %3359 = vmatpush.bf16.msra.mxu0 %v1749
  %3360 = vmatpush.bf16.msra.mxu0 %v1745
  %3361 = vmatpush.bf16.msra.mxu0 %v1741
  %3362 = vmatmul.bf16.gmra.mxu0 %v3327
  %v3363 = vpop.f32.mrf.mxu0
  %v3364 = vadd.f32 %v1541, %v3363
  %v3365 = vpop.f32.mrf.mxu0
  %3366 = vdwg.mxu0
  %3367 = vmatpush.bf16.msra.mxu0 %v1801
  %3368 = vmatpush.bf16.msra.mxu0 %v1797
  %3369 = vmatpush.bf16.msra.mxu0 %v1793
  %3370 = vmatpush.bf16.msra.mxu0 %v1789
  %3371 = vmatpush.bf16.msra.mxu0 %v1785
  %3372 = vmatpush.bf16.msra.mxu0 %v1781
  %3373 = vmatpush.bf16.msra.mxu0 %v1777
  %3374 = vmatpush.bf16.msra.mxu0 %v1773
  %3375 = vmatmul.bf16.gmra.mxu0 %v3203
  %v3376 = vpop.f32.mrf.mxu0
  %v3377 = vadd.f32 %v3364, %v3376
  %v3378 = vpop.f32.mrf.mxu0
  %3379 = vdwg.mxu0
  %3380 = vmatpush.bf16.msra.mxu0 %v1770
  %3381 = vmatpush.bf16.msra.mxu0 %v1766
  %3382 = vmatpush.bf16.msra.mxu0 %v1762
  %3383 = vmatpush.bf16.msra.mxu0 %v1758
  %3384 = vmatpush.bf16.msra.mxu0 %v1754
  %3385 = vmatpush.bf16.msra.mxu0 %v1750
  %3386 = vmatpush.bf16.msra.mxu0 %v1746
  %3387 = vmatpush.bf16.msra.mxu0 %v1742
  %3388 = vmatmul.bf16.gmra.mxu0 %v3327
  %v3389 = vpop.f32.mrf.mxu0
  %v3390 = vadd.f32 %v1542, %v3389
  %v3391 = vpop.f32.mrf.mxu0
  %3392 = vdwg.mxu0
  %3393 = vmatpush.bf16.msra.mxu0 %v1802
  %3394 = vmatpush.bf16.msra.mxu0 %v1798
  %3395 = vmatpush.bf16.msra.mxu0 %v1794
  %3396 = vmatpush.bf16.msra.mxu0 %v1790
  %3397 = vmatpush.bf16.msra.mxu0 %v1786
  %3398 = vmatpush.bf16.msra.mxu0 %v1782
  %3399 = vmatpush.bf16.msra.mxu0 %v1778
  %3400 = vmatpush.bf16.msra.mxu0 %v1774
  %3401 = vmatmul.bf16.gmra.mxu0 %v3203
  %v3402 = vpop.f32.mrf.mxu0
  %v3403 = vadd.f32 %v3390, %v3402
  %v3404 = vpop.f32.mrf.mxu0
  %3405 = vdwg.mxu0
  %3406 = vmatpush.bf16.msra.mxu0 %v1771
  %3407 = vmatpush.bf16.msra.mxu0 %v1767
  %3408 = vmatpush.bf16.msra.mxu0 %v1763
  %3409 = vmatpush.bf16.msra.mxu0 %v1759
  %3410 = vmatpush.bf16.msra.mxu0 %v1755
  %3411 = vmatpush.bf16.msra.mxu0 %v1751
  %3412 = vmatpush.bf16.msra.mxu0 %v1747
  %3413 = vmatpush.bf16.msra.mxu0 %v1743
  %3414 = vmatmul.bf16.gmra.mxu0 %v3327
  %v3415 = vpop.f32.mrf.mxu0
  %v3416 = vadd.f32 %v1543, %v3415
  %v3417 = vpop.f32.mrf.mxu0
  %3418 = vdwg.mxu0
  %3419 = vmatpush.bf16.msra.mxu0 %v1803
  %3420 = vmatpush.bf16.msra.mxu0 %v1799
  %3421 = vmatpush.bf16.msra.mxu0 %v1795
  %3422 = vmatpush.bf16.msra.mxu0 %v1791
  %3423 = vmatpush.bf16.msra.mxu0 %v1787
  %3424 = vmatpush.bf16.msra.mxu0 %v1783
  %3425 = vmatpush.bf16.msra.mxu0 %v1779
  %3426 = vmatpush.bf16.msra.mxu0 %v1775
  %3427 = vmatmul.bf16.gmra.mxu0 %v3203
  %v3428 = vpop.f32.mrf.mxu0
  %v3429 = vadd.f32 %v3416, %v3428
  %v3430 = vpop.f32.mrf.mxu0
  %3431 = vdwg.mxu0
  %v3432 = vxor.u32 %v3351, 2147483648
  %v3433 = vmul.f32 %v3432, 1.442695
  %v3434 = vpow.pop %v3433
  %v3435 = vadd.f32 %v3434, 1.0
  %v3436 = vrcp.pop %v3435
  %v3437 = vmul.f32 %v3435, %v3436
  %v3438 = vsub.f32 1.0, %v3437
  %v3439 = vmul.f32 %v3436, %v3438
  %v3440 = vadd.f32 %v3436, %v3439
  %vm3441 = vweird.f32 %v3435
  %vm3442 = vweird.f32 %v3436
  %vm3443 = vmor %vm3441, %vm3442
  %v3444 = vsel %vm3443, %v3436, %v3440
  %v3445 = vand.u32 2147483647, %v3435
  %vm3446 = vcmp.eq.f32.partialorder %v3445, 8.507059e+37
  %v3447 = vand.u32 %v3435, 2147483648
  %v3448 = vor.u32 1.1754944e-38, %v3447
  %v3449 = vsel %vm3446, %v3448, %v3444
  %v3450 = vmul.f32 1.0, %v3449
  %v3451 = vxor.u32 %v3377, 2147483648
  %v3452 = vmul.f32 %v3451, 1.442695
  %v3453 = vpow.pop %v3452
  %v3454 = vadd.f32 %v3453, 1.0
  %v3455 = vrcp.pop %v3454
  %v3456 = vmul.f32 %v3454, %v3455
  %v3457 = vsub.f32 1.0, %v3456
  %v3458 = vmul.f32 %v3455, %v3457
  %v3459 = vadd.f32 %v3455, %v3458
  %vm3460 = vweird.f32 %v3454
  %vm3461 = vweird.f32 %v3455
  %vm3462 = vmor %vm3460, %vm3461
  %v3463 = vsel %vm3462, %v3455, %v3459
  %v3464 = vand.u32 2147483647, %v3454
  %vm3465 = vcmp.eq.f32.partialorder %v3464, 8.507059e+37
  %v3466 = vand.u32 %v3454, 2147483648
  %v3467 = vor.u32 1.1754944e-38, %v3466
  %v3468 = vsel %vm3465, %v3467, %v3463
  %v3469 = vmul.f32 1.0, %v3468
  %v3470 = vtanh.pop %v3403
  %v3471 = vxor.u32 %v3429, 2147483648
  %v3472 = vmul.f32 %v3471, 1.442695
  %v3473 = vpow.pop %v3472
  %v3474 = vadd.f32 %v3473, 1.0
  %v3475 = vrcp.pop %v3474
  %v3476 = vmul.f32 %v3474, %v3475
  %v3477 = vsub.f32 1.0, %v3476
  %v3478 = vmul.f32 %v3475, %v3477
  %v3479 = vadd.f32 %v3475, %v3478
  %vm3480 = vweird.f32 %v3474
  %vm3481 = vweird.f32 %v3475
  %vm3482 = vmor %vm3480, %vm3481
  %v3483 = vsel %vm3482, %v3475, %v3479
  %v3484 = vand.u32 2147483647, %v3474
  %vm3485 = vcmp.eq.f32.partialorder %v3484, 8.507059e+37
  %v3486 = vand.u32 %v3474, 2147483648
  %v3487 = vor.u32 1.1754944e-38, %v3486
  %v3488 = vsel %vm3485, %v3487, %v3483
  %v3489 = vmul.f32 1.0, %v3488
  %v3490 = vmul.f32 %v3469, %v3200
  %v3491 = vmul.f32 %v3450, %v3470
  %v3492 = vadd.f32 %v3490, %v3491
  %v3493 = vtanh.pop %v3492
  %v3494 = vmul.f32 %v3489, %v3493
  %v3495 = vpack.c.bf16 %v3494, %v3494
  %3496 = vmatpush.bf16.msra.mxu0 %v1369
  %3497 = vmatpush.bf16.msra.mxu0 %v1365
  %3498 = vmatpush.bf16.msra.mxu0 %v1361
  %3499 = vmatpush.bf16.msra.mxu0 %v1357
  %3500 = vmatpush.bf16.msra.mxu0 %v1353
  %3501 = vmatpush.bf16.msra.mxu0 %v1349
  %3502 = vmatpush.bf16.msra.mxu0 %v1345
  %3503 = vmatpush.bf16.msra.mxu0 %v1341
  %3504 = vmatmul.bf16.gmra.mxu0 %v3327
  %v3505 = vpop.f32.mrf.mxu0
  %v3506 = vadd.f32 0.0, %v3505
  %v3507 = vpop.f32.mrf.mxu0
  %3508 = vdwg.mxu0
  %3509 = vmatpush.bf16.msra.mxu0 %v1370
  %3510 = vmatpush.bf16.msra.mxu0 %v1366
  %3511 = vmatpush.bf16.msra.mxu0 %v1362
  %3512 = vmatpush.bf16.msra.mxu0 %v1358
  %3513 = vmatpush.bf16.msra.mxu0 %v1354
  %3514 = vmatpush.bf16.msra.mxu0 %v1350
  %3515 = vmatpush.bf16.msra.mxu0 %v1346
  %3516 = vmatpush.bf16.msra.mxu0 %v1342
  %3517 = vmatmul.bf16.gmra.mxu0 %v3327
  %v3518 = vpop.f32.mrf.mxu0
  %v3519 = vadd.f32 0.0, %v3518
  %v3520 = vpop.f32.mrf.mxu0
  %3521 = vdwg.mxu0
  %3522 = vmatpush.bf16.msra.mxu0 %v1371
  %3523 = vmatpush.bf16.msra.mxu0 %v1367
  %3524 = vmatpush.bf16.msra.mxu0 %v1363
  %3525 = vmatpush.bf16.msra.mxu0 %v1359
  %3526 = vmatpush.bf16.msra.mxu0 %v1355
  %3527 = vmatpush.bf16.msra.mxu0 %v1351
  %3528 = vmatpush.bf16.msra.mxu0 %v1347
  %3529 = vmatpush.bf16.msra.mxu0 %v1343
  %3530 = vmatmul.bf16.gmra.mxu0 %v3327
  %v3531 = vpop.f32.mrf.mxu0
  %v3532 = vadd.f32 0.0, %v3531
  %v3533 = vpop.f32.mrf.mxu0
  %3534 = vdwg.mxu0
  %3535 = vmatpush.bf16.msra.mxu0 %v1372
  %3536 = vmatpush.bf16.msra.mxu0 %v1368
  %3537 = vmatpush.bf16.msra.mxu0 %v1364
  %3538 = vmatpush.bf16.msra.mxu0 %v1360
  %3539 = vmatpush.bf16.msra.mxu0 %v1356
  %3540 = vmatpush.bf16.msra.mxu0 %v1352
  %3541 = vmatpush.bf16.msra.mxu0 %v1348
  %3542 = vmatpush.bf16.msra.mxu0 %v1344
  %3543 = vmatmul.bf16.gmra.mxu0 %v3327
  %v3544 = vpop.f32.mrf.mxu0
  %v3545 = vadd.f32 0.0, %v3544
  %v3546 = vpop.f32.mrf.mxu0
  %3547 = vdwg.mxu0
  %v3548 = vadd.f32 %v1023, %v3506
  %v3549 = vadd.f32 %v1056, %v3519
  %v3550 = vadd.f32 %v1089, %v3532
  %v3551 = vadd.f32 %v1122, %v3545
  %v3552 = vadd.f32 %v3548, %v1462
  %v3553 = vadd.f32 %v3549, %v1463
  %v3554 = vadd.f32 %v3550, %v1464
  %v3555 = vadd.f32 %v3551, %v1465
  %v3556 = vxor.u32 %v3552, 2147483648
  %v3557 = vmul.f32 %v3556, 1.442695
  %v3558 = vpow.pop %v3557
  %v3559 = vadd.f32 %v3558, 1.0
  %v3560 = vrcp.pop %v3559
  %v3561 = vmul.f32 %v3559, %v3560
  %v3562 = vsub.f32 1.0, %v3561
  %v3563 = vmul.f32 %v3560, %v3562
  %v3564 = vadd.f32 %v3560, %v3563
  %vm3565 = vweird.f32 %v3559
  %vm3566 = vweird.f32 %v3560
  %vm3567 = vmor %vm3565, %vm3566
  %v3568 = vsel %vm3567, %v3560, %v3564
  %v3569 = vand.u32 2147483647, %v3559
  %vm3570 = vcmp.eq.f32.partialorder %v3569, 8.507059e+37
  %v3571 = vand.u32 %v3559, 2147483648
  %v3572 = vor.u32 1.1754944e-38, %v3571
  %v3573 = vsel %vm3570, %v3572, %v3568
  %v3574 = vmul.f32 1.0, %v3573
  %v3575 = vxor.u32 %v3553, 2147483648
  %v3576 = vmul.f32 %v3575, 1.442695
  %v3577 = vpow.pop %v3576
  %v3578 = vadd.f32 %v3577, 1.0
  %v3579 = vrcp.pop %v3578
  %v3580 = vmul.f32 %v3578, %v3579
  %v3581 = vsub.f32 1.0, %v3580
  %v3582 = vmul.f32 %v3579, %v3581
  %v3583 = vadd.f32 %v3579, %v3582
  %vm3584 = vweird.f32 %v3578
  %vm3585 = vweird.f32 %v3579
  %vm3586 = vmor %vm3584, %vm3585
  %v3587 = vsel %vm3586, %v3579, %v3583
  %v3588 = vand.u32 2147483647, %v3578
  %vm3589 = vcmp.eq.f32.partialorder %v3588, 8.507059e+37
  %v3590 = vand.u32 %v3578, 2147483648
  %v3591 = vor.u32 1.1754944e-38, %v3590
  %v3592 = vsel %vm3589, %v3591, %v3587
  %v3593 = vmul.f32 1.0, %v3592
  %v3594 = vtanh.pop %v3554
  %v3595 = vxor.u32 %v3555, 2147483648
  %v3596 = vmul.f32 %v3595, 1.442695
  %v3597 = vpow.pop %v3596
  %v3598 = vadd.f32 %v3597, 1.0
  %v3599 = vrcp.pop %v3598
  %v3600 = vmul.f32 %v3598, %v3599
  %v3601 = vsub.f32 1.0, %v3600
  %v3602 = vmul.f32 %v3599, %v3601
  %v3603 = vadd.f32 %v3599, %v3602
  %vm3604 = vweird.f32 %v3598
  %vm3605 = vweird.f32 %v3599
  %vm3606 = vmor %vm3604, %vm3605
  %v3607 = vsel %vm3606, %v3599, %v3603
  %v3608 = vand.u32 2147483647, %v3598
  %vm3609 = vcmp.eq.f32.partialorder %v3608, 8.507059e+37
  %v3610 = vand.u32 %v3598, 2147483648
  %v3611 = vor.u32 1.1754944e-38, %v3610
  %v3612 = vsel %vm3609, %v3611, %v3607
  %v3613 = vmul.f32 1.0, %v3612
  %v3614 = vmul.f32 %v3593, %v3324
  %v3615 = vmul.f32 %v3574, %v3594
  %v3616 = vadd.f32 %v3614, %v3615
  %v3617 = vtanh.pop %v3616
  %v3618 = vmul.f32 %v3613, %v3617
  %v3619 = vpack.c.bf16 %v3618, %v3618
  %3620 = vmatpush.bf16.msra.mxu0 %v1768
  %3621 = vmatpush.bf16.msra.mxu0 %v1764
  %3622 = vmatpush.bf16.msra.mxu0 %v1760
  %3623 = vmatpush.bf16.msra.mxu0 %v1756
  %3624 = vmatpush.bf16.msra.mxu0 %v1752
  %3625 = vmatpush.bf16.msra.mxu0 %v1748
  %3626 = vmatpush.bf16.msra.mxu0 %v1744
  %3627 = vmatpush.bf16.msra.mxu0 %v1740
  %3628 = vmatmul.bf16.gmra.mxu0 %v3619
  %v3629 = vpop.f32.mrf.mxu0
  %v3630 = vadd.f32 %v1540, %v3629
  %v3631 = vpop.f32.mrf.mxu0
  %3632 = vdwg.mxu0
  %3633 = vmatpush.bf16.msra.mxu0 %v1800
  %3634 = vmatpush.bf16.msra.mxu0 %v1796
  %3635 = vmatpush.bf16.msra.mxu0 %v1792
  %3636 = vmatpush.bf16.msra.mxu0 %v1788
  %3637 = vmatpush.bf16.msra.mxu0 %v1784
  %3638 = vmatpush.bf16.msra.mxu0 %v1780
  %3639 = vmatpush.bf16.msra.mxu0 %v1776
  %3640 = vmatpush.bf16.msra.mxu0 %v1772
  %3641 = vmatmul.bf16.gmra.mxu0 %v3495
  %v3642 = vpop.f32.mrf.mxu0
  %v3643 = vadd.f32 %v3630, %v3642
  %v3644 = vpop.f32.mrf.mxu0
  %3645 = vdwg.mxu0
  %3646 = vmatpush.bf16.msra.mxu0 %v1769
  %3647 = vmatpush.bf16.msra.mxu0 %v1765
  %3648 = vmatpush.bf16.msra.mxu0 %v1761
  %3649 = vmatpush.bf16.msra.mxu0 %v1757
  %3650 = vmatpush.bf16.msra.mxu0 %v1753
  %3651 = vmatpush.bf16.msra.mxu0 %v1749
  %3652 = vmatpush.bf16.msra.mxu0 %v1745
  %3653 = vmatpush.bf16.msra.mxu0 %v1741
  %3654 = vmatmul.bf16.gmra.mxu0 %v3619
  %v3655 = vpop.f32.mrf.mxu0
  %v3656 = vadd.f32 %v1541, %v3655
  %v3657 = vpop.f32.mrf.mxu0
  %3658 = vdwg.mxu0
  %3659 = vmatpush.bf16.msra.mxu0 %v1801
  %3660 = vmatpush.bf16.msra.mxu0 %v1797
  %3661 = vmatpush.bf16.msra.mxu0 %v1793
  %3662 = vmatpush.bf16.msra.mxu0 %v1789
  %3663 = vmatpush.bf16.msra.mxu0 %v1785
  %3664 = vmatpush.bf16.msra.mxu0 %v1781
  %3665 = vmatpush.bf16.msra.mxu0 %v1777
  %3666 = vmatpush.bf16.msra.mxu0 %v1773
  %3667 = vmatmul.bf16.gmra.mxu0 %v3495
  %v3668 = vpop.f32.mrf.mxu0
  %v3669 = vadd.f32 %v3656, %v3668
  %v3670 = vpop.f32.mrf.mxu0
  %3671 = vdwg.mxu0
  %3672 = vmatpush.bf16.msra.mxu0 %v1770
  %3673 = vmatpush.bf16.msra.mxu0 %v1766
  %3674 = vmatpush.bf16.msra.mxu0 %v1762
  %3675 = vmatpush.bf16.msra.mxu0 %v1758
  %3676 = vmatpush.bf16.msra.mxu0 %v1754
  %3677 = vmatpush.bf16.msra.mxu0 %v1750
  %3678 = vmatpush.bf16.msra.mxu0 %v1746
  %3679 = vmatpush.bf16.msra.mxu0 %v1742
  %3680 = vmatmul.bf16.gmra.mxu0 %v3619
  %v3681 = vpop.f32.mrf.mxu0
  %v3682 = vadd.f32 %v1542, %v3681
  %v3683 = vpop.f32.mrf.mxu0
  %3684 = vdwg.mxu0
  %3685 = vmatpush.bf16.msra.mxu0 %v1802
  %3686 = vmatpush.bf16.msra.mxu0 %v1798
  %3687 = vmatpush.bf16.msra.mxu0 %v1794
  %3688 = vmatpush.bf16.msra.mxu0 %v1790
  %3689 = vmatpush.bf16.msra.mxu0 %v1786
  %3690 = vmatpush.bf16.msra.mxu0 %v1782
  %3691 = vmatpush.bf16.msra.mxu0 %v1778
  %3692 = vmatpush.bf16.msra.mxu0 %v1774
  %3693 = vmatmul.bf16.gmra.mxu0 %v3495
  %v3694 = vpop.f32.mrf.mxu0
  %v3695 = vadd.f32 %v3682, %v3694
  %v3696 = vpop.f32.mrf.mxu0
  %3697 = vdwg.mxu0
  %3698 = vmatpush.bf16.msra.mxu0 %v1771
  %3699 = vmatpush.bf16.msra.mxu0 %v1767
  %3700 = vmatpush.bf16.msra.mxu0 %v1763
  %3701 = vmatpush.bf16.msra.mxu0 %v1759
  %3702 = vmatpush.bf16.msra.mxu0 %v1755
  %3703 = vmatpush.bf16.msra.mxu0 %v1751
  %3704 = vmatpush.bf16.msra.mxu0 %v1747
  %3705 = vmatpush.bf16.msra.mxu0 %v1743
  %3706 = vmatmul.bf16.gmra.mxu0 %v3619
  %v3707 = vpop.f32.mrf.mxu0
  %v3708 = vadd.f32 %v1543, %v3707
  %v3709 = vpop.f32.mrf.mxu0
  %3710 = vdwg.mxu0
  %3711 = vmatpush.bf16.msra.mxu0 %v1803
  %3712 = vmatpush.bf16.msra.mxu0 %v1799
  %3713 = vmatpush.bf16.msra.mxu0 %v1795
  %3714 = vmatpush.bf16.msra.mxu0 %v1791
  %3715 = vmatpush.bf16.msra.mxu0 %v1787
  %3716 = vmatpush.bf16.msra.mxu0 %v1783
  %3717 = vmatpush.bf16.msra.mxu0 %v1779
  %3718 = vmatpush.bf16.msra.mxu0 %v1775
  %3719 = vmatmul.bf16.gmra.mxu0 %v3495
  %v3720 = vpop.f32.mrf.mxu0
  %v3721 = vadd.f32 %v3708, %v3720
  %v3722 = vpop.f32.mrf.mxu0
  %3723 = vdwg.mxu0
  %v3724 = vxor.u32 %v3643, 2147483648
  %v3725 = vmul.f32 %v3724, 1.442695
  %v3726 = vpow.pop %v3725
  %v3727 = vadd.f32 %v3726, 1.0
  %v3728 = vrcp.pop %v3727
  %v3729 = vmul.f32 %v3727, %v3728
  %v3730 = vsub.f32 1.0, %v3729
  %v3731 = vmul.f32 %v3728, %v3730
  %v3732 = vadd.f32 %v3728, %v3731
  %vm3733 = vweird.f32 %v3727
  %vm3734 = vweird.f32 %v3728
  %vm3735 = vmor %vm3733, %vm3734
  %v3736 = vsel %vm3735, %v3728, %v3732
  %v3737 = vand.u32 2147483647, %v3727
  %vm3738 = vcmp.eq.f32.partialorder %v3737, 8.507059e+37
  %v3739 = vand.u32 %v3727, 2147483648
  %v3740 = vor.u32 1.1754944e-38, %v3739
  %v3741 = vsel %vm3738, %v3740, %v3736
  %v3742 = vmul.f32 1.0, %v3741
  %v3743 = vxor.u32 %v3669, 2147483648
  %v3744 = vmul.f32 %v3743, 1.442695
  %v3745 = vpow.pop %v3744
  %v3746 = vadd.f32 %v3745, 1.0
  %v3747 = vrcp.pop %v3746
  %v3748 = vmul.f32 %v3746, %v3747
  %v3749 = vsub.f32 1.0, %v3748
  %v3750 = vmul.f32 %v3747, %v3749
  %v3751 = vadd.f32 %v3747, %v3750
  %vm3752 = vweird.f32 %v3746
  %vm3753 = vweird.f32 %v3747
  %vm3754 = vmor %vm3752, %vm3753
  %v3755 = vsel %vm3754, %v3747, %v3751
  %v3756 = vand.u32 2147483647, %v3746
  %vm3757 = vcmp.eq.f32.partialorder %v3756, 8.507059e+37
  %v3758 = vand.u32 %v3746, 2147483648
  %v3759 = vor.u32 1.1754944e-38, %v3758
  %v3760 = vsel %vm3757, %v3759, %v3755
  %v3761 = vmul.f32 1.0, %v3760
  %v3762 = vtanh.pop %v3695
  %v3763 = vxor.u32 %v3721, 2147483648
  %v3764 = vmul.f32 %v3763, 1.442695
  %v3765 = vpow.pop %v3764
  %v3766 = vadd.f32 %v3765, 1.0
  %v3767 = vrcp.pop %v3766
  %v3768 = vmul.f32 %v3766, %v3767
  %v3769 = vsub.f32 1.0, %v3768
  %v3770 = vmul.f32 %v3767, %v3769
  %v3771 = vadd.f32 %v3767, %v3770
  %vm3772 = vweird.f32 %v3766
  %vm3773 = vweird.f32 %v3767
  %vm3774 = vmor %vm3772, %vm3773
  %v3775 = vsel %vm3774, %v3767, %v3771
  %v3776 = vand.u32 2147483647, %v3766
  %vm3777 = vcmp.eq.f32.partialorder %v3776, 8.507059e+37
  %v3778 = vand.u32 %v3766, 2147483648
  %v3779 = vor.u32 1.1754944e-38, %v3778
  %v3780 = vsel %vm3777, %v3779, %v3775
  %v3781 = vmul.f32 1.0, %v3780
  %v3782 = vmul.f32 %v3761, %v3492
  %v3783 = vmul.f32 %v3742, %v3762
  %v3784 = vadd.f32 %v3782, %v3783
  %v3785 = vtanh.pop %v3784
  %v3786 = vmul.f32 %v3781, %v3785
  %v3787 = vpack.c.bf16 %v3786, %v3786
  %3788 = vmatpush.bf16.msra.mxu0 %v1369
  %3789 = vmatpush.bf16.msra.mxu0 %v1365
  %3790 = vmatpush.bf16.msra.mxu0 %v1361
  %3791 = vmatpush.bf16.msra.mxu0 %v1357
  %3792 = vmatpush.bf16.msra.mxu0 %v1353
  %3793 = vmatpush.bf16.msra.mxu0 %v1349
  %3794 = vmatpush.bf16.msra.mxu0 %v1345
  %3795 = vmatpush.bf16.msra.mxu0 %v1341
  %3796 = vmatmul.bf16.gmra.mxu0 %v3619
  %v3797 = vpop.f32.mrf.mxu0
  %v3798 = vadd.f32 0.0, %v3797
  %v3799 = vpop.f32.mrf.mxu0
  %3800 = vdwg.mxu0
  %3801 = vmatpush.bf16.msra.mxu0 %v1370
  %3802 = vmatpush.bf16.msra.mxu0 %v1366
  %3803 = vmatpush.bf16.msra.mxu0 %v1362
  %3804 = vmatpush.bf16.msra.mxu0 %v1358
  %3805 = vmatpush.bf16.msra.mxu0 %v1354
  %3806 = vmatpush.bf16.msra.mxu0 %v1350
  %3807 = vmatpush.bf16.msra.mxu0 %v1346
  %3808 = vmatpush.bf16.msra.mxu0 %v1342
  %3809 = vmatmul.bf16.gmra.mxu0 %v3619
  %v3810 = vpop.f32.mrf.mxu0
  %v3811 = vadd.f32 0.0, %v3810
  %v3812 = vpop.f32.mrf.mxu0
  %3813 = vdwg.mxu0
  %3814 = vmatpush.bf16.msra.mxu0 %v1371
  %3815 = vmatpush.bf16.msra.mxu0 %v1367
  %3816 = vmatpush.bf16.msra.mxu0 %v1363
  %3817 = vmatpush.bf16.msra.mxu0 %v1359
  %3818 = vmatpush.bf16.msra.mxu0 %v1355
  %3819 = vmatpush.bf16.msra.mxu0 %v1351
  %3820 = vmatpush.bf16.msra.mxu0 %v1347
  %3821 = vmatpush.bf16.msra.mxu0 %v1343
  %3822 = vmatmul.bf16.gmra.mxu0 %v3619
  %v3823 = vpop.f32.mrf.mxu0
  %v3824 = vadd.f32 0.0, %v3823
  %v3825 = vpop.f32.mrf.mxu0
  %3826 = vdwg.mxu0
  %3827 = vmatpush.bf16.msra.mxu0 %v1372
  %3828 = vmatpush.bf16.msra.mxu0 %v1368
  %3829 = vmatpush.bf16.msra.mxu0 %v1364
  %3830 = vmatpush.bf16.msra.mxu0 %v1360
  %3831 = vmatpush.bf16.msra.mxu0 %v1356
  %3832 = vmatpush.bf16.msra.mxu0 %v1352
  %3833 = vmatpush.bf16.msra.mxu0 %v1348
  %3834 = vmatpush.bf16.msra.mxu0 %v1344
  %3835 = vmatmul.bf16.gmra.mxu0 %v3619
  %v3836 = vpop.f32.mrf.mxu0
  %v3837 = vadd.f32 0.0, %v3836
  %v3838 = vpop.f32.mrf.mxu0
  %3839 = vdwg.mxu0
  %v3840 = vadd.f32 %v1025, %v3798
  %v3841 = vadd.f32 %v1058, %v3811
  %v3842 = vadd.f32 %v1091, %v3824
  %v3843 = vadd.f32 %v1124, %v3837
  %v3844 = vadd.f32 %v3840, %v1462
  %v3845 = vadd.f32 %v3841, %v1463
  %v3846 = vadd.f32 %v3842, %v1464
  %v3847 = vadd.f32 %v3843, %v1465
  %v3848 = vxor.u32 %v3844, 2147483648
  %v3849 = vmul.f32 %v3848, 1.442695
  %v3850 = vpow.pop %v3849
  %v3851 = vadd.f32 %v3850, 1.0
  %v3852 = vrcp.pop %v3851
  %v3853 = vmul.f32 %v3851, %v3852
  %v3854 = vsub.f32 1.0, %v3853
  %v3855 = vmul.f32 %v3852, %v3854
  %v3856 = vadd.f32 %v3852, %v3855
  %vm3857 = vweird.f32 %v3851
  %vm3858 = vweird.f32 %v3852
  %vm3859 = vmor %vm3857, %vm3858
  %v3860 = vsel %vm3859, %v3852, %v3856
  %v3861 = vand.u32 2147483647, %v3851
  %vm3862 = vcmp.eq.f32.partialorder %v3861, 8.507059e+37
  %v3863 = vand.u32 %v3851, 2147483648
  %v3864 = vor.u32 1.1754944e-38, %v3863
  %v3865 = vsel %vm3862, %v3864, %v3860
  %v3866 = vmul.f32 1.0, %v3865
  %v3867 = vxor.u32 %v3845, 2147483648
  %v3868 = vmul.f32 %v3867, 1.442695
  %v3869 = vpow.pop %v3868
  %v3870 = vadd.f32 %v3869, 1.0
  %v3871 = vrcp.pop %v3870
  %v3872 = vmul.f32 %v3870, %v3871
  %v3873 = vsub.f32 1.0, %v3872
  %v3874 = vmul.f32 %v3871, %v3873
  %v3875 = vadd.f32 %v3871, %v3874
  %vm3876 = vweird.f32 %v3870
  %vm3877 = vweird.f32 %v3871
  %vm3878 = vmor %vm3876, %vm3877
  %v3879 = vsel %vm3878, %v3871, %v3875
  %v3880 = vand.u32 2147483647, %v3870
  %vm3881 = vcmp.eq.f32.partialorder %v3880, 8.507059e+37
  %v3882 = vand.u32 %v3870, 2147483648
  %v3883 = vor.u32 1.1754944e-38, %v3882
  %v3884 = vsel %vm3881, %v3883, %v3879
  %v3885 = vmul.f32 1.0, %v3884
  %v3886 = vtanh.pop %v3846
  %v3887 = vxor.u32 %v3847, 2147483648
  %v3888 = vmul.f32 %v3887, 1.442695
  %v3889 = vpow.pop %v3888
  %v3890 = vadd.f32 %v3889, 1.0
  %v3891 = vrcp.pop %v3890
  %v3892 = vmul.f32 %v3890, %v3891
  %v3893 = vsub.f32 1.0, %v3892
  %v3894 = vmul.f32 %v3891, %v3893
  %v3895 = vadd.f32 %v3891, %v3894
  %vm3896 = vweird.f32 %v3890
  %vm3897 = vweird.f32 %v3891
  %vm3898 = vmor %vm3896, %vm3897
  %v3899 = vsel %vm3898, %v3891, %v3895
  %v3900 = vand.u32 2147483647, %v3890
  %vm3901 = vcmp.eq.f32.partialorder %v3900, 8.507059e+37
  %v3902 = vand.u32 %v3890, 2147483648
  %v3903 = vor.u32 1.1754944e-38, %v3902
  %v3904 = vsel %vm3901, %v3903, %v3899
  %v3905 = vmul.f32 1.0, %v3904
  %v3906 = vmul.f32 %v3885, %v3616
  %v3907 = vmul.f32 %v3866, %v3886
  %v3908 = vadd.f32 %v3906, %v3907
  %v3909 = vtanh.pop %v3908
  %v3910 = vmul.f32 %v3905, %v3909
  %v3911 = vpack.c.bf16 %v3910, %v3910
  %3912 = vmatpush.bf16.msra.mxu0 %v1768
  %3913 = vmatpush.bf16.msra.mxu0 %v1764
  %3914 = vmatpush.bf16.msra.mxu0 %v1760
  %3915 = vmatpush.bf16.msra.mxu0 %v1756
  %3916 = vmatpush.bf16.msra.mxu0 %v1752
  %3917 = vmatpush.bf16.msra.mxu0 %v1748
  %3918 = vmatpush.bf16.msra.mxu0 %v1744
  %3919 = vmatpush.bf16.msra.mxu0 %v1740
  %3920 = vmatmul.bf16.gmra.mxu0 %v3911
  %v3921 = vpop.f32.mrf.mxu0
  %v3922 = vadd.f32 %v1540, %v3921
  %v3923 = vpop.f32.mrf.mxu0
  %3924 = vdwg.mxu0
  %3925 = vmatpush.bf16.msra.mxu0 %v1800
  %3926 = vmatpush.bf16.msra.mxu0 %v1796
  %3927 = vmatpush.bf16.msra.mxu0 %v1792
  %3928 = vmatpush.bf16.msra.mxu0 %v1788
  %3929 = vmatpush.bf16.msra.mxu0 %v1784
  %3930 = vmatpush.bf16.msra.mxu0 %v1780
  %3931 = vmatpush.bf16.msra.mxu0 %v1776
  %3932 = vmatpush.bf16.msra.mxu0 %v1772
  %3933 = vmatmul.bf16.gmra.mxu0 %v3787
  %v3934 = vpop.f32.mrf.mxu0
  %v3935 = vadd.f32 %v3922, %v3934
  %v3936 = vpop.f32.mrf.mxu0
  %3937 = vdwg.mxu0
  %3938 = vmatpush.bf16.msra.mxu0 %v1769
  %3939 = vmatpush.bf16.msra.mxu0 %v1765
  %3940 = vmatpush.bf16.msra.mxu0 %v1761
  %3941 = vmatpush.bf16.msra.mxu0 %v1757
  %3942 = vmatpush.bf16.msra.mxu0 %v1753
  %3943 = vmatpush.bf16.msra.mxu0 %v1749
  %3944 = vmatpush.bf16.msra.mxu0 %v1745
  %3945 = vmatpush.bf16.msra.mxu0 %v1741
  %3946 = vmatmul.bf16.gmra.mxu0 %v3911
  %v3947 = vpop.f32.mrf.mxu0
  %v3948 = vadd.f32 %v1541, %v3947
  %v3949 = vpop.f32.mrf.mxu0
  %3950 = vdwg.mxu0
  %3951 = vmatpush.bf16.msra.mxu0 %v1801
  %3952 = vmatpush.bf16.msra.mxu0 %v1797
  %3953 = vmatpush.bf16.msra.mxu0 %v1793
  %3954 = vmatpush.bf16.msra.mxu0 %v1789
  %3955 = vmatpush.bf16.msra.mxu0 %v1785
  %3956 = vmatpush.bf16.msra.mxu0 %v1781
  %3957 = vmatpush.bf16.msra.mxu0 %v1777
  %3958 = vmatpush.bf16.msra.mxu0 %v1773
  %3959 = vmatmul.bf16.gmra.mxu0 %v3787
  %v3960 = vpop.f32.mrf.mxu0
  %v3961 = vadd.f32 %v3948, %v3960
  %v3962 = vpop.f32.mrf.mxu0
  %3963 = vdwg.mxu0
  %3964 = vmatpush.bf16.msra.mxu0 %v1770
  %3965 = vmatpush.bf16.msra.mxu0 %v1766
  %3966 = vmatpush.bf16.msra.mxu0 %v1762
  %3967 = vmatpush.bf16.msra.mxu0 %v1758
  %3968 = vmatpush.bf16.msra.mxu0 %v1754
  %3969 = vmatpush.bf16.msra.mxu0 %v1750
  %3970 = vmatpush.bf16.msra.mxu0 %v1746
  %3971 = vmatpush.bf16.msra.mxu0 %v1742
  %3972 = vmatmul.bf16.gmra.mxu0 %v3911
  %v3973 = vpop.f32.mrf.mxu0
  %v3974 = vadd.f32 %v1542, %v3973
  %v3975 = vpop.f32.mrf.mxu0
  %3976 = vdwg.mxu0
  %3977 = vmatpush.bf16.msra.mxu0 %v1802
  %3978 = vmatpush.bf16.msra.mxu0 %v1798
  %3979 = vmatpush.bf16.msra.mxu0 %v1794
  %3980 = vmatpush.bf16.msra.mxu0 %v1790
  %3981 = vmatpush.bf16.msra.mxu0 %v1786
  %3982 = vmatpush.bf16.msra.mxu0 %v1782
  %3983 = vmatpush.bf16.msra.mxu0 %v1778
  %3984 = vmatpush.bf16.msra.mxu0 %v1774
  %3985 = vmatmul.bf16.gmra.mxu0 %v3787
  %v3986 = vpop.f32.mrf.mxu0
  %v3987 = vadd.f32 %v3974, %v3986
  %v3988 = vpop.f32.mrf.mxu0
  %3989 = vdwg.mxu0
  %3990 = vmatpush.bf16.msra.mxu0 %v1771
  %3991 = vmatpush.bf16.msra.mxu0 %v1767
  %3992 = vmatpush.bf16.msra.mxu0 %v1763
  %3993 = vmatpush.bf16.msra.mxu0 %v1759
  %3994 = vmatpush.bf16.msra.mxu0 %v1755
  %3995 = vmatpush.bf16.msra.mxu0 %v1751
  %3996 = vmatpush.bf16.msra.mxu0 %v1747
  %3997 = vmatpush.bf16.msra.mxu0 %v1743
  %3998 = vmatmul.bf16.gmra.mxu0 %v3911
  %v3999 = vpop.f32.mrf.mxu0
  %v4000 = vadd.f32 %v1543, %v3999
  %v4001 = vpop.f32.mrf.mxu0
  %4002 = vdwg.mxu0
  %4003 = vmatpush.bf16.msra.mxu0 %v1803
  %4004 = vmatpush.bf16.msra.mxu0 %v1799
  %4005 = vmatpush.bf16.msra.mxu0 %v1795
  %4006 = vmatpush.bf16.msra.mxu0 %v1791
  %4007 = vmatpush.bf16.msra.mxu0 %v1787
  %4008 = vmatpush.bf16.msra.mxu0 %v1783
  %4009 = vmatpush.bf16.msra.mxu0 %v1779
  %4010 = vmatpush.bf16.msra.mxu0 %v1775
  %4011 = vmatmul.bf16.gmra.mxu0 %v3787
  %v4012 = vpop.f32.mrf.mxu0
  %v4013 = vadd.f32 %v4000, %v4012
  %v4014 = vpop.f32.mrf.mxu0
  %4015 = vdwg.mxu0
  %v4016 = vxor.u32 %v3935, 2147483648
  %v4017 = vmul.f32 %v4016, 1.442695
  %v4018 = vpow.pop %v4017
  %v4019 = vadd.f32 %v4018, 1.0
  %v4020 = vrcp.pop %v4019
  %v4021 = vmul.f32 %v4019, %v4020
  %v4022 = vsub.f32 1.0, %v4021
  %v4023 = vmul.f32 %v4020, %v4022
  %v4024 = vadd.f32 %v4020, %v4023
  %vm4025 = vweird.f32 %v4019
  %vm4026 = vweird.f32 %v4020
  %vm4027 = vmor %vm4025, %vm4026
  %v4028 = vsel %vm4027, %v4020, %v4024
  %v4029 = vand.u32 2147483647, %v4019
  %vm4030 = vcmp.eq.f32.partialorder %v4029, 8.507059e+37
  %v4031 = vand.u32 %v4019, 2147483648
  %v4032 = vor.u32 1.1754944e-38, %v4031
  %v4033 = vsel %vm4030, %v4032, %v4028
  %v4034 = vmul.f32 1.0, %v4033
  %v4035 = vxor.u32 %v3961, 2147483648
  %v4036 = vmul.f32 %v4035, 1.442695
  %v4037 = vpow.pop %v4036
  %v4038 = vadd.f32 %v4037, 1.0
  %v4039 = vrcp.pop %v4038
  %v4040 = vmul.f32 %v4038, %v4039
  %v4041 = vsub.f32 1.0, %v4040
  %v4042 = vmul.f32 %v4039, %v4041
  %v4043 = vadd.f32 %v4039, %v4042
  %vm4044 = vweird.f32 %v4038
  %vm4045 = vweird.f32 %v4039
  %vm4046 = vmor %vm4044, %vm4045
  %v4047 = vsel %vm4046, %v4039, %v4043
  %v4048 = vand.u32 2147483647, %v4038
  %vm4049 = vcmp.eq.f32.partialorder %v4048, 8.507059e+37
  %v4050 = vand.u32 %v4038, 2147483648
  %v4051 = vor.u32 1.1754944e-38, %v4050
  %v4052 = vsel %vm4049, %v4051, %v4047
  %v4053 = vmul.f32 1.0, %v4052
  %v4054 = vtanh.pop %v3987
  %v4055 = vxor.u32 %v4013, 2147483648
  %v4056 = vmul.f32 %v4055, 1.442695
  %v4057 = vpow.pop %v4056
  %v4058 = vadd.f32 %v4057, 1.0
  %v4059 = vrcp.pop %v4058
  %v4060 = vmul.f32 %v4058, %v4059
  %v4061 = vsub.f32 1.0, %v4060
  %v4062 = vmul.f32 %v4059, %v4061
  %v4063 = vadd.f32 %v4059, %v4062
  %vm4064 = vweird.f32 %v4058
  %vm4065 = vweird.f32 %v4059
  %vm4066 = vmor %vm4064, %vm4065
  %v4067 = vsel %vm4066, %v4059, %v4063
  %v4068 = vand.u32 2147483647, %v4058
  %vm4069 = vcmp.eq.f32.partialorder %v4068, 8.507059e+37
  %v4070 = vand.u32 %v4058, 2147483648
  %v4071 = vor.u32 1.1754944e-38, %v4070
  %v4072 = vsel %vm4069, %v4071, %v4067
  %v4073 = vmul.f32 1.0, %v4072
  %v4074 = vmul.f32 %v4053, %v3784
  %v4075 = vmul.f32 %v4034, %v4054
  %v4076 = vadd.f32 %v4074, %v4075
  %v4077 = vtanh.pop %v4076
  %v4078 = vmul.f32 %v4073, %v4077
  %v4079 = vpack.c.bf16 %v4078, %v4078
  %4080 = vmatpush.bf16.msra.mxu0 %v1369
  %4081 = vmatpush.bf16.msra.mxu0 %v1365
  %4082 = vmatpush.bf16.msra.mxu0 %v1361
  %4083 = vmatpush.bf16.msra.mxu0 %v1357
  %4084 = vmatpush.bf16.msra.mxu0 %v1353
  %4085 = vmatpush.bf16.msra.mxu0 %v1349
  %4086 = vmatpush.bf16.msra.mxu0 %v1345
  %4087 = vmatpush.bf16.msra.mxu0 %v1341
  %4088 = vmatmul.bf16.gmra.mxu0 %v3911
  %v4089 = vpop.f32.mrf.mxu0
  %v4090 = vadd.f32 0.0, %v4089
  %v4091 = vpop.f32.mrf.mxu0
  %4092 = vdwg.mxu0
  %4093 = vmatpush.bf16.msra.mxu0 %v1370
  %4094 = vmatpush.bf16.msra.mxu0 %v1366
  %4095 = vmatpush.bf16.msra.mxu0 %v1362
  %4096 = vmatpush.bf16.msra.mxu0 %v1358
  %4097 = vmatpush.bf16.msra.mxu0 %v1354
  %4098 = vmatpush.bf16.msra.mxu0 %v1350
  %4099 = vmatpush.bf16.msra.mxu0 %v1346
  %4100 = vmatpush.bf16.msra.mxu0 %v1342
  %4101 = vmatmul.bf16.gmra.mxu0 %v3911
  %v4102 = vpop.f32.mrf.mxu0
  %v4103 = vadd.f32 0.0, %v4102
  %v4104 = vpop.f32.mrf.mxu0
  %4105 = vdwg.mxu0
  %4106 = vmatpush.bf16.msra.mxu0 %v1371
  %4107 = vmatpush.bf16.msra.mxu0 %v1367
  %4108 = vmatpush.bf16.msra.mxu0 %v1363
  %4109 = vmatpush.bf16.msra.mxu0 %v1359
  %4110 = vmatpush.bf16.msra.mxu0 %v1355
  %4111 = vmatpush.bf16.msra.mxu0 %v1351
  %4112 = vmatpush.bf16.msra.mxu0 %v1347
  %4113 = vmatpush.bf16.msra.mxu0 %v1343
  %4114 = vmatmul.bf16.gmra.mxu0 %v3911
  %v4115 = vpop.f32.mrf.mxu0
  %v4116 = vadd.f32 0.0, %v4115
  %v4117 = vpop.f32.mrf.mxu0
  %4118 = vdwg.mxu0
  %4119 = vmatpush.bf16.msra.mxu0 %v1372
  %4120 = vmatpush.bf16.msra.mxu0 %v1368
  %4121 = vmatpush.bf16.msra.mxu0 %v1364
  %4122 = vmatpush.bf16.msra.mxu0 %v1360
  %4123 = vmatpush.bf16.msra.mxu0 %v1356
  %4124 = vmatpush.bf16.msra.mxu0 %v1352
  %4125 = vmatpush.bf16.msra.mxu0 %v1348
  %4126 = vmatpush.bf16.msra.mxu0 %v1344
  %4127 = vmatmul.bf16.gmra.mxu0 %v3911
  %v4128 = vpop.f32.mrf.mxu0
  %v4129 = vadd.f32 0.0, %v4128
  %v4130 = vpop.f32.mrf.mxu0
  %4131 = vdwg.mxu0
  %v4132 = vadd.f32 %v1028, %v4090
  %v4133 = vadd.f32 %v1061, %v4103
  %v4134 = vadd.f32 %v1094, %v4116
  %v4135 = vadd.f32 %v1127, %v4129
  %v4136 = vadd.f32 %v4132, %v1462
  %v4137 = vadd.f32 %v4133, %v1463
  %v4138 = vadd.f32 %v4134, %v1464
  %v4139 = vadd.f32 %v4135, %v1465
  %v4140 = vxor.u32 %v4136, 2147483648
  %v4141 = vmul.f32 %v4140, 1.442695
  %v4142 = vpow.pop %v4141
  %v4143 = vadd.f32 %v4142, 1.0
  %v4144 = vrcp.pop %v4143
  %v4145 = vmul.f32 %v4143, %v4144
  %v4146 = vsub.f32 1.0, %v4145
  %v4147 = vmul.f32 %v4144, %v4146
  %v4148 = vadd.f32 %v4144, %v4147
  %vm4149 = vweird.f32 %v4143
  %vm4150 = vweird.f32 %v4144
  %vm4151 = vmor %vm4149, %vm4150
  %v4152 = vsel %vm4151, %v4144, %v4148
  %v4153 = vand.u32 2147483647, %v4143
  %vm4154 = vcmp.eq.f32.partialorder %v4153, 8.507059e+37
  %v4155 = vand.u32 %v4143, 2147483648
  %v4156 = vor.u32 1.1754944e-38, %v4155
  %v4157 = vsel %vm4154, %v4156, %v4152
  %v4158 = vmul.f32 1.0, %v4157
  %v4159 = vxor.u32 %v4137, 2147483648
  %v4160 = vmul.f32 %v4159, 1.442695
  %v4161 = vpow.pop %v4160
  %v4162 = vadd.f32 %v4161, 1.0
  %v4163 = vrcp.pop %v4162
  %v4164 = vmul.f32 %v4162, %v4163
  %v4165 = vsub.f32 1.0, %v4164
  %v4166 = vmul.f32 %v4163, %v4165
  %v4167 = vadd.f32 %v4163, %v4166
  %vm4168 = vweird.f32 %v4162
  %vm4169 = vweird.f32 %v4163
  %vm4170 = vmor %vm4168, %vm4169
  %v4171 = vsel %vm4170, %v4163, %v4167
  %v4172 = vand.u32 2147483647, %v4162
  %vm4173 = vcmp.eq.f32.partialorder %v4172, 8.507059e+37
  %v4174 = vand.u32 %v4162, 2147483648
  %v4175 = vor.u32 1.1754944e-38, %v4174
  %v4176 = vsel %vm4173, %v4175, %v4171
  %v4177 = vmul.f32 1.0, %v4176
  %v4178 = vtanh.pop %v4138
  %v4179 = vxor.u32 %v4139, 2147483648
  %v4180 = vmul.f32 %v4179, 1.442695
  %v4181 = vpow.pop %v4180
  %v4182 = vadd.f32 %v4181, 1.0
  %v4183 = vrcp.pop %v4182
  %v4184 = vmul.f32 %v4182, %v4183
  %v4185 = vsub.f32 1.0, %v4184
  %v4186 = vmul.f32 %v4183, %v4185
  %v4187 = vadd.f32 %v4183, %v4186
  %vm4188 = vweird.f32 %v4182
  %vm4189 = vweird.f32 %v4183
  %vm4190 = vmor %vm4188, %vm4189
  %v4191 = vsel %vm4190, %v4183, %v4187
  %v4192 = vand.u32 2147483647, %v4182
  %vm4193 = vcmp.eq.f32.partialorder %v4192, 8.507059e+37
  %v4194 = vand.u32 %v4182, 2147483648
  %v4195 = vor.u32 1.1754944e-38, %v4194
  %v4196 = vsel %vm4193, %v4195, %v4191
  %v4197 = vmul.f32 1.0, %v4196
  %v4198 = vmul.f32 %v4177, %v3908
  %v4199 = vmul.f32 %v4158, %v4178
  %v4200 = vadd.f32 %v4198, %v4199
  %v4201 = vtanh.pop %v4200
  %v4202 = vmul.f32 %v4197, %v4201
  %v4203 = vpack.c.bf16 %v4202, %v4202
  %4204 = vmatpush.bf16.msra.mxu0 %v1768
  %4205 = vmatpush.bf16.msra.mxu0 %v1764
  %4206 = vmatpush.bf16.msra.mxu0 %v1760
  %4207 = vmatpush.bf16.msra.mxu0 %v1756
  %4208 = vmatpush.bf16.msra.mxu0 %v1752
  %4209 = vmatpush.bf16.msra.mxu0 %v1748
  %4210 = vmatpush.bf16.msra.mxu0 %v1744
  %4211 = vmatpush.bf16.msra.mxu0 %v1740
  %4212 = vmatmul.bf16.gmra.mxu0 %v4203
  %v4213 = vpop.f32.mrf.mxu0
  %v4214 = vadd.f32 %v1540, %v4213
  %v4215 = vpop.f32.mrf.mxu0
  %4216 = vdwg.mxu0
  %4217 = vmatpush.bf16.msra.mxu0 %v1800
  %4218 = vmatpush.bf16.msra.mxu0 %v1796
  %4219 = vmatpush.bf16.msra.mxu0 %v1792
  %4220 = vmatpush.bf16.msra.mxu0 %v1788
  %4221 = vmatpush.bf16.msra.mxu0 %v1784
  %4222 = vmatpush.bf16.msra.mxu0 %v1780
  %4223 = vmatpush.bf16.msra.mxu0 %v1776
  %4224 = vmatpush.bf16.msra.mxu0 %v1772
  %4225 = vmatmul.bf16.gmra.mxu0 %v4079
  %v4226 = vpop.f32.mrf.mxu0
  %v4227 = vadd.f32 %v4214, %v4226
  %v4228 = vpop.f32.mrf.mxu0
  %4229 = vdwg.mxu0
  %4230 = vmatpush.bf16.msra.mxu0 %v1769
  %4231 = vmatpush.bf16.msra.mxu0 %v1765
  %4232 = vmatpush.bf16.msra.mxu0 %v1761
  %4233 = vmatpush.bf16.msra.mxu0 %v1757
  %4234 = vmatpush.bf16.msra.mxu0 %v1753
  %4235 = vmatpush.bf16.msra.mxu0 %v1749
  %4236 = vmatpush.bf16.msra.mxu0 %v1745
  %4237 = vmatpush.bf16.msra.mxu0 %v1741
  %4238 = vmatmul.bf16.gmra.mxu0 %v4203
  %v4239 = vpop.f32.mrf.mxu0
  %v4240 = vadd.f32 %v1541, %v4239
  %v4241 = vpop.f32.mrf.mxu0
  %4242 = vdwg.mxu0
  %4243 = vmatpush.bf16.msra.mxu0 %v1801
  %4244 = vmatpush.bf16.msra.mxu0 %v1797
  %4245 = vmatpush.bf16.msra.mxu0 %v1793
  %4246 = vmatpush.bf16.msra.mxu0 %v1789
  %4247 = vmatpush.bf16.msra.mxu0 %v1785
  %4248 = vmatpush.bf16.msra.mxu0 %v1781
  %4249 = vmatpush.bf16.msra.mxu0 %v1777
  %4250 = vmatpush.bf16.msra.mxu0 %v1773
  %4251 = vmatmul.bf16.gmra.mxu0 %v4079
  %v4252 = vpop.f32.mrf.mxu0
  %v4253 = vadd.f32 %v4240, %v4252
  %v4254 = vpop.f32.mrf.mxu0
  %4255 = vdwg.mxu0
  %4256 = vmatpush.bf16.msra.mxu0 %v1770
  %4257 = vmatpush.bf16.msra.mxu0 %v1766
  %4258 = vmatpush.bf16.msra.mxu0 %v1762
  %4259 = vmatpush.bf16.msra.mxu0 %v1758
  %4260 = vmatpush.bf16.msra.mxu0 %v1754
  %4261 = vmatpush.bf16.msra.mxu0 %v1750
  %4262 = vmatpush.bf16.msra.mxu0 %v1746
  %4263 = vmatpush.bf16.msra.mxu0 %v1742
  %4264 = vmatmul.bf16.gmra.mxu0 %v4203
  %v4265 = vpop.f32.mrf.mxu0
  %v4266 = vadd.f32 %v1542, %v4265
  %v4267 = vpop.f32.mrf.mxu0
  %4268 = vdwg.mxu0
  %4269 = vmatpush.bf16.msra.mxu0 %v1802
  %4270 = vmatpush.bf16.msra.mxu0 %v1798
  %4271 = vmatpush.bf16.msra.mxu0 %v1794
  %4272 = vmatpush.bf16.msra.mxu0 %v1790
  %4273 = vmatpush.bf16.msra.mxu0 %v1786
  %4274 = vmatpush.bf16.msra.mxu0 %v1782
  %4275 = vmatpush.bf16.msra.mxu0 %v1778
  %4276 = vmatpush.bf16.msra.mxu0 %v1774
  %4277 = vmatmul.bf16.gmra.mxu0 %v4079
  %v4278 = vpop.f32.mrf.mxu0
  %v4279 = vadd.f32 %v4266, %v4278
  %v4280 = vpop.f32.mrf.mxu0
  %4281 = vdwg.mxu0
  %4282 = vmatpush.bf16.msra.mxu0 %v1771
  %4283 = vmatpush.bf16.msra.mxu0 %v1767
  %4284 = vmatpush.bf16.msra.mxu0 %v1763
  %4285 = vmatpush.bf16.msra.mxu0 %v1759
  %4286 = vmatpush.bf16.msra.mxu0 %v1755
  %4287 = vmatpush.bf16.msra.mxu0 %v1751
  %4288 = vmatpush.bf16.msra.mxu0 %v1747
  %4289 = vmatpush.bf16.msra.mxu0 %v1743
  %4290 = vmatmul.bf16.gmra.mxu0 %v4203
  %v4291 = vpop.f32.mrf.mxu0
  %v4292 = vadd.f32 %v1543, %v4291
  %v4293 = vpop.f32.mrf.mxu0
  %4294 = vdwg.mxu0
  %4295 = vmatpush.bf16.msra.mxu0 %v1803
  %4296 = vmatpush.bf16.msra.mxu0 %v1799
  %4297 = vmatpush.bf16.msra.mxu0 %v1795
  %4298 = vmatpush.bf16.msra.mxu0 %v1791
  %4299 = vmatpush.bf16.msra.mxu0 %v1787
  %4300 = vmatpush.bf16.msra.mxu0 %v1783
  %4301 = vmatpush.bf16.msra.mxu0 %v1779
  %4302 = vmatpush.bf16.msra.mxu0 %v1775
  %4303 = vmatmul.bf16.gmra.mxu0 %v4079
  %v4304 = vpop.f32.mrf.mxu0
  %v4305 = vadd.f32 %v4292, %v4304
  %v4306 = vpop.f32.mrf.mxu0
  %4307 = vdwg.mxu0
  %v4308 = vxor.u32 %v4227, 2147483648
  %v4309 = vmul.f32 %v4308, 1.442695
  %v4310 = vpow.pop %v4309
  %v4311 = vadd.f32 %v4310, 1.0
  %v4312 = vrcp.pop %v4311
  %v4313 = vmul.f32 %v4311, %v4312
  %v4314 = vsub.f32 1.0, %v4313
  %v4315 = vmul.f32 %v4312, %v4314
  %v4316 = vadd.f32 %v4312, %v4315
  %vm4317 = vweird.f32 %v4311
  %vm4318 = vweird.f32 %v4312
  %vm4319 = vmor %vm4317, %vm4318
  %v4320 = vsel %vm4319, %v4312, %v4316
  %v4321 = vand.u32 2147483647, %v4311
  %vm4322 = vcmp.eq.f32.partialorder %v4321, 8.507059e+37
  %v4323 = vand.u32 %v4311, 2147483648
  %v4324 = vor.u32 1.1754944e-38, %v4323
  %v4325 = vsel %vm4322, %v4324, %v4320
  %v4326 = vmul.f32 1.0, %v4325
  %v4327 = vxor.u32 %v4253, 2147483648
  %v4328 = vmul.f32 %v4327, 1.442695
  %v4329 = vpow.pop %v4328
  %v4330 = vadd.f32 %v4329, 1.0
  %v4331 = vrcp.pop %v4330
  %v4332 = vmul.f32 %v4330, %v4331
  %v4333 = vsub.f32 1.0, %v4332
  %v4334 = vmul.f32 %v4331, %v4333
  %v4335 = vadd.f32 %v4331, %v4334
  %vm4336 = vweird.f32 %v4330
  %vm4337 = vweird.f32 %v4331
  %vm4338 = vmor %vm4336, %vm4337
  %v4339 = vsel %vm4338, %v4331, %v4335
  %v4340 = vand.u32 2147483647, %v4330
  %vm4341 = vcmp.eq.f32.partialorder %v4340, 8.507059e+37
  %v4342 = vand.u32 %v4330, 2147483648
  %v4343 = vor.u32 1.1754944e-38, %v4342
  %v4344 = vsel %vm4341, %v4343, %v4339
  %v4345 = vmul.f32 1.0, %v4344
  %v4346 = vtanh.pop %v4279
  %v4347 = vxor.u32 %v4305, 2147483648
  %v4348 = vmul.f32 %v4347, 1.442695
  %v4349 = vpow.pop %v4348
  %v4350 = vadd.f32 %v4349, 1.0
  %v4351 = vrcp.pop %v4350
  %v4352 = vmul.f32 %v4350, %v4351
  %v4353 = vsub.f32 1.0, %v4352
  %v4354 = vmul.f32 %v4351, %v4353
  %v4355 = vadd.f32 %v4351, %v4354
  %vm4356 = vweird.f32 %v4350
  %vm4357 = vweird.f32 %v4351
  %vm4358 = vmor %vm4356, %vm4357
  %v4359 = vsel %vm4358, %v4351, %v4355
  %v4360 = vand.u32 2147483647, %v4350
  %vm4361 = vcmp.eq.f32.partialorder %v4360, 8.507059e+37
  %v4362 = vand.u32 %v4350, 2147483648
  %v4363 = vor.u32 1.1754944e-38, %v4362
  %v4364 = vsel %vm4361, %v4363, %v4359
  %v4365 = vmul.f32 1.0, %v4364
  %v4366 = vmul.f32 %v4345, %v4076
  %v4367 = vmul.f32 %v4326, %v4346
  %v4368 = vadd.f32 %v4366, %v4367
  %v4369 = vtanh.pop %v4368
  %v4370 = vmul.f32 %v4365, %v4369
  %v4371 = vpack.c.bf16 %v4370, %v4370
  %v4373 = vunpack.c.l.b16 %v2327
  %v4374 = vpack.c.b16 %v4373, %v4373
  %v4376 = vunpack.c.l.b16 %v2911
  %v4377 = vpack.c.b16 %v4376, %v4376
  %v4379 = vunpack.c.l.b16 %v3495
  %v4380 = vpack.c.b16 %v4379, %v4379
  %v4382 = vunpack.c.l.b16 %v4079
  %v4383 = vpack.c.b16 %v4382, %v4382
  %v4386 = vsel %vm801, %v2035, %v4374
  %v4390 = vsel %vm801, %v2619, %v4377
  %v4394 = vsel %vm801, %v3203, %v4380
  %v4398 = vsel %vm801, %v3787, %v4383
  %v4401 = vperm.slane %v1244, 0
  %v4419 = vunpack.c.l.b16 %v1228
  %v4420 = vunpack.c.l.b16 %v1229
  %v4421 = vunpack.c.l.b16 %v1230
  %v4422 = vunpack.c.l.b16 %v1231
  %v4423 = vunpack.c.l.b16 %v1232
  %v4424 = vunpack.c.l.b16 %v1233
  %v4425 = vunpack.c.l.b16 %v1234
  %v4426 = vunpack.c.l.b16 %v1235
  %v4427 = vunpack.c.l.b16 %v1236
  %v4428 = vunpack.c.l.b16 %v1237
  %v4429 = vunpack.c.l.b16 %v1238
  %v4430 = vunpack.c.l.b16 %v1239
  %v4431 = vunpack.c.l.b16 %v1240
  %v4432 = vunpack.c.l.b16 %v1241
  %v4433 = vunpack.c.l.b16 %v1242
  %v4434 = vunpack.c.l.b16 %v1243
  %v4435 = vpack.c.b16 %v4420, %v4419
  %v4436 = vpack.c.b16 %v4422, %v4421
  %v4437 = vpack.c.b16 %v4424, %v4423
  %v4438 = vpack.c.b16 %v4426, %v4425
  %v4439 = vpack.c.b16 %v4428, %v4427
  %v4440 = vpack.c.b16 %v4430, %v4429
  %v4441 = vpack.c.b16 %v4432, %v4431
  %v4442 = vpack.c.b16 %v4434, %v4433
  %4451 = vmatpush.bf16.msra.mxu0 %v4442
  %4452 = vmatpush.bf16.msra.mxu0 %v4441
  %4453 = vmatpush.bf16.msra.mxu0 %v4440
  %4454 = vmatpush.bf16.msra.mxu0 %v4439
  %4455 = vmatpush.bf16.msra.mxu0 %v4438
  %4456 = vmatpush.bf16.msra.mxu0 %v4437
  %4457 = vmatpush.bf16.msra.mxu0 %v4436
  %4458 = vmatpush.bf16.msra.mxu0 %v4435
  %4459 = vmatmul.bf16.gmra.mxu0 %v4386
  %v4460 = vpop.f32.mrf.mxu0
  %v4461 = vadd.f32 %v4401, %v4460
  %v4462 = vpop.f32.mrf.mxu0
  %v4463 = vadd.f32 %v4401, %v4462
  %4464 = vmatmul.bf16.gmra.mxu0 %v4390
  %v4465 = vpop.f32.mrf.mxu0
  %v4466 = vadd.f32 %v4401, %v4465
  %v4467 = vpop.f32.mrf.mxu0
  %v4468 = vadd.f32 %v4401, %v4467
  %4469 = vmatmul.bf16.gmra.mxu0 %v4394
  %v4470 = vpop.f32.mrf.mxu0
  %v4471 = vadd.f32 %v4401, %v4470
  %v4472 = vpop.f32.mrf.mxu0
  %v4473 = vadd.f32 %v4401, %v4472
  %4474 = vmatmul.bf16.gmra.mxu0 %v4398
  %v4475 = vpop.f32.mrf.mxu0
  %v4476 = vadd.f32 %v4401, %v4475
  %v4477 = vpop.f32.mrf.mxu0
  %v4478 = vadd.f32 %v4401, %v4477
  %4479 = vmatmul.bf16.gmra.mxu0 %v4371
  %v4480 = vpop.f32.mrf.mxu0
  %v4481 = vadd.f32 %v4401, %v4480
  %v4482 = vpop.f32.mrf.mxu0
  %4483 = vdwg.mxu0
  %4484 = vst [vmem:[%s13] sm:$0xff] %v4461
  %4485 = vst [vmem:[%s13 + $0x8] sm:$0xff] %v4463
  %4486 = vst [vmem:[%s13 + $0x10] sm:$0xff] %v4466
  %4487 = vst [vmem:[%s13 + $0x18] sm:$0xff] %v4468
  %4488 = vst [vmem:[%s13 + $0x20] sm:$0xff] %v4471
  %4489 = vst [vmem:[%s13 + $0x28] sm:$0xff] %v4473
  %4490 = vst [vmem:[%s13 + $0x30] sm:$0xff] %v4476
  %4491 = vst [vmem:[%s13 + $0x38] sm:$0xff] %v4478
  %4492 = vst [vmem:[%s13 + $0x40] sm:$0xff] %v4481
  // Predicated region
  $region54: #{caption_generator_forward.1} parent=0 // pred_check
    _
  $region55: #{caption_generator_forward.1} parent=0 // pred_check_branch
    %4494 = sbr.rel (0) target = $region57
  $region56: #{caption_generator_forward.1} parent=0 // pred_region
    _
  $region57: #{caption_generator_forward.1} parent=0 // pred_fallthru
    _
  // Predicated region
  $region58: #{caption_generator_forward.1} parent=0 // pred_check
    _
  $region59: #{caption_generator_forward.1} parent=0 // pred_check_branch
    %4496 = sbr.rel (0) target = $region61
  $region60: #{caption_generator_forward.1} parent=0 // pred_region
    _
  $region61: #{caption_generator_forward.1} parent=0 // pred_fallthru
    _

</llo_original>
